<compile_context>
chip_gen: v7x
topology: tpu7x:2x2x1
jax: 0.10.0
libtpu: 0.0.40
codegen_flags: <defaults>
</compile_context>

<pallas_src>
import functools
import math

import jax
import jax.numpy as jnp
from jax.experimental import pallas as pl
from jax.experimental.pallas import tpu as pltpu


def round_up(x, m):
    return (x + m - 1) // m * m


# --------------------------------------------------------------------------
# Kernel A: fused Q|K|V node projection, tiled over node blocks.
# --------------------------------------------------------------------------
def qkv_proj_kernel(x_ref, w_ref, b_ref, q_ref, k_ref, v_ref, *, hd):
    y = jnp.dot(x_ref[...], w_ref[...],
                preferred_element_type=jnp.float32) + b_ref[...]
    q_ref[...] = y[:, :hd]
    k_ref[...] = y[:, hd:2 * hd]
    v_ref[...] = y[:, 2 * hd:3 * hd]


# --------------------------------------------------------------------------
# Kernel E: plain linear projection (used for the edge features), row-tiled.
# --------------------------------------------------------------------------
def linear_kernel(x_ref, w_ref, b_ref, o_ref):
    o_ref[...] = jnp.dot(x_ref[...], w_ref[...],
                         preferred_element_type=jnp.float32) + b_ref[...]


# --------------------------------------------------------------------------
# Kernel B: edge-tiled attention + one-hot-matmul gather/scatter aggregation.
#   inputs : src/dst/valid rows [1, TE], Q/K/V tables [N_pad, HD] (resident),
#            pre-projected edge features [TE, HD], per-head sum/broadcast mats.
#   outputs: acc [N_pad, 2*HD] = [wV | z broadcast]  (accumulated over tiles),
#            score_soft^T [Hp, TE] (lane-dense, head axis padded to Hp).
# --------------------------------------------------------------------------
def attn_kernel(src_ref, dst_ref, valid_ref,
                q_ref, k_ref, v_ref, ep_ref, ssum_ref, sbr_ref,
                acc_ref, score_ref):
    f32 = jnp.float32
    t = pl.program_id(0)

    @pl.when(t == 0)
    def _init():
        acc_ref[...] = jnp.zeros_like(acc_ref)

    n_pad = q_ref.shape[0]
    te = src_ref.shape[1]

    # One-hot incidence (transposed layout [N_pad, TE]) built on the VPU from a
    # 2-D iota compared against the lane-dense index rows.
    node_iota = jax.lax.broadcasted_iota(jnp.int32, (n_pad, te), 0)
    oh_dst = (node_iota == dst_ref[...]).astype(f32)          # [N_pad, TE]
    oh_src = (node_iota == src_ref[...]).astype(f32)          # [N_pad, TE]

    # Vectorized row gathers on the MXU (contract the node axis).
    dn_gather = (((0,), (0,)), ((), ()))
    q_dst = jax.lax.dot_general(oh_dst, q_ref[...], dn_gather,
                                preferred_element_type=f32)   # [TE, HD]
    k_src = jax.lax.dot_general(oh_src, k_ref[...], dn_gather,
                                preferred_element_type=f32)   # [TE, HD]
    v_src = jax.lax.dot_general(oh_src, v_ref[...], dn_gather,
                                preferred_element_type=f32)   # [TE, HD]

    # score = K[src] * Q[dst] * E_proj ; per-head sum (1/sqrt(D) folded into ssum).
    score = k_src * q_dst * ep_ref[...]                        # [TE, HD]
    score_sum = jax.lax.dot_general(ssum_ref[...], score,
                                    (((0,), (1,)), ((), ())),
                                    preferred_element_type=f32)  # [Hp, TE]

    # exp(clamp(.,-5,5)), padded edges masked out (valid row broadcasts over heads).
    score_soft = jnp.exp(jnp.clip(score_sum, -5.0, 5.0)) * valid_ref[...]
    score_ref[...] = score_soft                                # lane-dense store

    # Broadcast per head across out_dim: [TE, HD].
    ssb = jax.lax.dot_general(score_soft, sbr_ref[...],
                              (((0,), (0,)), ((), ())),
                              preferred_element_type=f32)

    # Scatter-add into the resident node accumulator with a single MXU matmul:
    # acc[n, :] += sum_e onehot_dst[n, e] * [V[src]*soft | soft][e, :]
    sc = jnp.concatenate([v_src * ssb, ssb], axis=1)           # [TE, 2*HD]
    acc_ref[...] += jax.lax.dot_general(oh_dst, sc,
                                        (((1,), (0,)), ((), ())),
                                        preferred_element_type=f32)


# --------------------------------------------------------------------------
# Wrapper
# --------------------------------------------------------------------------
def multi_head_attention(h, p, e, src, dst, params, *, num_heads, out_dim,
                         edge_tile=512, node_tile=256):
    f32 = jnp.float32
    N = h.shape[0]
    Ne = e.shape[0]
    in_e = e.shape[1]
    H, D = num_heads, out_dim
    HD = H * D
    Hp = round_up(H, 8)                      # sublane-padded head axis for score

    hcat = jnp.concatenate([h, p], axis=-1).astype(f32)       # [N, 2*in_dim]
    in2 = hcat.shape[1]

    # ---- padding to tile multiples -----------------------------------------
    N_pad = round_up(N, 128)
    node_tile = min(node_tile, N_pad)
    if N_pad % node_tile:
        node_tile = 128                       # N_pad is a multiple of 128
    edge_tile = max(128, min(edge_tile, round_up(Ne, 128)))
    Ne_pad = round_up(Ne, edge_tile)
    num_edge_tiles = Ne_pad // edge_tile

    hcat_pad = jnp.zeros((N_pad, in2), f32).at[:N].set(hcat)
    e_pad = jnp.zeros((Ne_pad, in_e), f32).at[:Ne].set(e.astype(f32))
    src_row = jnp.zeros((1, Ne_pad), jnp.int32).at[0, :Ne].set(src.astype(jnp.int32))
    dst_row = jnp.zeros((1, Ne_pad), jnp.int32).at[0, :Ne].set(dst.astype(jnp.int32))
    valid_row = jnp.zeros((1, Ne_pad), f32).at[0, :Ne].set(1.0)

    # ---- host-side constants ------------------------------------------------
    w_qkv = jnp.concatenate([params["WQ_T"], params["WK_T"], params["WV_T"]],
                            axis=1)                               # [in2, 3*HD]
    b_qkv = jnp.concatenate([params["bQ"], params["bK"], params["bV"]],
                            axis=1)                               # [1, 3*HD]
    # Per-head summation (1/sqrt(D) folded) and broadcast matrices, head-padded.
    S = jnp.repeat(jnp.eye(H, dtype=f32), D, axis=0)              # [HD, H]
    S_sum = jnp.zeros((HD, Hp), f32).at[:, :H].set(S / math.sqrt(D))
    S_bcast = jnp.zeros((Hp, HD), f32).at[:H, :].set(S.T)

    # ---- Kernel A: fused Q|K|V node projection -------------------------------
    q_tab, k_tab, v_tab = pl.pallas_call(
        functools.partial(qkv_proj_kernel, hd=HD),
        out_shape=tuple(jax.ShapeDtypeStruct((N_pad, HD), f32) for _ in range(3)),
        grid=(N_pad // node_tile,),
        in_specs=[
            pl.BlockSpec((node_tile, in2), lambda i: (i, 0)),
            pl.BlockSpec((in2, 3 * HD), lambda i: (0, 0)),
            pl.BlockSpec((1, 3 * HD), lambda i: (0, 0)),
        ],
        out_specs=tuple(pl.BlockSpec((node_tile, HD), lambda i: (i, 0))
                        for _ in range(3)),
        compiler_params=pltpu.CompilerParams(
            dimension_semantics=("parallel",)),
    )(hcat_pad, w_qkv, b_qkv)

    # ---- Kernel E: hoisted edge-feature projection ----------------------------
    e_proj = pl.pallas_call(
        linear_kernel,
        out_shape=jax.ShapeDtypeStruct((Ne_pad, HD), f32),
        grid=(num_edge_tiles,),
        in_specs=[
            pl.BlockSpec((edge_tile, in_e), lambda i: (i, 0)),
            pl.BlockSpec((in_e, HD), lambda i: (0, 0)),
            pl.BlockSpec((1, HD), lambda i: (0, 0)),
        ],
        out_specs=pl.BlockSpec((edge_tile, HD), lambda i: (i, 0)),
        compiler_params=pltpu.CompilerParams(
            dimension_semantics=("parallel",)),
    )(e_pad, params["WE_T"], params["bE"])

    # ---- Kernel B: attention + aggregation over edge tiles --------------------
    cost_b = pl.CostEstimate(
        flops=int(10 * Ne_pad * N_pad * HD + 8 * Ne_pad * HD * Hp
                  + 4 * Ne_pad * HD),
        transcendentals=int(Ne_pad * Hp),
        bytes_accessed=int(4 * (3 * N_pad * HD + Ne_pad * HD + 3 * Ne_pad
                                + 2 * HD * Hp + 2 * N_pad * HD + Hp * Ne_pad)))

    acc, score_t = pl.pallas_call(
        attn_kernel,
        out_shape=(jax.ShapeDtypeStruct((N_pad, 2 * HD), f32),
                   jax.ShapeDtypeStruct((Hp, Ne_pad), f32)),
        grid=(num_edge_tiles,),
        in_specs=[
            pl.BlockSpec((1, edge_tile), lambda t: (0, t)),        # src ids
            pl.BlockSpec((1, edge_tile), lambda t: (0, t)),        # dst ids
            pl.BlockSpec((1, edge_tile), lambda t: (0, t)),        # valid mask
            pl.BlockSpec((N_pad, HD), lambda t: (0, 0)),           # Q table
            pl.BlockSpec((N_pad, HD), lambda t: (0, 0)),           # K table
            pl.BlockSpec((N_pad, HD), lambda t: (0, 0)),           # V table
            pl.BlockSpec((edge_tile, HD), lambda t: (t, 0)),       # E proj (tiled)
            pl.BlockSpec((HD, Hp), lambda t: (0, 0)),              # S/sqrt(D)
            pl.BlockSpec((Hp, HD), lambda t: (0, 0)),              # S^T
        ],
        out_specs=(
            pl.BlockSpec((N_pad, 2 * HD), lambda t: (0, 0)),       # [wV | z]
            pl.BlockSpec((Hp, edge_tile), lambda t: (0, t)),       # score^T
        ),
        compiler_params=pltpu.CompilerParams(
            dimension_semantics=("arbitrary",)),
        cost_estimate=cost_b,
    )(src_row, dst_row, valid_row, q_tab, k_tab, v_tab, e_proj, S_sum, S_bcast)

    # ---- finalize in the wrapper (exact f32 divide, lane-dense kernel output) --
    wv = acc[:N, :HD]
    z = acc[:N, HD:]
    h_out = (wv / (z + 1e-6)).reshape(N, H, D)
    score_soft = score_t[:H, :Ne].T.reshape(Ne, H, 1)
    return h_out, score_soft


# --------------------------------------------------------------------------
# Pure-JAX reference (reproduces the DGL message passing)
# --------------------------------------------------------------------------
def reference(h, p, e, src, dst, params, *, num_heads, out_dim):
    N = h.shape[0]
    hi = jax.lax.Precision.HIGHEST
    hcat = jnp.concatenate([h, p], axis=-1)
    Q = (jnp.dot(hcat, params["WQ_T"], precision=hi) + params["bQ"]
         ).reshape(N, num_heads, out_dim)
    K = (jnp.dot(hcat, params["WK_T"], precision=hi) + params["bK"]
         ).reshape(N, num_heads, out_dim)
    V = (jnp.dot(hcat, params["WV_T"], precision=hi) + params["bV"]
         ).reshape(N, num_heads, out_dim)
    E = (jnp.dot(e, params["WE_T"], precision=hi) + params["bE"]
         ).reshape(-1, num_heads, out_dim)
    score = K[src] * Q[dst] / math.sqrt(out_dim) * E
    score_soft = jnp.exp(jnp.clip(score.sum(-1, keepdims=True), -5.0, 5.0))
    msg = V[src] * score_soft
    wV = jax.ops.segment_sum(msg, dst, num_segments=N)
    z = jax.ops.segment_sum(score_soft, dst, num_segments=N)
    return wV / (z + 1e-6), score_soft


if __name__ == "__main__":
    # Small synthetic graph (attention_for='h', full_graph=False).
    in_dim, out_dim, num_heads = 16, 16, 4
    N, Ne = 100, 1000                     # Ne_pad = 1024 -> 2 edge tiles of 512
    key = jax.random.PRNGKey(0)
    ks = jax.random.split(key, 13)

    h = jax.random.normal(ks[0], (N, in_dim), jnp.float32)
    p = jax.random.normal(ks[1], (N, in_dim), jnp.float32)
    e = jax.random.normal(ks[2], (Ne, in_dim), jnp.float32)
    src = jax.random.randint(ks[3], (Ne,), 0, N, dtype=jnp.int32)
    dst = jax.random.randint(ks[4], (Ne,), 0, N, dtype=jnp.int32)

    HD = num_heads * out_dim
    s = 0.2
    params = {
        # stored already transposed ([in, out]) so kernels do x @ W_T + b
        "WQ_T": s * jax.random.normal(ks[5], (2 * in_dim, HD), jnp.float32),
        "WK_T": s * jax.random.normal(ks[6], (2 * in_dim, HD), jnp.float32),
        "WV_T": s * jax.random.normal(ks[7], (2 * in_dim, HD), jnp.float32),
        "WE_T": s * jax.random.normal(ks[8], (in_dim, HD), jnp.float32),
        "bQ": s * jax.random.normal(ks[9], (1, HD), jnp.float32),
        "bK": s * jax.random.normal(ks[10], (1, HD), jnp.float32),
        "bV": s * jax.random.normal(ks[11], (1, HD), jnp.float32),
        "bE": s * jax.random.normal(ks[12], (1, HD), jnp.float32),
    }

    fn = jax.jit(functools.partial(multi_head_attention,
                                   num_heads=num_heads, out_dim=out_dim))
    h_out, score_soft = fn(h, p, e, src, dst, params)
    jax.block_until_ready((h_out, score_soft))

    h_ref, s_ref = reference(h, p, e, src, dst, params,
                             num_heads=num_heads, out_dim=out_dim)
    # Tolerance covers MXU default-precision operand rounding in the one-hot
    # gather/projection matmuls (exp amplifies the per-head-sum error); the
    # reference is computed at HIGHEST precision. Everything else is exact f32.
    assert jnp.allclose(h_out, h_ref, atol=3e-2, rtol=3e-2), "h_out mismatch"
    assert jnp.allclose(score_soft, s_ref, atol=3e-2, rtol=3e-2), "score mismatch"

    print("KERNEL_OK")
</pallas_src>

<mosaic_0001>
module attributes {stable_mosaic.version = 11 : i64} {
  func.func @qkv_proj_kernel(%arg0: i32, %arg1: memref<128x32xf32, #tpu.memory_space<vmem>>, %arg2: memref<32x192xf32, #tpu.memory_space<vmem>>, %arg3: memref<1x192xf32, #tpu.memory_space<vmem>>, %arg4: memref<128x64xf32, #tpu.memory_space<vmem>>, %arg5: memref<128x64xf32, #tpu.memory_space<vmem>>, %arg6: memref<128x64xf32, #tpu.memory_space<vmem>>) attributes {dimension_semantics = [#tpu.dimension_semantics<parallel>], iteration_bounds = array<i64: 1>, scalar_prefetch = 0 : i64, scratch_operands = 0 : i64, tpu.core_type = #tpu.core_type<tc>, window_params = [{transform_indices = @transform_0, window_bounds = array<i64: 128, 32>}, {pipeline_mode = #tpu.pipeline_mode<synchronous>, transform_indices = @transform_1, window_bounds = array<i64: 32, 192>}, {pipeline_mode = #tpu.pipeline_mode<synchronous>, transform_indices = @transform_2, window_bounds = array<i64: 1, 192>}, {transform_indices = @transform_3, window_bounds = array<i64: 128, 64>}, {transform_indices = @transform_4, window_bounds = array<i64: 128, 64>}, {transform_indices = @transform_5, window_bounds = array<i64: 128, 64>}]} {
    %c0 = arith.constant 0 : index
    %c0_0 = arith.constant 0 : index
    %0 = vector.load %arg1[%c0, %c0_0] : memref<128x32xf32, #tpu.memory_space<vmem>>, vector<128x32xf32>
    %c0_1 = arith.constant 0 : index
    %c0_2 = arith.constant 0 : index
    %1 = vector.load %arg2[%c0_1, %c0_2] : memref<32x192xf32, #tpu.memory_space<vmem>>, vector<32x192xf32>
    %cst = arith.constant dense<0.000000e+00> : vector<128x192xf32>
    %2 = tpu.matmul %0, %1, %cst {dimension_numbers = #tpu.dot_dimension_numbers<[1], [0], [0], [1], [0, 0, 1, 1], [], []>} : vector<128x32xf32>, vector<32x192xf32>, vector<128x192xf32> -> vector<128x192xf32>
    %c0_3 = arith.constant 0 : index
    %c0_4 = arith.constant 0 : index
    %3 = vector.load %arg3[%c0_3, %c0_4] : memref<1x192xf32, #tpu.memory_space<vmem>>, vector<1x192xf32>
    %4 = vector.broadcast %3 : vector<1x192xf32> to vector<128x192xf32>
    %5 = arith.addf %2, %4 : vector<128x192xf32>
    %6 = vector.extract_strided_slice %5 {offsets = [0, 0], sizes = [128, 64], strides = [1, 1]} : vector<128x192xf32> to vector<128x64xf32>
    %c0_5 = arith.constant 0 : index
    %c0_6 = arith.constant 0 : index
    %7 = vector.load %arg4[%c0_5, %c0_6] : memref<128x64xf32, #tpu.memory_space<vmem>>, vector<128x64xf32>
    tpu.vector_store %arg4[%c0_5, %c0_6], %6 {strides = array<i32>} : memref<128x64xf32, #tpu.memory_space<vmem>>, vector<128x64xf32>,
    %8 = vector.extract_strided_slice %5 {offsets = [0, 64], sizes = [128, 64], strides = [1, 1]} : vector<128x192xf32> to vector<128x64xf32>
    %c0_7 = arith.constant 0 : index
    %c0_8 = arith.constant 0 : index
    %9 = vector.load %arg5[%c0_7, %c0_8] : memref<128x64xf32, #tpu.memory_space<vmem>>, vector<128x64xf32>
    tpu.vector_store %arg5[%c0_7, %c0_8], %8 {strides = array<i32>} : memref<128x64xf32, #tpu.memory_space<vmem>>, vector<128x64xf32>,
    %10 = vector.extract_strided_slice %5 {offsets = [0, 128], sizes = [128, 64], strides = [1, 1]} : vector<128x192xf32> to vector<128x64xf32>
    %c0_9 = arith.constant 0 : index
    %c0_10 = arith.constant 0 : index
    %11 = vector.load %arg6[%c0_9, %c0_10] : memref<128x64xf32, #tpu.memory_space<vmem>>, vector<128x64xf32>
    tpu.vector_store %arg6[%c0_9, %c0_10], %10 {strides = array<i32>} : memref<128x64xf32, #tpu.memory_space<vmem>>, vector<128x64xf32>,
    return
  }
  func.func @transform_0(%arg0: i32) -> (i32, i32) {
    %c0_i32 = arith.constant 0 : i32
    %c0_i32_0 = arith.constant 0 : i32
    return %arg0, %c0_i32 : i32, i32
  }
  func.func @transform_1(%arg0: i32) -> (i32, i32) {
    %c0_i32 = arith.constant 0 : i32
    %c0_i32_0 = arith.constant 0 : i32
    %c0_i32_1 = arith.constant 0 : i32
    return %c0_i32, %c0_i32_0 : i32, i32
  }
  func.func @transform_2(%arg0: i32) -> (i32, i32) {
    %c0_i32 = arith.constant 0 : i32
    %c0_i32_0 = arith.constant 0 : i32
    %c0_i32_1 = arith.constant 0 : i32
    return %c0_i32, %c0_i32_0 : i32, i32
  }
  func.func @transform_3(%arg0: i32) -> (i32, i32) {
    %c0_i32 = arith.constant 0 : i32
    %c0_i32_0 = arith.constant 0 : i32
    return %arg0, %c0_i32 : i32, i32
  }
  func.func @transform_4(%arg0: i32) -> (i32, i32) {
    %c0_i32 = arith.constant 0 : i32
    %c0_i32_0 = arith.constant 0 : i32
    return %arg0, %c0_i32 : i32, i32
  }
  func.func @transform_5(%arg0: i32) -> (i32, i32) {
    %c0_i32 = arith.constant 0 : i32
    %c0_i32_0 = arith.constant 0 : i32
    return %arg0, %c0_i32 : i32, i32
  }
}

module attributes {stable_mosaic.version = 11 : i64} {
  func.func @linear_kernel(%arg0: i32, %arg1: memref<512x16xf32, #tpu.memory_space<vmem>>, %arg2: memref<16x64xf32, #tpu.memory_space<vmem>>, %arg3: memref<1x64xf32, #tpu.memory_space<vmem>>, %arg4: memref<512x64xf32, #tpu.memory_space<vmem>>) attributes {dimension_semantics = [#tpu.dimension_semantics<parallel>], iteration_bounds = array<i64: 2>, scalar_prefetch = 0 : i64, scratch_operands = 0 : i64, tpu.core_type = #tpu.core_type<tc>, window_params = [{transform_indices = @transform_0, window_bounds = array<i64: 512, 16>}, {pipeline_mode = #tpu.pipeline_mode<synchronous>, transform_indices = @transform_1, window_bounds = array<i64: 16, 64>}, {pipeline_mode = #tpu.pipeline_mode<synchronous>, transform_indices = @transform_2, window_bounds = array<i64: 1, 64>}, {transform_indices = @transform_3, window_bounds = array<i64: 512, 64>}]} {
    %c0 = arith.constant 0 : index
    %c0_0 = arith.constant 0 : index
    %0 = vector.load %arg1[%c0, %c0_0] : memref<512x16xf32, #tpu.memory_space<vmem>>, vector<512x16xf32>
    %c0_1 = arith.constant 0 : index
    %c0_2 = arith.constant 0 : index
    %1 = vector.load %arg2[%c0_1, %c0_2] : memref<16x64xf32, #tpu.memory_space<vmem>>, vector<16x64xf32>
    %cst = arith.constant dense<0.000000e+00> : vector<512x64xf32>
    %2 = tpu.matmul %0, %1, %cst {dimension_numbers = #tpu.dot_dimension_numbers<[1], [0], [0], [1], [0, 0, 1, 1], [], []>} : vector<512x16xf32>, vector<16x64xf32>, vector<512x64xf32> -> vector<512x64xf32>
    %c0_3 = arith.constant 0 : index
    %c0_4 = arith.constant 0 : index
    %3 = vector.load %arg3[%c0_3, %c0_4] : memref<1x64xf32, #tpu.memory_space<vmem>>, vector<1x64xf32>
    %4 = vector.broadcast %3 : vector<1x64xf32> to vector<512x64xf32>
    %5 = arith.addf %2, %4 : vector<512x64xf32>
    %c0_5 = arith.constant 0 : index
    %c0_6 = arith.constant 0 : index
    %6 = vector.load %arg4[%c0_5, %c0_6] : memref<512x64xf32, #tpu.memory_space<vmem>>, vector<512x64xf32>
    tpu.vector_store %arg4[%c0_5, %c0_6], %5 {strides = array<i32>} : memref<512x64xf32, #tpu.memory_space<vmem>>, vector<512x64xf32>,
    return
  }
  func.func @transform_0(%arg0: i32) -> (i32, i32) {
    %c0_i32 = arith.constant 0 : i32
    %c0_i32_0 = arith.constant 0 : i32
    return %arg0, %c0_i32 : i32, i32
  }
  func.func @transform_1(%arg0: i32) -> (i32, i32) {
    %c0_i32 = arith.constant 0 : i32
    %c0_i32_0 = arith.constant 0 : i32
    %c0_i32_1 = arith.constant 0 : i32
    return %c0_i32, %c0_i32_0 : i32, i32
  }
  func.func @transform_2(%arg0: i32) -> (i32, i32) {
    %c0_i32 = arith.constant 0 : i32
    %c0_i32_0 = arith.constant 0 : i32
    %c0_i32_1 = arith.constant 0 : i32
    return %c0_i32, %c0_i32_0 : i32, i32
  }
  func.func @transform_3(%arg0: i32) -> (i32, i32) {
    %c0_i32 = arith.constant 0 : i32
    %c0_i32_0 = arith.constant 0 : i32
    return %arg0, %c0_i32 : i32, i32
  }
}

module attributes {stable_mosaic.version = 11 : i64} {
  func.func @attn_kernel(%arg0: i32, %arg1: memref<1x512xi32, #tpu.memory_space<vmem>>, %arg2: memref<1x512xi32, #tpu.memory_space<vmem>>, %arg3: memref<1x512xf32, #tpu.memory_space<vmem>>, %arg4: memref<128x64xf32, #tpu.memory_space<vmem>>, %arg5: memref<128x64xf32, #tpu.memory_space<vmem>>, %arg6: memref<128x64xf32, #tpu.memory_space<vmem>>, %arg7: memref<512x64xf32, #tpu.memory_space<vmem>>, %arg8: memref<64x8xf32, #tpu.memory_space<vmem>>, %arg9: memref<8x64xf32, #tpu.memory_space<vmem>>, %arg10: memref<128x128xf32, #tpu.memory_space<vmem>>, %arg11: memref<8x512xf32, #tpu.memory_space<vmem>>) attributes {dimension_semantics = [#tpu.dimension_semantics<arbitrary>], iteration_bounds = array<i64: 2>, scalar_prefetch = 0 : i64, scratch_operands = 0 : i64, tpu.core_type = #tpu.core_type<tc>, window_params = [{transform_indices = @transform_0, window_bounds = array<i64: 1, 512>}, {transform_indices = @transform_1, window_bounds = array<i64: 1, 512>}, {transform_indices = @transform_2, window_bounds = array<i64: 1, 512>}, {pipeline_mode = #tpu.pipeline_mode<synchronous>, transform_indices = @transform_3, window_bounds = array<i64: 128, 64>}, {pipeline_mode = #tpu.pipeline_mode<synchronous>, transform_indices = @transform_4, window_bounds = array<i64: 128, 64>}, {pipeline_mode = #tpu.pipeline_mode<synchronous>, transform_indices = @transform_5, window_bounds = array<i64: 128, 64>}, {transform_indices = @transform_6, window_bounds = array<i64: 512, 64>}, {pipeline_mode = #tpu.pipeline_mode<synchronous>, transform_indices = @transform_7, window_bounds = array<i64: 64, 8>}, {pipeline_mode = #tpu.pipeline_mode<synchronous>, transform_indices = @transform_8, window_bounds = array<i64: 8, 64>}, {pipeline_mode = #tpu.pipeline_mode<synchronous>, transform_indices = @transform_9, window_bounds = array<i64: 128, 128>}, {transform_indices = @transform_10, window_bounds = array<i64: 8, 512>}]} {
    %c0_i32 = arith.constant 0 : i32
    %0 = arith.cmpi eq, %arg0, %c0_i32 : i32
    %1 = arith.extui %0 : i1 to i32
    %c0_i32_0 = arith.constant 0 : i32
    %2 = arith.cmpi ne, %1, %c0_i32_0 : i32
    scf.if %2 {
      %cst_31 = arith.constant 0.000000e+00 : f32
      %42 = vector.broadcast %cst_31 : f32 to vector<128x128xf32>
      %c0_32 = arith.constant 0 : index
      %c0_33 = arith.constant 0 : index
      %43 = vector.load %arg10[%c0_32, %c0_33] : memref<128x128xf32, #tpu.memory_space<vmem>>, vector<128x128xf32>
      tpu.vector_store %arg10[%c0_32, %c0_33], %42 {strides = array<i32>} : memref<128x128xf32, #tpu.memory_space<vmem>>, vector<128x128xf32>,
    } else {
    }
    %3 = tpu.iota {dimensions = array<i32: 0>} : vector<128x512xi32>
    %c0 = arith.constant 0 : index
    %c0_1 = arith.constant 0 : index
    %4 = vector.load %arg2[%c0, %c0_1] : memref<1x512xi32, #tpu.memory_space<vmem>>, vector<1x512xi32>
    %5 = vector.broadcast %4 : vector<1x512xi32> to vector<128x512xi32>
    %6 = arith.cmpi eq, %3, %5 : vector<128x512xi32>
    %7 = arith.extui %6 : vector<128x512xi1> to vector<128x512xi32>
    %8 = arith.sitofp %7 : vector<128x512xi32> to vector<128x512xf32>
    %c0_2 = arith.constant 0 : index
    %c0_3 = arith.constant 0 : index
    %9 = vector.load %arg1[%c0_2, %c0_3] : memref<1x512xi32, #tpu.memory_space<vmem>>, vector<1x512xi32>
    %10 = vector.broadcast %9 : vector<1x512xi32> to vector<128x512xi32>
    %11 = arith.cmpi eq, %3, %10 : vector<128x512xi32>
    %12 = arith.extui %11 : vector<128x512xi1> to vector<128x512xi32>
    %13 = arith.sitofp %12 : vector<128x512xi32> to vector<128x512xf32>
    %c0_4 = arith.constant 0 : index
    %c0_5 = arith.constant 0 : index
    %14 = vector.load %arg4[%c0_4, %c0_5] : memref<128x64xf32, #tpu.memory_space<vmem>>, vector<128x64xf32>
    %cst = arith.constant dense<0.000000e+00> : vector<512x64xf32>
    %15 = tpu.matmul %8, %14, %cst {dimension_numbers = #tpu.dot_dimension_numbers<[0], [0], [1], [1], [0, 1, 1, 1], [], []>} : vector<128x512xf32>, vector<128x64xf32>, vector<512x64xf32> -> vector<512x64xf32>
    %c0_6 = arith.constant 0 : index
    %c0_7 = arith.constant 0 : index
    %16 = vector.load %arg5[%c0_6, %c0_7] : memref<128x64xf32, #tpu.memory_space<vmem>>, vector<128x64xf32>
    %cst_8 = arith.constant dense<0.000000e+00> : vector<512x64xf32>
    %17 = tpu.matmul %13, %16, %cst_8 {dimension_numbers = #tpu.dot_dimension_numbers<[0], [0], [1], [1], [0, 1, 1, 1], [], []>} : vector<128x512xf32>, vector<128x64xf32>, vector<512x64xf32> -> vector<512x64xf32>
    %c0_9 = arith.constant 0 : index
    %c0_10 = arith.constant 0 : index
    %18 = vector.load %arg6[%c0_9, %c0_10] : memref<128x64xf32, #tpu.memory_space<vmem>>, vector<128x64xf32>
    %cst_11 = arith.constant dense<0.000000e+00> : vector<512x64xf32>
    %19 = tpu.matmul %13, %18, %cst_11 {dimension_numbers = #tpu.dot_dimension_numbers<[0], [0], [1], [1], [0, 1, 1, 1], [], []>} : vector<128x512xf32>, vector<128x64xf32>, vector<512x64xf32> -> vector<512x64xf32>
    %20 = arith.mulf %17, %15 : vector<512x64xf32>
    %c0_12 = arith.constant 0 : index
    %c0_13 = arith.constant 0 : index
    %21 = vector.load %arg7[%c0_12, %c0_13] : memref<512x64xf32, #tpu.memory_space<vmem>>, vector<512x64xf32>
    %22 = arith.mulf %20, %21 : vector<512x64xf32>
    %c0_14 = arith.constant 0 : index
    %c0_15 = arith.constant 0 : index
    %23 = vector.load %arg8[%c0_14, %c0_15] : memref<64x8xf32, #tpu.memory_space<vmem>>, vector<64x8xf32>
    %cst_16 = arith.constant dense<0.000000e+00> : vector<8x512xf32>
    %24 = tpu.matmul %23, %22, %cst_16 {dimension_numbers = #tpu.dot_dimension_numbers<[0], [1], [1], [0], [0, 1, 1, 0], [], []>} : vector<64x8xf32>, vector<512x64xf32>, vector<8x512xf32> -> vector<8x512xf32>
    %cst_17 = arith.constant -5.000000e+00 : f32
    %cst_18 = arith.constant 5.000000e+00 : f32
    %25 = vector.broadcast %cst_17 : f32 to vector<8x512xf32>
    %26 = arith.maximumf %25, %24 : vector<8x512xf32>
    %27 = vector.broadcast %cst_18 : f32 to vector<8x512xf32>
    %28 = arith.minimumf %27, %26 : vector<8x512xf32>
    %29 = math.exp %28 : vector<8x512xf32>
    %c0_19 = arith.constant 0 : index
    %c0_20 = arith.constant 0 : index
    %30 = vector.load %arg3[%c0_19, %c0_20] : memref<1x512xf32, #tpu.memory_space<vmem>>, vector<1x512xf32>
    %31 = vector.broadcast %30 : vector<1x512xf32> to vector<8x512xf32>
    %32 = arith.mulf %29, %31 : vector<8x512xf32>
    %c0_21 = arith.constant 0 : index
    %c0_22 = arith.constant 0 : index
    %33 = vector.load %arg11[%c0_21, %c0_22] : memref<8x512xf32, #tpu.memory_space<vmem>>, vector<8x512xf32>
    tpu.vector_store %arg11[%c0_21, %c0_22], %32 {strides = array<i32>} : memref<8x512xf32, #tpu.memory_space<vmem>>, vector<8x512xf32>,
    %c0_23 = arith.constant 0 : index
    %c0_24 = arith.constant 0 : index
    %34 = vector.load %arg9[%c0_23, %c0_24] : memref<8x64xf32, #tpu.memory_space<vmem>>, vector<8x64xf32>
    %cst_25 = arith.constant dense<0.000000e+00> : vector<512x64xf32>
    %35 = tpu.matmul %32, %34, %cst_25 {dimension_numbers = #tpu.dot_dimension_numbers<[0], [0], [1], [1], [0, 1, 1, 1], [], []>} : vector<8x512xf32>, vector<8x64xf32>, vector<512x64xf32> -> vector<512x64xf32>
    %36 = arith.mulf %19, %35 : vector<512x64xf32>
    %37 = tpu.concatenate %36, %35 in 1 : vector<512x64xf32>, vector<512x64xf32> -> vector<512x128xf32>
    %c0_26 = arith.constant 0 : index
    %c0_27 = arith.constant 0 : index
    %38 = vector.load %arg10[%c0_26, %c0_27] : memref<128x128xf32, #tpu.memory_space<vmem>>, vector<128x128xf32>
    %cst_28 = arith.constant dense<0.000000e+00> : vector<128x128xf32>
    %39 = tpu.matmul %8, %37, %cst_28 {dimension_numbers = #tpu.dot_dimension_numbers<[1], [0], [0], [1], [0, 0, 1, 1], [], []>} : vector<128x512xf32>, vector<512x128xf32>, vector<128x128xf32> -> vector<128x128xf32>
    %40 = arith.addf %38, %39 : vector<128x128xf32>
    %c0_29 = arith.constant 0 : index
    %c0_30 = arith.constant 0 : index
    %41 = vector.load %arg10[%c0_29, %c0_30] : memref<128x128xf32, #tpu.memory_space<vmem>>, vector<128x128xf32>
    tpu.vector_store %arg10[%c0_29, %c0_30], %40 {strides = array<i32>} : memref<128x128xf32, #tpu.memory_space<vmem>>, vector<128x128xf32>,
    return
  }
  func.func @transform_0(%arg0: i32) -> (i32, i32) {
    %c0_i32 = arith.constant 0 : i32
    %c0_i32_0 = arith.constant 0 : i32
    return %c0_i32, %arg0 : i32, i32
  }
  func.func @transform_1(%arg0: i32) -> (i32, i32) {
    %c0_i32 = arith.constant 0 : i32
    %c0_i32_0 = arith.constant 0 : i32
    return %c0_i32, %arg0 : i32, i32
  }
  func.func @transform_2(%arg0: i32) -> (i32, i32) {
    %c0_i32 = arith.constant 0 : i32
    %c0_i32_0 = arith.constant 0 : i32
    return %c0_i32, %arg0 : i32, i32
  }
  func.func @transform_3(%arg0: i32) -> (i32, i32) {
    %c0_i32 = arith.constant 0 : i32
    %c0_i32_0 = arith.constant 0 : i32
    %c0_i32_1 = arith.constant 0 : i32
    return %c0_i32, %c0_i32_0 : i32, i32
  }
  func.func @transform_4(%arg0: i32) -> (i32, i32) {
    %c0_i32 = arith.constant 0 : i32
    %c0_i32_0 = arith.constant 0 : i32
    %c0_i32_1 = arith.constant 0 : i32
    return %c0_i32, %c0_i32_0 : i32, i32
  }
  func.func @transform_5(%arg0: i32) -> (i32, i32) {
    %c0_i32 = arith.constant 0 : i32
    %c0_i32_0 = arith.constant 0 : i32
    %c0_i32_1 = arith.constant 0 : i32
    return %c0_i32, %c0_i32_0 : i32, i32
  }
  func.func @transform_6(%arg0: i32) -> (i32, i32) {
    %c0_i32 = arith.constant 0 : i32
    %c0_i32_0 = arith.constant 0 : i32
    return %arg0, %c0_i32 : i32, i32
  }
  func.func @transform_7(%arg0: i32) -> (i32, i32) {
    %c0_i32 = arith.constant 0 : i32
    %c0_i32_0 = arith.constant 0 : i32
    %c0_i32_1 = arith.constant 0 : i32
    return %c0_i32, %c0_i32_0 : i32, i32
  }
  func.func @transform_8(%arg0: i32) -> (i32, i32) {
    %c0_i32 = arith.constant 0 : i32
    %c0_i32_0 = arith.constant 0 : i32
    %c0_i32_1 = arith.constant 0 : i32
    return %c0_i32, %c0_i32_0 : i32, i32
  }
  func.func @transform_9(%arg0: i32) -> (i32, i32) {
    %c0_i32 = arith.constant 0 : i32
    %c0_i32_0 = arith.constant 0 : i32
    %c0_i32_1 = arith.constant 0 : i32
    return %c0_i32, %c0_i32_0 : i32, i32
  }
  func.func @transform_10(%arg0: i32) -> (i32, i32) {
    %c0_i32 = arith.constant 0 : i32
    %c0_i32_0 = arith.constant 0 : i32
    return %c0_i32, %arg0 : i32, i32
  }
}

</mosaic_0001>

<llo_original>
// kernel: multi_head_attention.3
$region0: #{multi_head_attention.3}
  #allocation0 [shape = 'u32[]', space=smem, size = 0x4, offset = 0x4, fixed_abs, tag = 'smem constant byte address 0x4 - core index']
  #allocation1 [shape = 'u32[144,128]{1,0:T(1,128)}', space=vmem, size = 0x12000, scoped, tag = 'internal scratch']
  %s0 = inlined_call_operand.vmem [shape: f32[128,32], index: 0, kind: input, shape index: {}]
  %s1 = inlined_call_operand.vmem [shape: f32[32,192], index: 1, kind: input, shape index: {}]
  %s2 = inlined_call_operand.vmem [shape: f32[1,192], index: 2, kind: input, shape index: {}]
  %s3 = inlined_call_operand.vmem [shape: f32[128,64], index: 3, kind: output, shape index: {0}]
  %s4 = inlined_call_operand.vmem [shape: f32[128,64], index: 4, kind: output, shape index: {1}]
  %s5 = inlined_call_operand.vmem [shape: f32[128,64], index: 5, kind: output, shape index: {2}]
  %6 = xla_tuple %s3, %s4, %s5
  %s7 = sld [smem:[#allocation0]]
  $region38: #{multi_head_attention.3} parent=0
    _
  %s9 = ssub.s32 1, %s7
  %s10 = scalar_select 0, %s9, %s7
  // Predicated region
  $region2: #{multi_head_attention.3} parent=0 // pred_check
    _
  $region3: #{multi_head_attention.3} parent=0 // pred_check_branch
    %12 = sbr.rel (0) target = $region5
  $region4: #{multi_head_attention.3} parent=0 // pred_region
    _
  $region5: #{multi_head_attention.3} parent=0 // pred_fallthru
    _
  // Predicated region
  $region6: #{multi_head_attention.3} parent=0 // pred_check
    _
  $region7: #{multi_head_attention.3} parent=0 // pred_check_branch
    %14 = sbr.rel (0) target = $region9
  $region8: #{multi_head_attention.3} parent=0 // pred_region
    _
  $region9: #{multi_head_attention.3} parent=0 // pred_fallthru
    _
  // Predicated region
  $region10: #{multi_head_attention.3} parent=0 // pred_check
    _
  $region11: #{multi_head_attention.3} parent=0 // pred_check_branch
    %16 = sbr.rel (0) target = $region13
  $region12: #{multi_head_attention.3} parent=0 // pred_region
    _
  $region13: #{multi_head_attention.3} parent=0 // pred_fallthru
    _
  %v17 = vld [vmem:[%s0] sm:$0xff]
  %v18 = vld [vmem:[%s0 + $0x8] sm:$0xff]
  %v19 = vld [vmem:[%s0 + $0x10] sm:$0xff]
  %v20 = vld [vmem:[%s0 + $0x18] sm:$0xff]
  %v21 = vld [vmem:[%s0 + $0x20] sm:$0xff]
  %v22 = vld [vmem:[%s0 + $0x28] sm:$0xff]
  %v23 = vld [vmem:[%s0 + $0x30] sm:$0xff]
  %v24 = vld [vmem:[%s0 + $0x38] sm:$0xff]
  %v25 = vld [vmem:[%s0 + $0x40] sm:$0xff]
  %v26 = vld [vmem:[%s0 + $0x48] sm:$0xff]
  %v27 = vld [vmem:[%s0 + $0x50] sm:$0xff]
  %v28 = vld [vmem:[%s0 + $0x58] sm:$0xff]
  %v29 = vld [vmem:[%s0 + $0x60] sm:$0xff]
  %v30 = vld [vmem:[%s0 + $0x68] sm:$0xff]
  %v31 = vld [vmem:[%s0 + $0x70] sm:$0xff]
  %v32 = vld [vmem:[%s0 + $0x78] sm:$0xff]
  %v33 = vld [vmem:[%s1] sm:$0xff]
  %v34 = vld [vmem:[%s1 + $0x8] sm:$0xff]
  %v35 = vld [vmem:[%s1 + $0x10] sm:$0xff]
  %v36 = vld [vmem:[%s1 + $0x18] sm:$0xff]
  %v37 = vld [vmem:[%s1 + $0x20] sm:$0xff]
  %v38 = vld [vmem:[%s1 + $0x28] sm:$0xff]
  %v39 = vld [vmem:[%s1 + $0x30] sm:$0xff]
  %v40 = vld [vmem:[%s1 + $0x38] sm:$0xff]
  %v41 = vld [vmem:[%s2] sm:$0x3]
  %v43 = vlaneseq
  %v44 = vshrl.u32 %v43, 7
  %v45 = vsub.s32 0, %v44
  %v46 = vrot.slane %v41, %v45
  %v47 = vlaneseq
  %v48 = vshrl.u32 %v47, 7
  %v49 = vsub.s32 1, %v48
  %v50 = vrot.slane %v41, %v49
  %vm53 = vcmask 261120
  %v55 = vsel %vm53, %v17, 0
  %v58 = vsel %vm53, %v18, 0
  %v61 = vsel %vm53, %v19, 0
  %v64 = vsel %vm53, %v20, 0
  %v67 = vsel %vm53, %v21, 0
  %v70 = vsel %vm53, %v22, 0
  %v73 = vsel %vm53, %v23, 0
  %v76 = vsel %vm53, %v24, 0
  %v79 = vsel %vm53, %v25, 0
  %v82 = vsel %vm53, %v26, 0
  %v85 = vsel %vm53, %v27, 0
  %v88 = vsel %vm53, %v28, 0
  %v91 = vsel %vm53, %v29, 0
  %v94 = vsel %vm53, %v30, 0
  %v97 = vsel %vm53, %v31, 0
  %v100 = vsel %vm53, %v32, 0
  %102 = vmatprep.subr.mxu0 %v34
  %103 = vmatpush1.msra.mxu0 %v33
  %104 = vmatprep.subr.mxu0 %v36
  %105 = vmatpush1.msra.mxu0 %v35
  %106 = vmatprep.subr.mxu0 %v38
  %107 = vmatpush1.msra.mxu0 %v37
  %108 = vmatprep.subr.mxu0 %v40
  %109 = vmatpush1.msra.mxu0 %v39
  %110 = vmatprep.subr.mxu0 0.0
  %111 = vmatpush1.msra.mxu0 0.0
  %112 = vmatprep.subr.mxu0 0.0
  %113 = vmatpush1.msra.mxu0 0.0
  %114 = vmatprep.subr.mxu0 0.0
  %115 = vmatpush1.msra.mxu0 0.0
  %116 = vmatprep.subr.mxu0 0.0
  %117 = vmatpush1.msra.mxu0 0.0
  %118 = vmatprep.subr.mxu0 0.0
  %119 = vmatpush1.msra.mxu0 0.0
  %120 = vmatprep.subr.mxu0 0.0
  %121 = vmatpush1.msra.mxu0 0.0
  %122 = vmatprep.subr.mxu0 0.0
  %123 = vmatpush1.msra.mxu0 0.0
  %124 = vmatprep.subr.mxu0 0.0
  %125 = vmatpush1.msra.mxu0 0.0
  %126 = vmatprep.subr.mxu0 0.0
  %127 = vmatpush1.msra.mxu0 0.0
  %128 = vmatprep.subr.mxu0 0.0
  %129 = vmatpush1.msra.mxu0 0.0
  %130 = vmatprep.subr.mxu0 0.0
  %131 = vmatpush1.msra.mxu0 0.0
  %132 = vmatprep.subr.mxu0 0.0
  %133 = vmatpush1.msra.mxu0 0.0
  %134 = vmatprep.subr.mxu0 0.0
  %135 = vmatpush1.msra.mxu0 0.0
  %136 = vmatprep.subr.mxu0 0.0
  %137 = vmatpush1.msra.mxu0 0.0
  %138 = vmatprep.subr.mxu0 0.0
  %139 = vmatpush1.msra.mxu0 0.0
  %140 = vmatprep.subr.mxu0 0.0
  %141 = vmatpush1.msra.mxu0 0.0
  %142 = vmatprep.subr.mxu0 0.0
  %143 = vmatpush1.msra.mxu0 0.0
  %144 = vmatprep.subr.mxu0 0.0
  %145 = vmatpush1.msra.mxu0 0.0
  %146 = vmatprep.subr.mxu0 0.0
  %147 = vmatpush1.msra.mxu0 0.0
  %148 = vmatprep.subr.mxu0 0.0
  %149 = vmatpush1.msra.mxu0 0.0
  %150 = vmatprep.subr.mxu0 0.0
  %151 = vmatpush1.msra.mxu0 0.0
  %152 = vmatprep.subr.mxu0 0.0
  %153 = vmatpush1.msra.mxu0 0.0
  %154 = vmatprep.subr.mxu0 0.0
  %155 = vmatpush1.msra.mxu0 0.0
  %156 = vmatprep.subr.mxu0 0.0
  %157 = vmatpush1.msra.mxu0 0.0
  %158 = vmatprep.subr.mxu0 0.0
  %159 = vmatpush1.msra.mxu0 0.0
  %160 = vmatprep.subr.mxu0 0.0
  %161 = vmatpush1.msra.mxu0 0.0
  %162 = vmatprep.subr.mxu0 0.0
  %163 = vmatpush1.msra.mxu0 0.0
  %164 = vmatprep.subr.mxu0 0.0
  %165 = vmatpush1.msra.mxu0 0.0
  %166 = vmatprep.mubr.f32.mxu0 0.0
  %167 = vmatmul.mubr.f32.gmra.mrb[0].mxu0 %v55
  %v168 = vpop.f32.mrb[0].mxu0
  %v169 = vadd.f32 %v46, %v168
  %v170 = vpop.f32.mrb[0].mxu0
  %v171 = vadd.f32 %v50, %v170
  %172 = vmatprep.mubr.f32.mxu0 0.0
  %173 = vmatmul.mubr.f32.gmra.mrb[0].mxu0 %v58
  %v174 = vpop.f32.mrb[0].mxu0
  %v175 = vadd.f32 %v46, %v174
  %v176 = vpop.f32.mrb[0].mxu0
  %v177 = vadd.f32 %v50, %v176
  %178 = vmatprep.mubr.f32.mxu0 0.0
  %179 = vmatmul.mubr.f32.gmra.mrb[0].mxu0 %v61
  %v180 = vpop.f32.mrb[0].mxu0
  %v181 = vadd.f32 %v46, %v180
  %v182 = vpop.f32.mrb[0].mxu0
  %v183 = vadd.f32 %v50, %v182
  %184 = vmatprep.mubr.f32.mxu0 0.0
  %185 = vmatmul.mubr.f32.gmra.mrb[0].mxu0 %v64
  %v186 = vpop.f32.mrb[0].mxu0
  %v187 = vadd.f32 %v46, %v186
  %v188 = vpop.f32.mrb[0].mxu0
  %v189 = vadd.f32 %v50, %v188
  %190 = vmatprep.mubr.f32.mxu0 0.0
  %191 = vmatmul.mubr.f32.gmra.mrb[0].mxu0 %v67
  %v192 = vpop.f32.mrb[0].mxu0
  %v193 = vadd.f32 %v46, %v192
  %v194 = vpop.f32.mrb[0].mxu0
  %v195 = vadd.f32 %v50, %v194
  %196 = vmatprep.mubr.f32.mxu0 0.0
  %197 = vmatmul.mubr.f32.gmra.mrb[0].mxu0 %v70
  %v198 = vpop.f32.mrb[0].mxu0
  %v199 = vadd.f32 %v46, %v198
  %v200 = vpop.f32.mrb[0].mxu0
  %v201 = vadd.f32 %v50, %v200
  %202 = vmatprep.mubr.f32.mxu0 0.0
  %203 = vmatmul.mubr.f32.gmra.mrb[0].mxu0 %v73
  %v204 = vpop.f32.mrb[0].mxu0
  %v205 = vadd.f32 %v46, %v204
  %v206 = vpop.f32.mrb[0].mxu0
  %v207 = vadd.f32 %v50, %v206
  %208 = vmatprep.mubr.f32.mxu0 0.0
  %209 = vmatmul.mubr.f32.gmra.mrb[0].mxu0 %v76
  %v210 = vpop.f32.mrb[0].mxu0
  %v211 = vadd.f32 %v46, %v210
  %v212 = vpop.f32.mrb[0].mxu0
  %v213 = vadd.f32 %v50, %v212
  %214 = vmatprep.mubr.f32.mxu0 0.0
  %215 = vmatmul.mubr.f32.gmra.mrb[0].mxu0 %v79
  %v216 = vpop.f32.mrb[0].mxu0
  %v217 = vadd.f32 %v46, %v216
  %v218 = vpop.f32.mrb[0].mxu0
  %v219 = vadd.f32 %v50, %v218
  %220 = vmatprep.mubr.f32.mxu0 0.0
  %221 = vmatmul.mubr.f32.gmra.mrb[0].mxu0 %v82
  %v222 = vpop.f32.mrb[0].mxu0
  %v223 = vadd.f32 %v46, %v222
  %v224 = vpop.f32.mrb[0].mxu0
  %v225 = vadd.f32 %v50, %v224
  %226 = vmatprep.mubr.f32.mxu0 0.0
  %227 = vmatmul.mubr.f32.gmra.mrb[0].mxu0 %v85
  %v228 = vpop.f32.mrb[0].mxu0
  %v229 = vadd.f32 %v46, %v228
  %v230 = vpop.f32.mrb[0].mxu0
  %v231 = vadd.f32 %v50, %v230
  %232 = vmatprep.mubr.f32.mxu0 0.0
  %233 = vmatmul.mubr.f32.gmra.mrb[0].mxu0 %v88
  %v234 = vpop.f32.mrb[0].mxu0
  %v235 = vadd.f32 %v46, %v234
  %v236 = vpop.f32.mrb[0].mxu0
  %v237 = vadd.f32 %v50, %v236
  %238 = vmatprep.mubr.f32.mxu0 0.0
  %239 = vmatmul.mubr.f32.gmra.mrb[0].mxu0 %v91
  %v240 = vpop.f32.mrb[0].mxu0
  %v241 = vadd.f32 %v46, %v240
  %v242 = vpop.f32.mrb[0].mxu0
  %v243 = vadd.f32 %v50, %v242
  %244 = vmatprep.mubr.f32.mxu0 0.0
  %245 = vmatmul.mubr.f32.gmra.mrb[0].mxu0 %v94
  %v246 = vpop.f32.mrb[0].mxu0
  %v247 = vadd.f32 %v46, %v246
  %v248 = vpop.f32.mrb[0].mxu0
  %v249 = vadd.f32 %v50, %v248
  %250 = vmatprep.mubr.f32.mxu0 0.0
  %251 = vmatmul.mubr.f32.gmra.mrb[0].mxu0 %v97
  %v252 = vpop.f32.mrb[0].mxu0
  %v253 = vadd.f32 %v46, %v252
  %v254 = vpop.f32.mrb[0].mxu0
  %v255 = vadd.f32 %v50, %v254
  %256 = vmatprep.mubr.f32.mxu0 0.0
  %257 = vmatmul.mubr.f32.gmra.mrb[0].mxu0 %v100
  %v258 = vpop.f32.mrb[0].mxu0
  %v259 = vadd.f32 %v46, %v258
  %v260 = vpop.f32.mrb[0].mxu0
  %v261 = vadd.f32 %v50, %v260
  %262 = vdwg.mxu0
  %vm263 = vcmask 523264
  %264 = vst.msk [vmem:[%s3] sm:$0xff] %vm263, %v169
  %265 = vst.msk [vmem:[%s3 + $0x8] sm:$0xff] %vm263, %v175
  %266 = vst.msk [vmem:[%s3 + $0x10] sm:$0xff] %vm263, %v181
  %267 = vst.msk [vmem:[%s3 + $0x18] sm:$0xff] %vm263, %v187
  %268 = vst.msk [vmem:[%s3 + $0x20] sm:$0xff] %vm263, %v193
  %269 = vst.msk [vmem:[%s3 + $0x28] sm:$0xff] %vm263, %v199
  %270 = vst.msk [vmem:[%s3 + $0x30] sm:$0xff] %vm263, %v205
  %271 = vst.msk [vmem:[%s3 + $0x38] sm:$0xff] %vm263, %v211
  %272 = vst.msk [vmem:[%s3 + $0x40] sm:$0xff] %vm263, %v217
  %273 = vst.msk [vmem:[%s3 + $0x48] sm:$0xff] %vm263, %v223
  %274 = vst.msk [vmem:[%s3 + $0x50] sm:$0xff] %vm263, %v229
  %275 = vst.msk [vmem:[%s3 + $0x58] sm:$0xff] %vm263, %v235
  %276 = vst.msk [vmem:[%s3 + $0x60] sm:$0xff] %vm263, %v241
  %277 = vst.msk [vmem:[%s3 + $0x68] sm:$0xff] %vm263, %v247
  %278 = vst.msk [vmem:[%s3 + $0x70] sm:$0xff] %vm263, %v253
  %279 = vst.msk [vmem:[%s3 + $0x78] sm:$0xff] %vm263, %v259
  %296 = vrot.lane.b32.xlu0 %v169, 64
  %v297 = vpop.permute.xlu0 %296
  %298 = vrot.lane.b32.xlu0 %v175, 64
  %v299 = vpop.permute.xlu0 %298
  %300 = vrot.lane.b32.xlu0 %v181, 64
  %v301 = vpop.permute.xlu0 %300
  %302 = vrot.lane.b32.xlu0 %v187, 64
  %v303 = vpop.permute.xlu0 %302
  %304 = vrot.lane.b32.xlu0 %v193, 64
  %v305 = vpop.permute.xlu0 %304
  %306 = vrot.lane.b32.xlu0 %v199, 64
  %v307 = vpop.permute.xlu0 %306
  %308 = vrot.lane.b32.xlu0 %v205, 64
  %v309 = vpop.permute.xlu0 %308
  %310 = vrot.lane.b32.xlu0 %v211, 64
  %v311 = vpop.permute.xlu0 %310
  %312 = vrot.lane.b32.xlu0 %v217, 64
  %v313 = vpop.permute.xlu0 %312
  %314 = vrot.lane.b32.xlu0 %v223, 64
  %v315 = vpop.permute.xlu0 %314
  %316 = vrot.lane.b32.xlu0 %v229, 64
  %v317 = vpop.permute.xlu0 %316
  %318 = vrot.lane.b32.xlu0 %v235, 64
  %v319 = vpop.permute.xlu0 %318
  %320 = vrot.lane.b32.xlu0 %v241, 64
  %v321 = vpop.permute.xlu0 %320
  %322 = vrot.lane.b32.xlu0 %v247, 64
  %v323 = vpop.permute.xlu0 %322
  %324 = vrot.lane.b32.xlu0 %v253, 64
  %v325 = vpop.permute.xlu0 %324
  %326 = vrot.lane.b32.xlu0 %v259, 64
  %v327 = vpop.permute.xlu0 %326
  %344 = vst.msk [vmem:[%s4] sm:$0xff] %vm263, %v297
  %345 = vst.msk [vmem:[%s4 + $0x8] sm:$0xff] %vm263, %v299
  %346 = vst.msk [vmem:[%s4 + $0x10] sm:$0xff] %vm263, %v301
  %347 = vst.msk [vmem:[%s4 + $0x18] sm:$0xff] %vm263, %v303
  %348 = vst.msk [vmem:[%s4 + $0x20] sm:$0xff] %vm263, %v305
  %349 = vst.msk [vmem:[%s4 + $0x28] sm:$0xff] %vm263, %v307
  %350 = vst.msk [vmem:[%s4 + $0x30] sm:$0xff] %vm263, %v309
  %351 = vst.msk [vmem:[%s4 + $0x38] sm:$0xff] %vm263, %v311
  %352 = vst.msk [vmem:[%s4 + $0x40] sm:$0xff] %vm263, %v313
  %353 = vst.msk [vmem:[%s4 + $0x48] sm:$0xff] %vm263, %v315
  %354 = vst.msk [vmem:[%s4 + $0x50] sm:$0xff] %vm263, %v317
  %355 = vst.msk [vmem:[%s4 + $0x58] sm:$0xff] %vm263, %v319
  %356 = vst.msk [vmem:[%s4 + $0x60] sm:$0xff] %vm263, %v321
  %357 = vst.msk [vmem:[%s4 + $0x68] sm:$0xff] %vm263, %v323
  %358 = vst.msk [vmem:[%s4 + $0x70] sm:$0xff] %vm263, %v325
  %359 = vst.msk [vmem:[%s4 + $0x78] sm:$0xff] %vm263, %v327
  %360 = vst.msk [vmem:[%s5] sm:$0xff] %vm263, %v171
  %361 = vst.msk [vmem:[%s5 + $0x8] sm:$0xff] %vm263, %v177
  %362 = vst.msk [vmem:[%s5 + $0x10] sm:$0xff] %vm263, %v183
  %363 = vst.msk [vmem:[%s5 + $0x18] sm:$0xff] %vm263, %v189
  %364 = vst.msk [vmem:[%s5 + $0x20] sm:$0xff] %vm263, %v195
  %365 = vst.msk [vmem:[%s5 + $0x28] sm:$0xff] %vm263, %v201
  %366 = vst.msk [vmem:[%s5 + $0x30] sm:$0xff] %vm263, %v207
  %367 = vst.msk [vmem:[%s5 + $0x38] sm:$0xff] %vm263, %v213
  %368 = vst.msk [vmem:[%s5 + $0x40] sm:$0xff] %vm263, %v219
  %369 = vst.msk [vmem:[%s5 + $0x48] sm:$0xff] %vm263, %v225
  %370 = vst.msk [vmem:[%s5 + $0x50] sm:$0xff] %vm263, %v231
  %371 = vst.msk [vmem:[%s5 + $0x58] sm:$0xff] %vm263, %v237
  %372 = vst.msk [vmem:[%s5 + $0x60] sm:$0xff] %vm263, %v243
  %373 = vst.msk [vmem:[%s5 + $0x68] sm:$0xff] %vm263, %v249
  %374 = vst.msk [vmem:[%s5 + $0x70] sm:$0xff] %vm263, %v255
  %375 = vst.msk [vmem:[%s5 + $0x78] sm:$0xff] %vm263, %v261
  // Predicated region
  $region14: #{multi_head_attention.3} parent=0 // pred_check
    _
  $region15: #{multi_head_attention.3} parent=0 // pred_check_branch
    %377 = sbr.rel (0) target = $region17
  $region16: #{multi_head_attention.3} parent=0 // pred_region
    _
  $region17: #{multi_head_attention.3} parent=0 // pred_fallthru
    _
  // Predicated region
  $region18: #{multi_head_attention.3} parent=0 // pred_check
    _
  $region19: #{multi_head_attention.3} parent=0 // pred_check_branch
    %379 = sbr.rel (0) target = $region21
  $region20: #{multi_head_attention.3} parent=0 // pred_region
    _
  $region21: #{multi_head_attention.3} parent=0 // pred_fallthru
    _
  // Predicated region
  $region22: #{multi_head_attention.3} parent=0 // pred_check
    _
  $region23: #{multi_head_attention.3} parent=0 // pred_check_branch
    %381 = sbr.rel (0) target = $region25
  $region24: #{multi_head_attention.3} parent=0 // pred_region
    _
  $region25: #{multi_head_attention.3} parent=0 // pred_fallthru
    _
  // Predicated region
  $region26: #{multi_head_attention.3} parent=0 // pred_check
    _
  $region27: #{multi_head_attention.3} parent=0 // pred_check_branch
    %383 = sbr.rel (0) target = $region29
  $region28: #{multi_head_attention.3} parent=0 // pred_region
    _
  $region29: #{multi_head_attention.3} parent=0 // pred_fallthru
    _
  // Predicated region
  $region30: #{multi_head_attention.3} parent=0 // pred_check
    _
  $region31: #{multi_head_attention.3} parent=0 // pred_check_branch
    %385 = sbr.rel (0) target = $region33
  $region32: #{multi_head_attention.3} parent=0 // pred_region
    _
  $region33: #{multi_head_attention.3} parent=0 // pred_fallthru
    _
  // Predicated region
  $region34: #{multi_head_attention.3} parent=0 // pred_check
    _
  $region35: #{multi_head_attention.3} parent=0 // pred_check_branch
    %387 = sbr.rel (0) target = $region37
  $region36: #{multi_head_attention.3} parent=0 // pred_region
    _
  $region37: #{multi_head_attention.3} parent=0 // pred_fallthru
    _

// kernel: multi_head_attention.4
$region0: #{multi_head_attention.4}
  #allocation0 [shape = 'u32[]', space=smem, size = 0x4, offset = 0x4, fixed_abs, tag = 'smem constant byte address 0x4 - core index']
  #allocation1 [shape = 'u32[144,128]{1,0:T(1,128)}', space=vmem, size = 0x12000, scoped, tag = 'internal scratch']
  %s0 = inlined_call_operand.vmem [shape: f32[1024,16], index: 0, kind: input, shape index: {}]
  %s1 = inlined_call_operand.vmem [shape: f32[16,64], index: 1, kind: input, shape index: {}]
  %s2 = inlined_call_operand.vmem [shape: f32[1,64], index: 2, kind: input, shape index: {}]
  %s3 = inlined_call_operand.vmem [shape: f32[1024,64], index: 3, kind: output, shape index: {}]
  %s4 = sld [smem:[#allocation0]]
  $region45: #{multi_head_attention.4} parent=0
    _
  %s6 = ssub.s32 1, %s4
  %s7 = scalar_select 0, %s6, %s4
  loop: start=0, step=1, limit=4
  $region2: #{multi_head_attention.4} parent=0 // loop_pre_header
    _
  $region3: #{multi_head_attention.4} parent=0 // loop_header
    %s9 = sphi 0, %s13
    %p10 = scmp.ge.s32.totalorder %s9, 4
    %s19 = sphi 0, %s21
    %s22 = sphi 0, %s19
    %s23 = sphi 0, %s22
    %s39 = sphi 0, %s23
    %s43 = sphi 0, %s43
    %s45 = sphi 0, %s43
    %s46 = sphi 0, %s45
    %s60 = sphi 0, %s46
    %s64 = sphi 0, %s64
    %s66 = sphi 0, %s64
    %s67 = sphi 0, %s66
    %s81 = sphi 0, %s67
    %s87 = sphi 0, %s89
    %s90 = sphi 0, %s87
    %s91 = sphi 0, %s90
    %s107 = sphi 0, %s91
  $region4: #{multi_head_attention.4} parent=0 // loop_header_branch
    %12 = sbr.rel (%p10) target = $region8
  $region5: #{multi_head_attention.4} parent=0 // loop_body
    %s14 = ssub.s32 %s9, 1
    %s15 = ssub.s32 %s9, 2
    %s16 = sadd.s32 %s9, 1
    %s17 = ssub.s32 %s9, %s16
    %p18 = scmp.eq.s32.totalorder %s17, 0
    %s20 = sadd.s32 %s19, 1
    %s21 = scalar_select %p18, %s19, %s20
    %p24 = pneg %p18
    %p25 = scmp.eq.s32.totalorder %s9, 1
    %p26 = por %p24, %p25
    %p27 = scmp.ne.s32.totalorder %s19, %s22
    %p28 = scmp.eq.s32.totalorder %s9, 0
    %p29 = por %p27, %p28
    %p30 = scmp.ne.s32.totalorder %s19, %s22
    %p31 = scmp.eq.s32.totalorder %s14, 1
    %p32 = por %p30, %p31
    %p33 = scmp.ne.s32.totalorder %s22, %s23
    %p34 = scmp.eq.s32.totalorder %s14, 0
    %p35 = por %p33, %p34
    %p36 = scmp.ne.s32.totalorder %s22, %s23
    %p37 = scmp.eq.s32.totalorder %s15, 1
    %p38 = por %p36, %p37
    %p40 = scmp.ne.s32.totalorder %s23, %s39
    %p41 = scmp.eq.s32.totalorder %s15, 0
    %p42 = por %p40, %p41
    %s44 = sadd.s32 %s43, 1
    %p47 = scmp.eq.s32.totalorder %s9, 1
    %p48 = scmp.ne.s32.totalorder %s43, %s45
    %p49 = scmp.eq.s32.totalorder %s9, 0
    %p50 = por %p48, %p49
    %p51 = scmp.ne.s32.totalorder %s43, %s45
    %p52 = scmp.eq.s32.totalorder %s14, 1
    %p53 = por %p51, %p52
    %p54 = scmp.ne.s32.totalorder %s45, %s46
    %p55 = scmp.eq.s32.totalorder %s14, 0
    %p56 = por %p54, %p55
    %p57 = scmp.ne.s32.totalorder %s45, %s46
    %p58 = scmp.eq.s32.totalorder %s15, 1
    %p59 = por %p57, %p58
    %p61 = scmp.ne.s32.totalorder %s46, %s60
    %p62 = scmp.eq.s32.totalorder %s15, 0
    %p63 = por %p61, %p62
    %s65 = sadd.s32 %s64, 1
    %p68 = scmp.eq.s32.totalorder %s9, 1
    %p69 = scmp.ne.s32.totalorder %s64, %s66
    %p70 = scmp.eq.s32.totalorder %s9, 0
    %p71 = por %p69, %p70
    %p72 = scmp.ne.s32.totalorder %s64, %s66
    %p73 = scmp.eq.s32.totalorder %s14, 1
    %p74 = por %p72, %p73
    %p75 = scmp.ne.s32.totalorder %s66, %s67
    %p76 = scmp.eq.s32.totalorder %s14, 0
    %p77 = por %p75, %p76
    %p78 = scmp.ne.s32.totalorder %s66, %s67
    %p79 = scmp.eq.s32.totalorder %s15, 1
    %p80 = por %p78, %p79
    %p82 = scmp.ne.s32.totalorder %s67, %s81
    %p83 = scmp.eq.s32.totalorder %s15, 0
    %p84 = por %p82, %p83
    %s85 = ssub.s32 %s9, %s16
    %p86 = scmp.eq.s32.totalorder %s85, 0
    %s88 = sadd.s32 %s87, 1
    %s89 = scalar_select %p86, %s87, %s88
    %p92 = pneg %p86
    %p93 = scmp.eq.s32.totalorder %s9, 1
    %p94 = por %p92, %p93
    %p95 = scmp.ne.s32.totalorder %s87, %s90
    %p96 = scmp.eq.s32.totalorder %s9, 0
    %p97 = por %p95, %p96
    %p98 = scmp.ne.s32.totalorder %s87, %s90
    %p99 = scmp.eq.s32.totalorder %s14, 1
    %p100 = por %p98, %p99
    %p101 = scmp.ne.s32.totalorder %s90, %s91
    %p102 = scmp.eq.s32.totalorder %s14, 0
    %p103 = por %p101, %p102
    %p104 = scmp.ne.s32.totalorder %s90, %s91
    %p105 = scmp.eq.s32.totalorder %s15, 1
    %p106 = por %p104, %p105
    %p108 = scmp.ne.s32.totalorder %s91, %s107
    %p109 = scmp.eq.s32.totalorder %s15, 0
    %p110 = por %p108, %p109
    %p111 = scmp.le.s32.totalorder 1, %s9
    %p112 = scmp.lt.s32.totalorder %s9, 3
    %p113 = pnand %p111, %p112
    %p114 = pneg %p113
    // Predicated region
    $region9: #{multi_head_attention.4} parent=5 // pred_check
      _
    $region10: #{multi_head_attention.4} parent=5 // pred_check_branch
      %116 = sbr.rel (%p113) target = $region12
    $region11: #{multi_head_attention.4} parent=5 // pred_region
      %s117 = ssub.s32 %s9, 1
      // Predicated region
      $region13: #{multi_head_attention.4} parent=11 // pred_check
        %p118 = pneg %p56
      $region14: #{multi_head_attention.4} parent=11 // pred_check_branch
        %120 = sbr.rel (%p118) target = $region16
      $region15: #{multi_head_attention.4} parent=11 // pred_region
        _
      $region16: #{multi_head_attention.4} parent=11 // pred_fallthru
        _
      // Predicated region
      $region17: #{multi_head_attention.4} parent=11 // pred_check
        %p121 = pneg %p77
      $region18: #{multi_head_attention.4} parent=11 // pred_check_branch
        %123 = sbr.rel (%p121) target = $region20
      $region19: #{multi_head_attention.4} parent=11 // pred_region
        _
      $region20: #{multi_head_attention.4} parent=11 // pred_fallthru
        _
    $region12: #{multi_head_attention.4} parent=5 // pred_fallthru
      _
    %p124 = scmp.lt.s32.totalorder %s9, 2
    // Predicated region
    $region21: #{multi_head_attention.4} parent=5 // pred_check
      %p125 = pneg %p124
    $region22: #{multi_head_attention.4} parent=5 // pred_check_branch
      %127 = sbr.rel (%p125) target = $region24
    $region23: #{multi_head_attention.4} parent=5 // pred_region
      // Predicated region
      $region25: #{multi_head_attention.4} parent=23 // pred_check
        %p128 = pneg %p29
      $region26: #{multi_head_attention.4} parent=23 // pred_check_branch
        %130 = sbr.rel (%p128) target = $region28
      $region27: #{multi_head_attention.4} parent=23 // pred_region
        %s131 = smul.u32 64, %s9
        %p132 = scmp.lt.s32.totalorder %s131, 127
        %s133 = scalar_select %p132, %s131, 127
        %s134 = smul.addr %s133, 8
        %s135 = scalar_lea.vmem %s0, %s134
        %s136 = smul.u32 64, %s9
      $region28: #{multi_head_attention.4} parent=23 // pred_fallthru
        _
    $region24: #{multi_head_attention.4} parent=5 // pred_fallthru
      _
    %p137 = scmp.le.s32.totalorder 1, %s9
    %p138 = scmp.lt.s32.totalorder %s9, 3
    %p139 = pnand %p137, %p138
    %p140 = pneg %p139
    // Predicated region
    $region29: #{multi_head_attention.4} parent=5 // pred_check
      _
    $region30: #{multi_head_attention.4} parent=5 // pred_check_branch
      %142 = sbr.rel (%p139) target = $region32
    $region31: #{multi_head_attention.4} parent=5 // pred_region
      %s143 = ssub.s32 %s9, 1
      %s144 = smul.u32 64, %s14
      %p145 = scmp.lt.s32.totalorder %s144, 127
      %s146 = scalar_select %p145, %s144, 127
      %s147 = smul.addr %s146, 8
      %s148 = scalar_lea.vmem %s0, %s147
      %p149 = pneg %p35
      %p150 = pneg %p32
      %p151 = pneg %p56
      %p152 = pneg %p53
      %p153 = pneg %p77
      %p154 = pneg %p74
      %p155 = pneg %p103
      %p156 = pneg %p100
      %s157 = smul.u32 64, %s14
      %p158 = scmp.lt.s32.totalorder %s157, 127
      %s159 = scalar_select %p158, %s157, 127
      %s160 = smul.addr %s159, 8
      %s161 = scalar_lea.vmem %s3, %s160
      %s162 = smul.u32 64, %s14
      %p163 = scmp.lt.s32.totalorder %s162, 127
      %s164 = scalar_select %p163, %s162, 127
      %s165 = smul.addr %s164, 8
      %s166 = scalar_lea.vmem %s0, %s165
      %s167 = smul.u32 64, %s14
      %s168 = smul.u32 64, %s14
      %p169 = scmp.lt.s32.totalorder %s168, 127
      %s170 = scalar_select %p169, %s168, 127
      %s171 = smul.addr %s170, 8
      %s172 = scalar_lea.vmem %s3, %s171
      %s173 = smul.u32 64, %s14
      %v174 = vld [vmem:[%s166] sm:$0xff]
      %v175 = vld [vmem:[%s166 + $0x8] sm:$0xff]
      %v176 = vld [vmem:[%s166 + $0x10] sm:$0xff]
      %v177 = vld [vmem:[%s166 + $0x18] sm:$0xff]
      %v178 = vld [vmem:[%s166 + $0x20] sm:$0xff]
      %v179 = vld [vmem:[%s166 + $0x28] sm:$0xff]
      %v180 = vld [vmem:[%s166 + $0x30] sm:$0xff]
      %v181 = vld [vmem:[%s166 + $0x38] sm:$0xff]
      %v182 = vld [vmem:[%s166 + $0x40] sm:$0xff]
      %v183 = vld [vmem:[%s166 + $0x48] sm:$0xff]
      %v184 = vld [vmem:[%s166 + $0x50] sm:$0xff]
      %v185 = vld [vmem:[%s166 + $0x58] sm:$0xff]
      %v186 = vld [vmem:[%s166 + $0x60] sm:$0xff]
      %v187 = vld [vmem:[%s166 + $0x68] sm:$0xff]
      %v188 = vld [vmem:[%s166 + $0x70] sm:$0xff]
      %v189 = vld [vmem:[%s166 + $0x78] sm:$0xff]
      %v190 = vld [vmem:[%s166 + $0x80] sm:$0xff]
      %v191 = vld [vmem:[%s166 + $0x88] sm:$0xff]
      %v192 = vld [vmem:[%s166 + $0x90] sm:$0xff]
      %v193 = vld [vmem:[%s166 + $0x98] sm:$0xff]
      %v194 = vld [vmem:[%s166 + $0xa0] sm:$0xff]
      %v195 = vld [vmem:[%s166 + $0xa8] sm:$0xff]
      %v196 = vld [vmem:[%s166 + $0xb0] sm:$0xff]
      %v197 = vld [vmem:[%s166 + $0xb8] sm:$0xff]
      %v198 = vld [vmem:[%s166 + $0xc0] sm:$0xff]
      %v199 = vld [vmem:[%s166 + $0xc8] sm:$0xff]
      %v200 = vld [vmem:[%s166 + $0xd0] sm:$0xff]
      %v201 = vld [vmem:[%s166 + $0xd8] sm:$0xff]
      %v202 = vld [vmem:[%s166 + $0xe0] sm:$0xff]
      %v203 = vld [vmem:[%s166 + $0xe8] sm:$0xff]
      %v204 = vld [vmem:[%s166 + $0xf0] sm:$0xff]
      %v205 = vld [vmem:[%s166 + $0xf8] sm:$0xff]
      %v206 = vld [vmem:[%s166 + $0x100] sm:$0xff]
      %v207 = vld [vmem:[%s166 + $0x108] sm:$0xff]
      %v208 = vld [vmem:[%s166 + $0x110] sm:$0xff]
      %v209 = vld [vmem:[%s166 + $0x118] sm:$0xff]
      %v210 = vld [vmem:[%s166 + $0x120] sm:$0xff]
      %v211 = vld [vmem:[%s166 + $0x128] sm:$0xff]
      %v212 = vld [vmem:[%s166 + $0x130] sm:$0xff]
      %v213 = vld [vmem:[%s166 + $0x138] sm:$0xff]
      %v214 = vld [vmem:[%s166 + $0x140] sm:$0xff]
      %v215 = vld [vmem:[%s166 + $0x148] sm:$0xff]
      %v216 = vld [vmem:[%s166 + $0x150] sm:$0xff]
      %v217 = vld [vmem:[%s166 + $0x158] sm:$0xff]
      %v218 = vld [vmem:[%s166 + $0x160] sm:$0xff]
      %v219 = vld [vmem:[%s166 + $0x168] sm:$0xff]
      %v220 = vld [vmem:[%s166 + $0x170] sm:$0xff]
      %v221 = vld [vmem:[%s166 + $0x178] sm:$0xff]
      %v222 = vld [vmem:[%s166 + $0x180] sm:$0xff]
      %v223 = vld [vmem:[%s166 + $0x188] sm:$0xff]
      %v224 = vld [vmem:[%s166 + $0x190] sm:$0xff]
      %v225 = vld [vmem:[%s166 + $0x198] sm:$0xff]
      %v226 = vld [vmem:[%s166 + $0x1a0] sm:$0xff]
      %v227 = vld [vmem:[%s166 + $0x1a8] sm:$0xff]
      %v228 = vld [vmem:[%s166 + $0x1b0] sm:$0xff]
      %v229 = vld [vmem:[%s166 + $0x1b8] sm:$0xff]
      %v230 = vld [vmem:[%s166 + $0x1c0] sm:$0xff]
      %v231 = vld [vmem:[%s166 + $0x1c8] sm:$0xff]
      %v232 = vld [vmem:[%s166 + $0x1d0] sm:$0xff]
      %v233 = vld [vmem:[%s166 + $0x1d8] sm:$0xff]
      %v234 = vld [vmem:[%s166 + $0x1e0] sm:$0xff]
      %v235 = vld [vmem:[%s166 + $0x1e8] sm:$0xff]
      %v236 = vld [vmem:[%s166 + $0x1f0] sm:$0xff]
      %v237 = vld [vmem:[%s166 + $0x1f8] sm:$0xff]
      %v238 = vld [vmem:[%s1] sm:$0xff]
      %v239 = vld [vmem:[%s1 + $0x8] sm:$0xff]
      %v240 = vld [vmem:[%s2] sm:$0x1]
      %v242 = vlaneseq
      %v243 = vshrl.u32 %v242, 7
      %v244 = vsub.s32 0, %v243
      %v245 = vrot.slane %v240, %v244
      %vm247 = vcmask 130048
      %v249 = vsel %vm247, %v174, 0
      %v252 = vsel %vm247, %v175, 0
      %v255 = vsel %vm247, %v176, 0
      %v258 = vsel %vm247, %v177, 0
      %v261 = vsel %vm247, %v178, 0
      %v264 = vsel %vm247, %v179, 0
      %v267 = vsel %vm247, %v180, 0
      %v270 = vsel %vm247, %v181, 0
      %v273 = vsel %vm247, %v182, 0
      %v276 = vsel %vm247, %v183, 0
      %v279 = vsel %vm247, %v184, 0
      %v282 = vsel %vm247, %v185, 0
      %v285 = vsel %vm247, %v186, 0
      %v288 = vsel %vm247, %v187, 0
      %v291 = vsel %vm247, %v188, 0
      %v294 = vsel %vm247, %v189, 0
      %v297 = vsel %vm247, %v190, 0
      %v300 = vsel %vm247, %v191, 0
      %v303 = vsel %vm247, %v192, 0
      %v306 = vsel %vm247, %v193, 0
      %v309 = vsel %vm247, %v194, 0
      %v312 = vsel %vm247, %v195, 0
      %v315 = vsel %vm247, %v196, 0
      %v318 = vsel %vm247, %v197, 0
      %v321 = vsel %vm247, %v198, 0
      %v324 = vsel %vm247, %v199, 0
      %v327 = vsel %vm247, %v200, 0
      %v330 = vsel %vm247, %v201, 0
      %v333 = vsel %vm247, %v202, 0
      %v336 = vsel %vm247, %v203, 0
      %v339 = vsel %vm247, %v204, 0
      %v342 = vsel %vm247, %v205, 0
      %v345 = vsel %vm247, %v206, 0
      %v348 = vsel %vm247, %v207, 0
      %v351 = vsel %vm247, %v208, 0
      %v354 = vsel %vm247, %v209, 0
      %v357 = vsel %vm247, %v210, 0
      %v360 = vsel %vm247, %v211, 0
      %v363 = vsel %vm247, %v212, 0
      %v366 = vsel %vm247, %v213, 0
      %v369 = vsel %vm247, %v214, 0
      %v372 = vsel %vm247, %v215, 0
      %v375 = vsel %vm247, %v216, 0
      %v378 = vsel %vm247, %v217, 0
      %v381 = vsel %vm247, %v218, 0
      %v384 = vsel %vm247, %v219, 0
      %v387 = vsel %vm247, %v220, 0
      %v390 = vsel %vm247, %v221, 0
      %v393 = vsel %vm247, %v222, 0
      %v396 = vsel %vm247, %v223, 0
      %v399 = vsel %vm247, %v224, 0
      %v402 = vsel %vm247, %v225, 0
      %v405 = vsel %vm247, %v226, 0
      %v408 = vsel %vm247, %v227, 0
      %v411 = vsel %vm247, %v228, 0
      %v414 = vsel %vm247, %v229, 0
      %v417 = vsel %vm247, %v230, 0
      %v420 = vsel %vm247, %v231, 0
      %v423 = vsel %vm247, %v232, 0
      %v426 = vsel %vm247, %v233, 0
      %v429 = vsel %vm247, %v234, 0
      %v432 = vsel %vm247, %v235, 0
      %v435 = vsel %vm247, %v236, 0
      %v438 = vsel %vm247, %v237, 0
      %440 = vmatprep.subr.mxu0 0.0
      %441 = vmatpush1.msra.mxu0 %v238
      %442 = vmatprep.subr.mxu0 0.0
      %443 = vmatpush1.msra.mxu0 %v239
      %444 = vmatprep.subr.mxu0 0.0
      %445 = vmatpush1.msra.mxu0 0.0
      %446 = vmatprep.subr.mxu0 0.0
      %447 = vmatpush1.msra.mxu0 0.0
      %448 = vmatprep.subr.mxu0 0.0
      %449 = vmatpush1.msra.mxu0 0.0
      %450 = vmatprep.subr.mxu0 0.0
      %451 = vmatpush1.msra.mxu0 0.0
      %452 = vmatprep.subr.mxu0 0.0
      %453 = vmatpush1.msra.mxu0 0.0
      %454 = vmatprep.subr.mxu0 0.0
      %455 = vmatpush1.msra.mxu0 0.0
      %456 = vmatprep.subr.mxu0 0.0
      %457 = vmatpush1.msra.mxu0 0.0
      %458 = vmatprep.subr.mxu0 0.0
      %459 = vmatpush1.msra.mxu0 0.0
      %460 = vmatprep.subr.mxu0 0.0
      %461 = vmatpush1.msra.mxu0 0.0
      %462 = vmatprep.subr.mxu0 0.0
      %463 = vmatpush1.msra.mxu0 0.0
      %464 = vmatprep.subr.mxu0 0.0
      %465 = vmatpush1.msra.mxu0 0.0
      %466 = vmatprep.subr.mxu0 0.0
      %467 = vmatpush1.msra.mxu0 0.0
      %468 = vmatprep.subr.mxu0 0.0
      %469 = vmatpush1.msra.mxu0 0.0
      %470 = vmatprep.subr.mxu0 0.0
      %471 = vmatpush1.msra.mxu0 0.0
      %472 = vmatprep.subr.mxu0 0.0
      %473 = vmatpush1.msra.mxu0 0.0
      %474 = vmatprep.subr.mxu0 0.0
      %475 = vmatpush1.msra.mxu0 0.0
      %476 = vmatprep.subr.mxu0 0.0
      %477 = vmatpush1.msra.mxu0 0.0
      %478 = vmatprep.subr.mxu0 0.0
      %479 = vmatpush1.msra.mxu0 0.0
      %480 = vmatprep.subr.mxu0 0.0
      %481 = vmatpush1.msra.mxu0 0.0
      %482 = vmatprep.subr.mxu0 0.0
      %483 = vmatpush1.msra.mxu0 0.0
      %484 = vmatprep.subr.mxu0 0.0
      %485 = vmatpush1.msra.mxu0 0.0
      %486 = vmatprep.subr.mxu0 0.0
      %487 = vmatpush1.msra.mxu0 0.0
      %488 = vmatprep.subr.mxu0 0.0
      %489 = vmatpush1.msra.mxu0 0.0
      %490 = vmatprep.subr.mxu0 0.0
      %491 = vmatpush1.msra.mxu0 0.0
      %492 = vmatprep.subr.mxu0 0.0
      %493 = vmatpush1.msra.mxu0 0.0
      %494 = vmatprep.subr.mxu0 0.0
      %495 = vmatpush1.msra.mxu0 0.0
      %496 = vmatprep.subr.mxu0 0.0
      %497 = vmatpush1.msra.mxu0 0.0
      %498 = vmatprep.subr.mxu0 0.0
      %499 = vmatpush1.msra.mxu0 0.0
      %500 = vmatprep.subr.mxu0 0.0
      %501 = vmatpush1.msra.mxu0 0.0
      %502 = vmatprep.subr.mxu0 0.0
      %503 = vmatpush1.msra.mxu0 0.0
      %504 = vmatprep.mubr.f32.mxu0 0.0
      %505 = vmatmul.mubr.f32.gmra.mrb[0].mxu0 %v249
      %v506 = vpop.f32.mrb[0].mxu0
      %v507 = vadd.f32 %v245, %v506
      %v508 = vpop.f32.mrb[0].mxu0
      %509 = vmatprep.mubr.f32.mxu0 0.0
      %510 = vmatmul.mubr.f32.gmra.mrb[0].mxu0 %v252
      %v511 = vpop.f32.mrb[0].mxu0
      %v512 = vadd.f32 %v245, %v511
      %v513 = vpop.f32.mrb[0].mxu0
      %514 = vmatprep.mubr.f32.mxu0 0.0
      %515 = vmatmul.mubr.f32.gmra.mrb[0].mxu0 %v255
      %v516 = vpop.f32.mrb[0].mxu0
      %v517 = vadd.f32 %v245, %v516
      %v518 = vpop.f32.mrb[0].mxu0
      %519 = vmatprep.mubr.f32.mxu0 0.0
      %520 = vmatmul.mubr.f32.gmra.mrb[0].mxu0 %v258
      %v521 = vpop.f32.mrb[0].mxu0
      %v522 = vadd.f32 %v245, %v521
      %v523 = vpop.f32.mrb[0].mxu0
      %524 = vmatprep.mubr.f32.mxu0 0.0
      %525 = vmatmul.mubr.f32.gmra.mrb[0].mxu0 %v261
      %v526 = vpop.f32.mrb[0].mxu0
      %v527 = vadd.f32 %v245, %v526
      %v528 = vpop.f32.mrb[0].mxu0
      %529 = vmatprep.mubr.f32.mxu0 0.0
      %530 = vmatmul.mubr.f32.gmra.mrb[0].mxu0 %v264
      %v531 = vpop.f32.mrb[0].mxu0
      %v532 = vadd.f32 %v245, %v531
      %v533 = vpop.f32.mrb[0].mxu0
      %534 = vmatprep.mubr.f32.mxu0 0.0
      %535 = vmatmul.mubr.f32.gmra.mrb[0].mxu0 %v267
      %v536 = vpop.f32.mrb[0].mxu0
      %v537 = vadd.f32 %v245, %v536
      %v538 = vpop.f32.mrb[0].mxu0
      %539 = vmatprep.mubr.f32.mxu0 0.0
      %540 = vmatmul.mubr.f32.gmra.mrb[0].mxu0 %v270
      %v541 = vpop.f32.mrb[0].mxu0
      %v542 = vadd.f32 %v245, %v541
      %v543 = vpop.f32.mrb[0].mxu0
      %544 = vmatprep.mubr.f32.mxu0 0.0
      %545 = vmatmul.mubr.f32.gmra.mrb[0].mxu0 %v273
      %v546 = vpop.f32.mrb[0].mxu0
      %v547 = vadd.f32 %v245, %v546
      %v548 = vpop.f32.mrb[0].mxu0
      %549 = vmatprep.mubr.f32.mxu0 0.0
      %550 = vmatmul.mubr.f32.gmra.mrb[0].mxu0 %v276
      %v551 = vpop.f32.mrb[0].mxu0
      %v552 = vadd.f32 %v245, %v551
      %v553 = vpop.f32.mrb[0].mxu0
      %554 = vmatprep.mubr.f32.mxu0 0.0
      %555 = vmatmul.mubr.f32.gmra.mrb[0].mxu0 %v279
      %v556 = vpop.f32.mrb[0].mxu0
      %v557 = vadd.f32 %v245, %v556
      %v558 = vpop.f32.mrb[0].mxu0
      %559 = vmatprep.mubr.f32.mxu0 0.0
      %560 = vmatmul.mubr.f32.gmra.mrb[0].mxu0 %v282
      %v561 = vpop.f32.mrb[0].mxu0
      %v562 = vadd.f32 %v245, %v561
      %v563 = vpop.f32.mrb[0].mxu0
      %564 = vmatprep.mubr.f32.mxu0 0.0
      %565 = vmatmul.mubr.f32.gmra.mrb[0].mxu0 %v285
      %v566 = vpop.f32.mrb[0].mxu0
      %v567 = vadd.f32 %v245, %v566
      %v568 = vpop.f32.mrb[0].mxu0
      %569 = vmatprep.mubr.f32.mxu0 0.0
      %570 = vmatmul.mubr.f32.gmra.mrb[0].mxu0 %v288
      %v571 = vpop.f32.mrb[0].mxu0
      %v572 = vadd.f32 %v245, %v571
      %v573 = vpop.f32.mrb[0].mxu0
      %574 = vmatprep.mubr.f32.mxu0 0.0
      %575 = vmatmul.mubr.f32.gmra.mrb[0].mxu0 %v291
      %v576 = vpop.f32.mrb[0].mxu0
      %v577 = vadd.f32 %v245, %v576
      %v578 = vpop.f32.mrb[0].mxu0
      %579 = vmatprep.mubr.f32.mxu0 0.0
      %580 = vmatmul.mubr.f32.gmra.mrb[0].mxu0 %v294
      %v581 = vpop.f32.mrb[0].mxu0
      %v582 = vadd.f32 %v245, %v581
      %v583 = vpop.f32.mrb[0].mxu0
      %584 = vmatprep.mubr.f32.mxu0 0.0
      %585 = vmatmul.mubr.f32.gmra.mrb[0].mxu0 %v297
      %v586 = vpop.f32.mrb[0].mxu0
      %v587 = vadd.f32 %v245, %v586
      %v588 = vpop.f32.mrb[0].mxu0
      %589 = vmatprep.mubr.f32.mxu0 0.0
      %590 = vmatmul.mubr.f32.gmra.mrb[0].mxu0 %v300
      %v591 = vpop.f32.mrb[0].mxu0
      %v592 = vadd.f32 %v245, %v591
      %v593 = vpop.f32.mrb[0].mxu0
      %594 = vmatprep.mubr.f32.mxu0 0.0
      %595 = vmatmul.mubr.f32.gmra.mrb[0].mxu0 %v303
      %v596 = vpop.f32.mrb[0].mxu0
      %v597 = vadd.f32 %v245, %v596
      %v598 = vpop.f32.mrb[0].mxu0
      %599 = vmatprep.mubr.f32.mxu0 0.0
      %600 = vmatmul.mubr.f32.gmra.mrb[0].mxu0 %v306
      %v601 = vpop.f32.mrb[0].mxu0
      %v602 = vadd.f32 %v245, %v601
      %v603 = vpop.f32.mrb[0].mxu0
      %604 = vmatprep.mubr.f32.mxu0 0.0
      %605 = vmatmul.mubr.f32.gmra.mrb[0].mxu0 %v309
      %v606 = vpop.f32.mrb[0].mxu0
      %v607 = vadd.f32 %v245, %v606
      %v608 = vpop.f32.mrb[0].mxu0
      %609 = vmatprep.mubr.f32.mxu0 0.0
      %610 = vmatmul.mubr.f32.gmra.mrb[0].mxu0 %v312
      %v611 = vpop.f32.mrb[0].mxu0
      %v612 = vadd.f32 %v245, %v611
      %v613 = vpop.f32.mrb[0].mxu0
      %614 = vmatprep.mubr.f32.mxu0 0.0
      %615 = vmatmul.mubr.f32.gmra.mrb[0].mxu0 %v315
      %v616 = vpop.f32.mrb[0].mxu0
      %v617 = vadd.f32 %v245, %v616
      %v618 = vpop.f32.mrb[0].mxu0
      %619 = vmatprep.mubr.f32.mxu0 0.0
      %620 = vmatmul.mubr.f32.gmra.mrb[0].mxu0 %v318
      %v621 = vpop.f32.mrb[0].mxu0
      %v622 = vadd.f32 %v245, %v621
      %v623 = vpop.f32.mrb[0].mxu0
      %624 = vmatprep.mubr.f32.mxu0 0.0
      %625 = vmatmul.mubr.f32.gmra.mrb[0].mxu0 %v321
      %v626 = vpop.f32.mrb[0].mxu0
      %v627 = vadd.f32 %v245, %v626
      %v628 = vpop.f32.mrb[0].mxu0
      %629 = vmatprep.mubr.f32.mxu0 0.0
      %630 = vmatmul.mubr.f32.gmra.mrb[0].mxu0 %v324
      %v631 = vpop.f32.mrb[0].mxu0
      %v632 = vadd.f32 %v245, %v631
      %v633 = vpop.f32.mrb[0].mxu0
      %634 = vmatprep.mubr.f32.mxu0 0.0
      %635 = vmatmul.mubr.f32.gmra.mrb[0].mxu0 %v327
      %v636 = vpop.f32.mrb[0].mxu0
      %v637 = vadd.f32 %v245, %v636
      %v638 = vpop.f32.mrb[0].mxu0
      %639 = vmatprep.mubr.f32.mxu0 0.0
      %640 = vmatmul.mubr.f32.gmra.mrb[0].mxu0 %v330
      %v641 = vpop.f32.mrb[0].mxu0
      %v642 = vadd.f32 %v245, %v641
      %v643 = vpop.f32.mrb[0].mxu0
      %644 = vmatprep.mubr.f32.mxu0 0.0
      %645 = vmatmul.mubr.f32.gmra.mrb[0].mxu0 %v333
      %v646 = vpop.f32.mrb[0].mxu0
      %v647 = vadd.f32 %v245, %v646
      %v648 = vpop.f32.mrb[0].mxu0
      %649 = vmatprep.mubr.f32.mxu0 0.0
      %650 = vmatmul.mubr.f32.gmra.mrb[0].mxu0 %v336
      %v651 = vpop.f32.mrb[0].mxu0
      %v652 = vadd.f32 %v245, %v651
      %v653 = vpop.f32.mrb[0].mxu0
      %654 = vmatprep.mubr.f32.mxu0 0.0
      %655 = vmatmul.mubr.f32.gmra.mrb[0].mxu0 %v339
      %v656 = vpop.f32.mrb[0].mxu0
      %v657 = vadd.f32 %v245, %v656
      %v658 = vpop.f32.mrb[0].mxu0
      %659 = vmatprep.mubr.f32.mxu0 0.0
      %660 = vmatmul.mubr.f32.gmra.mrb[0].mxu0 %v342
      %v661 = vpop.f32.mrb[0].mxu0
      %v662 = vadd.f32 %v245, %v661
      %v663 = vpop.f32.mrb[0].mxu0
      %664 = vmatprep.mubr.f32.mxu0 0.0
      %665 = vmatmul.mubr.f32.gmra.mrb[0].mxu0 %v345
      %v666 = vpop.f32.mrb[0].mxu0
      %v667 = vadd.f32 %v245, %v666
      %v668 = vpop.f32.mrb[0].mxu0
      %669 = vmatprep.mubr.f32.mxu0 0.0
      %670 = vmatmul.mubr.f32.gmra.mrb[0].mxu0 %v348
      %v671 = vpop.f32.mrb[0].mxu0
      %v672 = vadd.f32 %v245, %v671
      %v673 = vpop.f32.mrb[0].mxu0
      %674 = vmatprep.mubr.f32.mxu0 0.0
      %675 = vmatmul.mubr.f32.gmra.mrb[0].mxu0 %v351
      %v676 = vpop.f32.mrb[0].mxu0
      %v677 = vadd.f32 %v245, %v676
      %v678 = vpop.f32.mrb[0].mxu0
      %679 = vmatprep.mubr.f32.mxu0 0.0
      %680 = vmatmul.mubr.f32.gmra.mrb[0].mxu0 %v354
      %v681 = vpop.f32.mrb[0].mxu0
      %v682 = vadd.f32 %v245, %v681
      %v683 = vpop.f32.mrb[0].mxu0
      %684 = vmatprep.mubr.f32.mxu0 0.0
      %685 = vmatmul.mubr.f32.gmra.mrb[0].mxu0 %v357
      %v686 = vpop.f32.mrb[0].mxu0
      %v687 = vadd.f32 %v245, %v686
      %v688 = vpop.f32.mrb[0].mxu0
      %689 = vmatprep.mubr.f32.mxu0 0.0
      %690 = vmatmul.mubr.f32.gmra.mrb[0].mxu0 %v360
      %v691 = vpop.f32.mrb[0].mxu0
      %v692 = vadd.f32 %v245, %v691
      %v693 = vpop.f32.mrb[0].mxu0
      %694 = vmatprep.mubr.f32.mxu0 0.0
      %695 = vmatmul.mubr.f32.gmra.mrb[0].mxu0 %v363
      %v696 = vpop.f32.mrb[0].mxu0
      %v697 = vadd.f32 %v245, %v696
      %v698 = vpop.f32.mrb[0].mxu0
      %699 = vmatprep.mubr.f32.mxu0 0.0
      %700 = vmatmul.mubr.f32.gmra.mrb[0].mxu0 %v366
      %v701 = vpop.f32.mrb[0].mxu0
      %v702 = vadd.f32 %v245, %v701
      %v703 = vpop.f32.mrb[0].mxu0
      %704 = vmatprep.mubr.f32.mxu0 0.0
      %705 = vmatmul.mubr.f32.gmra.mrb[0].mxu0 %v369
      %v706 = vpop.f32.mrb[0].mxu0
      %v707 = vadd.f32 %v245, %v706
      %v708 = vpop.f32.mrb[0].mxu0
      %709 = vmatprep.mubr.f32.mxu0 0.0
      %710 = vmatmul.mubr.f32.gmra.mrb[0].mxu0 %v372
      %v711 = vpop.f32.mrb[0].mxu0
      %v712 = vadd.f32 %v245, %v711
      %v713 = vpop.f32.mrb[0].mxu0
      %714 = vmatprep.mubr.f32.mxu0 0.0
      %715 = vmatmul.mubr.f32.gmra.mrb[0].mxu0 %v375
      %v716 = vpop.f32.mrb[0].mxu0
      %v717 = vadd.f32 %v245, %v716
      %v718 = vpop.f32.mrb[0].mxu0
      %719 = vmatprep.mubr.f32.mxu0 0.0
      %720 = vmatmul.mubr.f32.gmra.mrb[0].mxu0 %v378
      %v721 = vpop.f32.mrb[0].mxu0
      %v722 = vadd.f32 %v245, %v721
      %v723 = vpop.f32.mrb[0].mxu0
      %724 = vmatprep.mubr.f32.mxu0 0.0
      %725 = vmatmul.mubr.f32.gmra.mrb[0].mxu0 %v381
      %v726 = vpop.f32.mrb[0].mxu0
      %v727 = vadd.f32 %v245, %v726
      %v728 = vpop.f32.mrb[0].mxu0
      %729 = vmatprep.mubr.f32.mxu0 0.0
      %730 = vmatmul.mubr.f32.gmra.mrb[0].mxu0 %v384
      %v731 = vpop.f32.mrb[0].mxu0
      %v732 = vadd.f32 %v245, %v731
      %v733 = vpop.f32.mrb[0].mxu0
      %734 = vmatprep.mubr.f32.mxu0 0.0
      %735 = vmatmul.mubr.f32.gmra.mrb[0].mxu0 %v387
      %v736 = vpop.f32.mrb[0].mxu0
      %v737 = vadd.f32 %v245, %v736
      %v738 = vpop.f32.mrb[0].mxu0
      %739 = vmatprep.mubr.f32.mxu0 0.0
      %740 = vmatmul.mubr.f32.gmra.mrb[0].mxu0 %v390
      %v741 = vpop.f32.mrb[0].mxu0
      %v742 = vadd.f32 %v245, %v741
      %v743 = vpop.f32.mrb[0].mxu0
      %744 = vmatprep.mubr.f32.mxu0 0.0
      %745 = vmatmul.mubr.f32.gmra.mrb[0].mxu0 %v393
      %v746 = vpop.f32.mrb[0].mxu0
      %v747 = vadd.f32 %v245, %v746
      %v748 = vpop.f32.mrb[0].mxu0
      %749 = vmatprep.mubr.f32.mxu0 0.0
      %750 = vmatmul.mubr.f32.gmra.mrb[0].mxu0 %v396
      %v751 = vpop.f32.mrb[0].mxu0
      %v752 = vadd.f32 %v245, %v751
      %v753 = vpop.f32.mrb[0].mxu0
      %754 = vmatprep.mubr.f32.mxu0 0.0
      %755 = vmatmul.mubr.f32.gmra.mrb[0].mxu0 %v399
      %v756 = vpop.f32.mrb[0].mxu0
      %v757 = vadd.f32 %v245, %v756
      %v758 = vpop.f32.mrb[0].mxu0
      %759 = vmatprep.mubr.f32.mxu0 0.0
      %760 = vmatmul.mubr.f32.gmra.mrb[0].mxu0 %v402
      %v761 = vpop.f32.mrb[0].mxu0
      %v762 = vadd.f32 %v245, %v761
      %v763 = vpop.f32.mrb[0].mxu0
      %764 = vmatprep.mubr.f32.mxu0 0.0
      %765 = vmatmul.mubr.f32.gmra.mrb[0].mxu0 %v405
      %v766 = vpop.f32.mrb[0].mxu0
      %v767 = vadd.f32 %v245, %v766
      %v768 = vpop.f32.mrb[0].mxu0
      %769 = vmatprep.mubr.f32.mxu0 0.0
      %770 = vmatmul.mubr.f32.gmra.mrb[0].mxu0 %v408
      %v771 = vpop.f32.mrb[0].mxu0
      %v772 = vadd.f32 %v245, %v771
      %v773 = vpop.f32.mrb[0].mxu0
      %774 = vmatprep.mubr.f32.mxu0 0.0
      %775 = vmatmul.mubr.f32.gmra.mrb[0].mxu0 %v411
      %v776 = vpop.f32.mrb[0].mxu0
      %v777 = vadd.f32 %v245, %v776
      %v778 = vpop.f32.mrb[0].mxu0
      %779 = vmatprep.mubr.f32.mxu0 0.0
      %780 = vmatmul.mubr.f32.gmra.mrb[0].mxu0 %v414
      %v781 = vpop.f32.mrb[0].mxu0
      %v782 = vadd.f32 %v245, %v781
      %v783 = vpop.f32.mrb[0].mxu0
      %784 = vmatprep.mubr.f32.mxu0 0.0
      %785 = vmatmul.mubr.f32.gmra.mrb[0].mxu0 %v417
      %v786 = vpop.f32.mrb[0].mxu0
      %v787 = vadd.f32 %v245, %v786
      %v788 = vpop.f32.mrb[0].mxu0
      %789 = vmatprep.mubr.f32.mxu0 0.0
      %790 = vmatmul.mubr.f32.gmra.mrb[0].mxu0 %v420
      %v791 = vpop.f32.mrb[0].mxu0
      %v792 = vadd.f32 %v245, %v791
      %v793 = vpop.f32.mrb[0].mxu0
      %794 = vmatprep.mubr.f32.mxu0 0.0
      %795 = vmatmul.mubr.f32.gmra.mrb[0].mxu0 %v423
      %v796 = vpop.f32.mrb[0].mxu0
      %v797 = vadd.f32 %v245, %v796
      %v798 = vpop.f32.mrb[0].mxu0
      %799 = vmatprep.mubr.f32.mxu0 0.0
      %800 = vmatmul.mubr.f32.gmra.mrb[0].mxu0 %v426
      %v801 = vpop.f32.mrb[0].mxu0
      %v802 = vadd.f32 %v245, %v801
      %v803 = vpop.f32.mrb[0].mxu0
      %804 = vmatprep.mubr.f32.mxu0 0.0
      %805 = vmatmul.mubr.f32.gmra.mrb[0].mxu0 %v429
      %v806 = vpop.f32.mrb[0].mxu0
      %v807 = vadd.f32 %v245, %v806
      %v808 = vpop.f32.mrb[0].mxu0
      %809 = vmatprep.mubr.f32.mxu0 0.0
      %810 = vmatmul.mubr.f32.gmra.mrb[0].mxu0 %v432
      %v811 = vpop.f32.mrb[0].mxu0
      %v812 = vadd.f32 %v245, %v811
      %v813 = vpop.f32.mrb[0].mxu0
      %814 = vmatprep.mubr.f32.mxu0 0.0
      %815 = vmatmul.mubr.f32.gmra.mrb[0].mxu0 %v435
      %v816 = vpop.f32.mrb[0].mxu0
      %v817 = vadd.f32 %v245, %v816
      %v818 = vpop.f32.mrb[0].mxu0
      %819 = vmatprep.mubr.f32.mxu0 0.0
      %820 = vmatmul.mubr.f32.gmra.mrb[0].mxu0 %v438
      %v821 = vpop.f32.mrb[0].mxu0
      %v822 = vadd.f32 %v245, %v821
      %v823 = vpop.f32.mrb[0].mxu0
      %824 = vdwg.mxu0
      %vm825 = vcmask 523264
      %826 = vst.msk [vmem:[%s172] sm:$0xff] %vm825, %v507
      %827 = vst.msk [vmem:[%s172 + $0x8] sm:$0xff] %vm825, %v512
      %828 = vst.msk [vmem:[%s172 + $0x10] sm:$0xff] %vm825, %v517
      %829 = vst.msk [vmem:[%s172 + $0x18] sm:$0xff] %vm825, %v522
      %830 = vst.msk [vmem:[%s172 + $0x20] sm:$0xff] %vm825, %v527
      %831 = vst.msk [vmem:[%s172 + $0x28] sm:$0xff] %vm825, %v532
      %832 = vst.msk [vmem:[%s172 + $0x30] sm:$0xff] %vm825, %v537
      %833 = vst.msk [vmem:[%s172 + $0x38] sm:$0xff] %vm825, %v542
      %834 = vst.msk [vmem:[%s172 + $0x40] sm:$0xff] %vm825, %v547
      %835 = vst.msk [vmem:[%s172 + $0x48] sm:$0xff] %vm825, %v552
      %836 = vst.msk [vmem:[%s172 + $0x50] sm:$0xff] %vm825, %v557
      %837 = vst.msk [vmem:[%s172 + $0x58] sm:$0xff] %vm825, %v562
      %838 = vst.msk [vmem:[%s172 + $0x60] sm:$0xff] %vm825, %v567
      %839 = vst.msk [vmem:[%s172 + $0x68] sm:$0xff] %vm825, %v572
      %840 = vst.msk [vmem:[%s172 + $0x70] sm:$0xff] %vm825, %v577
      %841 = vst.msk [vmem:[%s172 + $0x78] sm:$0xff] %vm825, %v582
      %842 = vst.msk [vmem:[%s172 + $0x80] sm:$0xff] %vm825, %v587
      %843 = vst.msk [vmem:[%s172 + $0x88] sm:$0xff] %vm825, %v592
      %844 = vst.msk [vmem:[%s172 + $0x90] sm:$0xff] %vm825, %v597
      %845 = vst.msk [vmem:[%s172 + $0x98] sm:$0xff] %vm825, %v602
      %846 = vst.msk [vmem:[%s172 + $0xa0] sm:$0xff] %vm825, %v607
      %847 = vst.msk [vmem:[%s172 + $0xa8] sm:$0xff] %vm825, %v612
      %848 = vst.msk [vmem:[%s172 + $0xb0] sm:$0xff] %vm825, %v617
      %849 = vst.msk [vmem:[%s172 + $0xb8] sm:$0xff] %vm825, %v622
      %850 = vst.msk [vmem:[%s172 + $0xc0] sm:$0xff] %vm825, %v627
      %851 = vst.msk [vmem:[%s172 + $0xc8] sm:$0xff] %vm825, %v632
      %852 = vst.msk [vmem:[%s172 + $0xd0] sm:$0xff] %vm825, %v637
      %853 = vst.msk [vmem:[%s172 + $0xd8] sm:$0xff] %vm825, %v642
      %854 = vst.msk [vmem:[%s172 + $0xe0] sm:$0xff] %vm825, %v647
      %855 = vst.msk [vmem:[%s172 + $0xe8] sm:$0xff] %vm825, %v652
      %856 = vst.msk [vmem:[%s172 + $0xf0] sm:$0xff] %vm825, %v657
      %857 = vst.msk [vmem:[%s172 + $0xf8] sm:$0xff] %vm825, %v662
      %858 = vst.msk [vmem:[%s172 + $0x100] sm:$0xff] %vm825, %v667
      %859 = vst.msk [vmem:[%s172 + $0x108] sm:$0xff] %vm825, %v672
      %860 = vst.msk [vmem:[%s172 + $0x110] sm:$0xff] %vm825, %v677
      %861 = vst.msk [vmem:[%s172 + $0x118] sm:$0xff] %vm825, %v682
      %862 = vst.msk [vmem:[%s172 + $0x120] sm:$0xff] %vm825, %v687
      %863 = vst.msk [vmem:[%s172 + $0x128] sm:$0xff] %vm825, %v692
      %864 = vst.msk [vmem:[%s172 + $0x130] sm:$0xff] %vm825, %v697
      %865 = vst.msk [vmem:[%s172 + $0x138] sm:$0xff] %vm825, %v702
      %866 = vst.msk [vmem:[%s172 + $0x140] sm:$0xff] %vm825, %v707
      %867 = vst.msk [vmem:[%s172 + $0x148] sm:$0xff] %vm825, %v712
      %868 = vst.msk [vmem:[%s172 + $0x150] sm:$0xff] %vm825, %v717
      %869 = vst.msk [vmem:[%s172 + $0x158] sm:$0xff] %vm825, %v722
      %870 = vst.msk [vmem:[%s172 + $0x160] sm:$0xff] %vm825, %v727
      %871 = vst.msk [vmem:[%s172 + $0x168] sm:$0xff] %vm825, %v732
      %872 = vst.msk [vmem:[%s172 + $0x170] sm:$0xff] %vm825, %v737
      %873 = vst.msk [vmem:[%s172 + $0x178] sm:$0xff] %vm825, %v742
      %874 = vst.msk [vmem:[%s172 + $0x180] sm:$0xff] %vm825, %v747
      %875 = vst.msk [vmem:[%s172 + $0x188] sm:$0xff] %vm825, %v752
      %876 = vst.msk [vmem:[%s172 + $0x190] sm:$0xff] %vm825, %v757
      %877 = vst.msk [vmem:[%s172 + $0x198] sm:$0xff] %vm825, %v762
      %878 = vst.msk [vmem:[%s172 + $0x1a0] sm:$0xff] %vm825, %v767
      %879 = vst.msk [vmem:[%s172 + $0x1a8] sm:$0xff] %vm825, %v772
      %880 = vst.msk [vmem:[%s172 + $0x1b0] sm:$0xff] %vm825, %v777
      %881 = vst.msk [vmem:[%s172 + $0x1b8] sm:$0xff] %vm825, %v782
      %882 = vst.msk [vmem:[%s172 + $0x1c0] sm:$0xff] %vm825, %v787
      %883 = vst.msk [vmem:[%s172 + $0x1c8] sm:$0xff] %vm825, %v792
      %884 = vst.msk [vmem:[%s172 + $0x1d0] sm:$0xff] %vm825, %v797
      %885 = vst.msk [vmem:[%s172 + $0x1d8] sm:$0xff] %vm825, %v802
      %886 = vst.msk [vmem:[%s172 + $0x1e0] sm:$0xff] %vm825, %v807
      %887 = vst.msk [vmem:[%s172 + $0x1e8] sm:$0xff] %vm825, %v812
      %888 = vst.msk [vmem:[%s172 + $0x1f0] sm:$0xff] %vm825, %v817
      %889 = vst.msk [vmem:[%s172 + $0x1f8] sm:$0xff] %vm825, %v822
      %s890 = smul.u32 64, %s14
      %p891 = scmp.lt.s32.totalorder %s890, 127
      %s892 = scalar_select %p891, %s890, 127
      %s893 = smul.addr %s892, 8
      %s894 = scalar_lea.vmem %s3, %s893
      // Predicated region
      $region33: #{multi_head_attention.4} parent=31 // pred_check
        %p895 = pneg %p100
      $region34: #{multi_head_attention.4} parent=31 // pred_check_branch
        %897 = sbr.rel (%p895) target = $region36
      $region35: #{multi_head_attention.4} parent=31 // pred_region
        %s898 = smul.u32 64, %s14
      $region36: #{multi_head_attention.4} parent=31 // pred_fallthru
        _
    $region32: #{multi_head_attention.4} parent=5 // pred_fallthru
      _
    %p899 = scmp.le.s32.totalorder 2, %s9
    // Predicated region
    $region37: #{multi_head_attention.4} parent=5 // pred_check
      %p900 = pneg %p899
    $region38: #{multi_head_attention.4} parent=5 // pred_check_branch
      %902 = sbr.rel (%p900) target = $region40
    $region39: #{multi_head_attention.4} parent=5 // pred_region
      %s903 = ssub.s32 %s9, 2
      // Predicated region
      $region41: #{multi_head_attention.4} parent=39 // pred_check
        %p904 = pneg %p106
      $region42: #{multi_head_attention.4} parent=39 // pred_check_branch
        %906 = sbr.rel (%p904) target = $region44
      $region43: #{multi_head_attention.4} parent=39 // pred_region
        %s907 = smul.u32 64, %s15
        %p908 = scmp.lt.s32.totalorder %s907, 127
        %s909 = scalar_select %p908, %s907, 127
        %s910 = smul.addr %s909, 8
        %s911 = scalar_lea.vmem %s3, %s910
      $region44: #{multi_head_attention.4} parent=39 // pred_fallthru
        _
    $region40: #{multi_head_attention.4} parent=5 // pred_fallthru
      _
  $region6: #{multi_head_attention.4} parent=0 // loop_footer
    %s13 = sadd.s32 1, %s9
  $region7: #{multi_head_attention.4} parent=0 // loop_footer_branch
    %8 = sbr.rel target = $region3
  $region8: #{multi_head_attention.4} parent=0 // loop_exit
    _

// kernel: multi_head_attention.5
$region0: #{multi_head_attention.5}
  #allocation0 [shape = 'u32[]', space=smem, size = 0x4, offset = 0x4, fixed_abs, tag = 'smem constant byte address 0x4 - core index']
  #allocation1 [shape = 'u32[144,128]{1,0:T(1,128)}', space=vmem, size = 0x12000, scoped, tag = 'internal scratch']
  %s0 = inlined_call_operand.vmem [shape: s32[1,1024], index: 0, kind: input, shape index: {}]
  %s1 = inlined_call_operand.vmem [shape: s32[1,1024], index: 1, kind: input, shape index: {}]
  %s2 = inlined_call_operand.vmem [shape: f32[1,1024], index: 2, kind: input, shape index: {}]
  %s3 = inlined_call_operand.vmem [shape: f32[128,64], index: 3, kind: input, shape index: {}]
  %s4 = inlined_call_operand.vmem [shape: f32[128,64], index: 4, kind: input, shape index: {}]
  %s5 = inlined_call_operand.vmem [shape: f32[128,64], index: 5, kind: input, shape index: {}]
  %s6 = inlined_call_operand.vmem [shape: f32[1024,64], index: 6, kind: input, shape index: {}]
  %s7 = inlined_call_operand.vmem [shape: f32[64,8], index: 7, kind: input, shape index: {}]
  %s8 = inlined_call_operand.vmem [shape: f32[8,64], index: 8, kind: input, shape index: {}]
  %s9 = inlined_call_operand.vmem [shape: f32[128,128], index: 9, kind: output, shape index: {0}]
  %s10 = inlined_call_operand.vmem [shape: f32[8,1024], index: 10, kind: output, shape index: {1}]
  %11 = xla_tuple %s9, %s10
  %s12 = sld [smem:[#allocation0]]
  $region81: #{multi_head_attention.5} parent=0
    _
  %s14 = ssub.s32 1, %s12
  %s15 = scalar_select 0, %s14, %s12
  loop: start=0, step=1, limit=4
  $region2: #{multi_head_attention.5} parent=0 // loop_pre_header
    _
  $region3: #{multi_head_attention.5} parent=0 // loop_header
    %s17 = sphi 0, %s21
    %p18 = scmp.ge.s32.totalorder %s17, 4
    %s27 = sphi 0, %s29
    %s30 = sphi 0, %s27
    %s31 = sphi 0, %s30
    %s47 = sphi 0, %s31
    %s53 = sphi 0, %s55
    %s56 = sphi 0, %s53
    %s57 = sphi 0, %s56
    %s73 = sphi 0, %s57
    %s79 = sphi 0, %s81
    %s82 = sphi 0, %s79
    %s83 = sphi 0, %s82
    %s99 = sphi 0, %s83
    %s103 = sphi 0, %s103
    %s105 = sphi 0, %s103
    %s106 = sphi 0, %s105
    %s120 = sphi 0, %s106
    %s124 = sphi 0, %s124
    %s126 = sphi 0, %s124
    %s127 = sphi 0, %s126
    %s141 = sphi 0, %s127
    %s145 = sphi 0, %s145
    %s147 = sphi 0, %s145
    %s148 = sphi 0, %s147
    %s162 = sphi 0, %s148
    %s168 = sphi 0, %s170
    %s171 = sphi 0, %s168
    %s172 = sphi 0, %s171
    %s188 = sphi 0, %s172
    %s192 = sphi 0, %s192
    %s194 = sphi 0, %s192
    %s195 = sphi 0, %s194
    %s209 = sphi 0, %s195
    %s213 = sphi 0, %s213
    %s215 = sphi 0, %s213
    %s216 = sphi 0, %s215
    %s230 = sphi 0, %s216
    %s234 = sphi 0, %s234
    %s236 = sphi 0, %s234
    %s237 = sphi 0, %s236
    %s251 = sphi 0, %s237
    %s257 = sphi 0, %s259
    %s260 = sphi 0, %s257
    %s261 = sphi 0, %s260
    %s277 = sphi 0, %s261
  $region4: #{multi_head_attention.5} parent=0 // loop_header_branch
    %20 = sbr.rel (%p18) target = $region8
  $region5: #{multi_head_attention.5} parent=0 // loop_body
    %s22 = ssub.s32 %s17, 1
    %s23 = ssub.s32 %s17, 2
    %s24 = sadd.s32 %s17, 1
    %s25 = ssub.s32 %s17, %s24
    %p26 = scmp.eq.s32.totalorder %s25, 0
    %s28 = sadd.s32 %s27, 1
    %s29 = scalar_select %p26, %s27, %s28
    %p32 = pneg %p26
    %p33 = scmp.eq.s32.totalorder %s17, 1
    %p34 = por %p32, %p33
    %p35 = scmp.ne.s32.totalorder %s27, %s30
    %p36 = scmp.eq.s32.totalorder %s17, 0
    %p37 = por %p35, %p36
    %p38 = scmp.ne.s32.totalorder %s27, %s30
    %p39 = scmp.eq.s32.totalorder %s22, 1
    %p40 = por %p38, %p39
    %p41 = scmp.ne.s32.totalorder %s30, %s31
    %p42 = scmp.eq.s32.totalorder %s22, 0
    %p43 = por %p41, %p42
    %p44 = scmp.ne.s32.totalorder %s30, %s31
    %p45 = scmp.eq.s32.totalorder %s23, 1
    %p46 = por %p44, %p45
    %p48 = scmp.ne.s32.totalorder %s31, %s47
    %p49 = scmp.eq.s32.totalorder %s23, 0
    %p50 = por %p48, %p49
    %s51 = ssub.s32 %s17, %s24
    %p52 = scmp.eq.s32.totalorder %s51, 0
    %s54 = sadd.s32 %s53, 1
    %s55 = scalar_select %p52, %s53, %s54
    %p58 = pneg %p52
    %p59 = scmp.eq.s32.totalorder %s17, 1
    %p60 = por %p58, %p59
    %p61 = scmp.ne.s32.totalorder %s53, %s56
    %p62 = scmp.eq.s32.totalorder %s17, 0
    %p63 = por %p61, %p62
    %p64 = scmp.ne.s32.totalorder %s53, %s56
    %p65 = scmp.eq.s32.totalorder %s22, 1
    %p66 = por %p64, %p65
    %p67 = scmp.ne.s32.totalorder %s56, %s57
    %p68 = scmp.eq.s32.totalorder %s22, 0
    %p69 = por %p67, %p68
    %p70 = scmp.ne.s32.totalorder %s56, %s57
    %p71 = scmp.eq.s32.totalorder %s23, 1
    %p72 = por %p70, %p71
    %p74 = scmp.ne.s32.totalorder %s57, %s73
    %p75 = scmp.eq.s32.totalorder %s23, 0
    %p76 = por %p74, %p75
    %s77 = ssub.s32 %s17, %s24
    %p78 = scmp.eq.s32.totalorder %s77, 0
    %s80 = sadd.s32 %s79, 1
    %s81 = scalar_select %p78, %s79, %s80
    %p84 = pneg %p78
    %p85 = scmp.eq.s32.totalorder %s17, 1
    %p86 = por %p84, %p85
    %p87 = scmp.ne.s32.totalorder %s79, %s82
    %p88 = scmp.eq.s32.totalorder %s17, 0
    %p89 = por %p87, %p88
    %p90 = scmp.ne.s32.totalorder %s79, %s82
    %p91 = scmp.eq.s32.totalorder %s22, 1
    %p92 = por %p90, %p91
    %p93 = scmp.ne.s32.totalorder %s82, %s83
    %p94 = scmp.eq.s32.totalorder %s22, 0
    %p95 = por %p93, %p94
    %p96 = scmp.ne.s32.totalorder %s82, %s83
    %p97 = scmp.eq.s32.totalorder %s23, 1
    %p98 = por %p96, %p97
    %p100 = scmp.ne.s32.totalorder %s83, %s99
    %p101 = scmp.eq.s32.totalorder %s23, 0
    %p102 = por %p100, %p101
    %s104 = sadd.s32 %s103, 1
    %p107 = scmp.eq.s32.totalorder %s17, 1
    %p108 = scmp.ne.s32.totalorder %s103, %s105
    %p109 = scmp.eq.s32.totalorder %s17, 0
    %p110 = por %p108, %p109
    %p111 = scmp.ne.s32.totalorder %s103, %s105
    %p112 = scmp.eq.s32.totalorder %s22, 1
    %p113 = por %p111, %p112
    %p114 = scmp.ne.s32.totalorder %s105, %s106
    %p115 = scmp.eq.s32.totalorder %s22, 0
    %p116 = por %p114, %p115
    %p117 = scmp.ne.s32.totalorder %s105, %s106
    %p118 = scmp.eq.s32.totalorder %s23, 1
    %p119 = por %p117, %p118
    %p121 = scmp.ne.s32.totalorder %s106, %s120
    %p122 = scmp.eq.s32.totalorder %s23, 0
    %p123 = por %p121, %p122
    %s125 = sadd.s32 %s124, 1
    %p128 = scmp.eq.s32.totalorder %s17, 1
    %p129 = scmp.ne.s32.totalorder %s124, %s126
    %p130 = scmp.eq.s32.totalorder %s17, 0
    %p131 = por %p129, %p130
    %p132 = scmp.ne.s32.totalorder %s124, %s126
    %p133 = scmp.eq.s32.totalorder %s22, 1
    %p134 = por %p132, %p133
    %p135 = scmp.ne.s32.totalorder %s126, %s127
    %p136 = scmp.eq.s32.totalorder %s22, 0
    %p137 = por %p135, %p136
    %p138 = scmp.ne.s32.totalorder %s126, %s127
    %p139 = scmp.eq.s32.totalorder %s23, 1
    %p140 = por %p138, %p139
    %p142 = scmp.ne.s32.totalorder %s127, %s141
    %p143 = scmp.eq.s32.totalorder %s23, 0
    %p144 = por %p142, %p143
    %s146 = sadd.s32 %s145, 1
    %p149 = scmp.eq.s32.totalorder %s17, 1
    %p150 = scmp.ne.s32.totalorder %s145, %s147
    %p151 = scmp.eq.s32.totalorder %s17, 0
    %p152 = por %p150, %p151
    %p153 = scmp.ne.s32.totalorder %s145, %s147
    %p154 = scmp.eq.s32.totalorder %s22, 1
    %p155 = por %p153, %p154
    %p156 = scmp.ne.s32.totalorder %s147, %s148
    %p157 = scmp.eq.s32.totalorder %s22, 0
    %p158 = por %p156, %p157
    %p159 = scmp.ne.s32.totalorder %s147, %s148
    %p160 = scmp.eq.s32.totalorder %s23, 1
    %p161 = por %p159, %p160
    %p163 = scmp.ne.s32.totalorder %s148, %s162
    %p164 = scmp.eq.s32.totalorder %s23, 0
    %p165 = por %p163, %p164
    %s166 = ssub.s32 %s17, %s24
    %p167 = scmp.eq.s32.totalorder %s166, 0
    %s169 = sadd.s32 %s168, 1
    %s170 = scalar_select %p167, %s168, %s169
    %p173 = pneg %p167
    %p174 = scmp.eq.s32.totalorder %s17, 1
    %p175 = por %p173, %p174
    %p176 = scmp.ne.s32.totalorder %s168, %s171
    %p177 = scmp.eq.s32.totalorder %s17, 0
    %p178 = por %p176, %p177
    %p179 = scmp.ne.s32.totalorder %s168, %s171
    %p180 = scmp.eq.s32.totalorder %s22, 1
    %p181 = por %p179, %p180
    %p182 = scmp.ne.s32.totalorder %s171, %s172
    %p183 = scmp.eq.s32.totalorder %s22, 0
    %p184 = por %p182, %p183
    %p185 = scmp.ne.s32.totalorder %s171, %s172
    %p186 = scmp.eq.s32.totalorder %s23, 1
    %p187 = por %p185, %p186
    %p189 = scmp.ne.s32.totalorder %s172, %s188
    %p190 = scmp.eq.s32.totalorder %s23, 0
    %p191 = por %p189, %p190
    %s193 = sadd.s32 %s192, 1
    %p196 = scmp.eq.s32.totalorder %s17, 1
    %p197 = scmp.ne.s32.totalorder %s192, %s194
    %p198 = scmp.eq.s32.totalorder %s17, 0
    %p199 = por %p197, %p198
    %p200 = scmp.ne.s32.totalorder %s192, %s194
    %p201 = scmp.eq.s32.totalorder %s22, 1
    %p202 = por %p200, %p201
    %p203 = scmp.ne.s32.totalorder %s194, %s195
    %p204 = scmp.eq.s32.totalorder %s22, 0
    %p205 = por %p203, %p204
    %p206 = scmp.ne.s32.totalorder %s194, %s195
    %p207 = scmp.eq.s32.totalorder %s23, 1
    %p208 = por %p206, %p207
    %p210 = scmp.ne.s32.totalorder %s195, %s209
    %p211 = scmp.eq.s32.totalorder %s23, 0
    %p212 = por %p210, %p211
    %s214 = sadd.s32 %s213, 1
    %p217 = scmp.eq.s32.totalorder %s17, 1
    %p218 = scmp.ne.s32.totalorder %s213, %s215
    %p219 = scmp.eq.s32.totalorder %s17, 0
    %p220 = por %p218, %p219
    %p221 = scmp.ne.s32.totalorder %s213, %s215
    %p222 = scmp.eq.s32.totalorder %s22, 1
    %p223 = por %p221, %p222
    %p224 = scmp.ne.s32.totalorder %s215, %s216
    %p225 = scmp.eq.s32.totalorder %s22, 0
    %p226 = por %p224, %p225
    %p227 = scmp.ne.s32.totalorder %s215, %s216
    %p228 = scmp.eq.s32.totalorder %s23, 1
    %p229 = por %p227, %p228
    %p231 = scmp.ne.s32.totalorder %s216, %s230
    %p232 = scmp.eq.s32.totalorder %s23, 0
    %p233 = por %p231, %p232
    %s235 = sadd.s32 %s234, 1
    %p238 = scmp.eq.s32.totalorder %s17, 1
    %p239 = scmp.ne.s32.totalorder %s234, %s236
    %p240 = scmp.eq.s32.totalorder %s17, 0
    %p241 = por %p239, %p240
    %p242 = scmp.ne.s32.totalorder %s234, %s236
    %p243 = scmp.eq.s32.totalorder %s22, 1
    %p244 = por %p242, %p243
    %p245 = scmp.ne.s32.totalorder %s236, %s237
    %p246 = scmp.eq.s32.totalorder %s22, 0
    %p247 = por %p245, %p246
    %p248 = scmp.ne.s32.totalorder %s236, %s237
    %p249 = scmp.eq.s32.totalorder %s23, 1
    %p250 = por %p248, %p249
    %p252 = scmp.ne.s32.totalorder %s237, %s251
    %p253 = scmp.eq.s32.totalorder %s23, 0
    %p254 = por %p252, %p253
    %s255 = ssub.s32 %s17, %s24
    %p256 = scmp.eq.s32.totalorder %s255, 0
    %s258 = sadd.s32 %s257, 1
    %s259 = scalar_select %p256, %s257, %s258
    %p262 = pneg %p256
    %p263 = scmp.eq.s32.totalorder %s17, 1
    %p264 = por %p262, %p263
    %p265 = scmp.ne.s32.totalorder %s257, %s260
    %p266 = scmp.eq.s32.totalorder %s17, 0
    %p267 = por %p265, %p266
    %p268 = scmp.ne.s32.totalorder %s257, %s260
    %p269 = scmp.eq.s32.totalorder %s22, 1
    %p270 = por %p268, %p269
    %p271 = scmp.ne.s32.totalorder %s260, %s261
    %p272 = scmp.eq.s32.totalorder %s22, 0
    %p273 = por %p271, %p272
    %p274 = scmp.ne.s32.totalorder %s260, %s261
    %p275 = scmp.eq.s32.totalorder %s23, 1
    %p276 = por %p274, %p275
    %p278 = scmp.ne.s32.totalorder %s261, %s277
    %p279 = scmp.eq.s32.totalorder %s23, 0
    %p280 = por %p278, %p279
    %p281 = scmp.le.s32.totalorder 1, %s17
    %p282 = scmp.lt.s32.totalorder %s17, 3
    %p283 = pnand %p281, %p282
    %p284 = pneg %p283
    // Predicated region
    $region9: #{multi_head_attention.5} parent=5 // pred_check
      _
    $region10: #{multi_head_attention.5} parent=5 // pred_check_branch
      %286 = sbr.rel (%p283) target = $region12
    $region11: #{multi_head_attention.5} parent=5 // pred_region
      %s287 = ssub.s32 %s17, 1
      // Predicated region
      $region13: #{multi_head_attention.5} parent=11 // pred_check
        %p288 = pneg %p116
      $region14: #{multi_head_attention.5} parent=11 // pred_check_branch
        %290 = sbr.rel (%p288) target = $region16
      $region15: #{multi_head_attention.5} parent=11 // pred_region
        _
      $region16: #{multi_head_attention.5} parent=11 // pred_fallthru
        _
      // Predicated region
      $region17: #{multi_head_attention.5} parent=11 // pred_check
        %p291 = pneg %p137
      $region18: #{multi_head_attention.5} parent=11 // pred_check_branch
        %293 = sbr.rel (%p291) target = $region20
      $region19: #{multi_head_attention.5} parent=11 // pred_region
        _
      $region20: #{multi_head_attention.5} parent=11 // pred_fallthru
        _
      // Predicated region
      $region21: #{multi_head_attention.5} parent=11 // pred_check
        %p294 = pneg %p158
      $region22: #{multi_head_attention.5} parent=11 // pred_check_branch
        %296 = sbr.rel (%p294) target = $region24
      $region23: #{multi_head_attention.5} parent=11 // pred_region
        _
      $region24: #{multi_head_attention.5} parent=11 // pred_fallthru
        _
      // Predicated region
      $region25: #{multi_head_attention.5} parent=11 // pred_check
        %p297 = pneg %p205
      $region26: #{multi_head_attention.5} parent=11 // pred_check_branch
        %299 = sbr.rel (%p297) target = $region28
      $region27: #{multi_head_attention.5} parent=11 // pred_region
        _
      $region28: #{multi_head_attention.5} parent=11 // pred_fallthru
        _
      // Predicated region
      $region29: #{multi_head_attention.5} parent=11 // pred_check
        %p300 = pneg %p226
      $region30: #{multi_head_attention.5} parent=11 // pred_check_branch
        %302 = sbr.rel (%p300) target = $region32
      $region31: #{multi_head_attention.5} parent=11 // pred_region
        _
      $region32: #{multi_head_attention.5} parent=11 // pred_fallthru
        _
    $region12: #{multi_head_attention.5} parent=5 // pred_fallthru
      _
    %p303 = scmp.lt.s32.totalorder %s17, 2
    // Predicated region
    $region33: #{multi_head_attention.5} parent=5 // pred_check
      %p304 = pneg %p303
    $region34: #{multi_head_attention.5} parent=5 // pred_check_branch
      %306 = sbr.rel (%p304) target = $region36
    $region35: #{multi_head_attention.5} parent=5 // pred_region
      // Predicated region
      $region37: #{multi_head_attention.5} parent=35 // pred_check
        %p307 = pneg %p37
      $region38: #{multi_head_attention.5} parent=35 // pred_check_branch
        %309 = sbr.rel (%p307) target = $region40
      $region39: #{multi_head_attention.5} parent=35 // pred_region
        %s310 = smul.u32 4, %s17
        %p311 = scmp.lt.s32.totalorder %s310, 7
        %s312 = scalar_select %p311, %s310, 7
        %s313 = scalar_lea.vmem %s0, %s312
        %s314 = smul.u32 4, %s17
      $region40: #{multi_head_attention.5} parent=35 // pred_fallthru
        _
      // Predicated region
      $region41: #{multi_head_attention.5} parent=35 // pred_check
        %p315 = pneg %p63
      $region42: #{multi_head_attention.5} parent=35 // pred_check_branch
        %317 = sbr.rel (%p315) target = $region44
      $region43: #{multi_head_attention.5} parent=35 // pred_region
        %s318 = smul.u32 4, %s17
        %p319 = scmp.lt.s32.totalorder %s318, 7
        %s320 = scalar_select %p319, %s318, 7
        %s321 = scalar_lea.vmem %s1, %s320
        %s322 = smul.u32 4, %s17
      $region44: #{multi_head_attention.5} parent=35 // pred_fallthru
        _
      // Predicated region
      $region45: #{multi_head_attention.5} parent=35 // pred_check
        %p323 = pneg %p89
      $region46: #{multi_head_attention.5} parent=35 // pred_check_branch
        %325 = sbr.rel (%p323) target = $region48
      $region47: #{multi_head_attention.5} parent=35 // pred_region
        %s326 = smul.u32 4, %s17
        %p327 = scmp.lt.s32.totalorder %s326, 7
        %s328 = scalar_select %p327, %s326, 7
        %s329 = scalar_lea.vmem %s2, %s328
        %s330 = smul.u32 4, %s17
      $region48: #{multi_head_attention.5} parent=35 // pred_fallthru
        _
      // Predicated region
      $region49: #{multi_head_attention.5} parent=35 // pred_check
        %p331 = pneg %p178
      $region50: #{multi_head_attention.5} parent=35 // pred_check_branch
        %333 = sbr.rel (%p331) target = $region52
      $region51: #{multi_head_attention.5} parent=35 // pred_region
        %s334 = smul.u32 64, %s17
        %p335 = scmp.lt.s32.totalorder %s334, 127
        %s336 = scalar_select %p335, %s334, 127
        %s337 = smul.addr %s336, 8
        %s338 = scalar_lea.vmem %s6, %s337
        %s339 = smul.u32 64, %s17
      $region52: #{multi_head_attention.5} parent=35 // pred_fallthru
        _
    $region36: #{multi_head_attention.5} parent=5 // pred_fallthru
      _
    %p340 = scmp.le.s32.totalorder 1, %s17
    %p341 = scmp.lt.s32.totalorder %s17, 3
    %p342 = pnand %p340, %p341
    %p343 = pneg %p342
    // Predicated region
    $region53: #{multi_head_attention.5} parent=5 // pred_check
      _
    $region54: #{multi_head_attention.5} parent=5 // pred_check_branch
      %345 = sbr.rel (%p342) target = $region56
    $region55: #{multi_head_attention.5} parent=5 // pred_region
      %s346 = ssub.s32 %s17, 1
      %s347 = smul.u32 4, %s22
      %p348 = scmp.lt.s32.totalorder %s347, 7
      %s349 = scalar_select %p348, %s347, 7
      %s350 = scalar_lea.vmem %s0, %s349
      %p351 = pneg %p43
      %p352 = pneg %p40
      %s353 = smul.u32 4, %s22
      %p354 = scmp.lt.s32.totalorder %s353, 7
      %s355 = scalar_select %p354, %s353, 7
      %s356 = scalar_lea.vmem %s1, %s355
      %p357 = pneg %p69
      %p358 = pneg %p66
      %s359 = smul.u32 4, %s22
      %p360 = scmp.lt.s32.totalorder %s359, 7
      %s361 = scalar_select %p360, %s359, 7
      %s362 = scalar_lea.vmem %s2, %s361
      %p363 = pneg %p95
      %p364 = pneg %p92
      %p365 = pneg %p116
      %p366 = pneg %p113
      %p367 = pneg %p137
      %p368 = pneg %p134
      %p369 = pneg %p158
      %p370 = pneg %p155
      %s371 = smul.u32 64, %s22
      %p372 = scmp.lt.s32.totalorder %s371, 127
      %s373 = scalar_select %p372, %s371, 127
      %s374 = smul.addr %s373, 8
      %s375 = scalar_lea.vmem %s6, %s374
      %p376 = pneg %p184
      %p377 = pneg %p181
      %p378 = pneg %p205
      %p379 = pneg %p202
      %p380 = pneg %p226
      %p381 = pneg %p223
      %p382 = pneg %p247
      %p383 = pneg %p244
      %p384 = pneg %p273
      %p385 = pneg %p270
      %s386 = smul.u32 4, %s22
      %p387 = scmp.lt.s32.totalorder %s386, 7
      %s388 = scalar_select %p387, %s386, 7
      %s389 = smul.addr %s388, 8
      %s390 = scalar_lea.vmem %s10, %s389
      %s391 = smul.u32 4, %s22
      %p392 = scmp.lt.s32.totalorder %s391, 7
      %s393 = scalar_select %p392, %s391, 7
      %s394 = scalar_lea.vmem %s0, %s393
      %s395 = smul.u32 4, %s22
      %s396 = smul.u32 4, %s22
      %p397 = scmp.lt.s32.totalorder %s396, 7
      %s398 = scalar_select %p397, %s396, 7
      %s399 = scalar_lea.vmem %s1, %s398
      %s400 = smul.u32 4, %s22
      %s401 = smul.u32 4, %s22
      %p402 = scmp.lt.s32.totalorder %s401, 7
      %s403 = scalar_select %p402, %s401, 7
      %s404 = scalar_lea.vmem %s2, %s403
      %s405 = smul.u32 4, %s22
      %s406 = smul.u32 64, %s22
      %p407 = scmp.lt.s32.totalorder %s406, 127
      %s408 = scalar_select %p407, %s406, 127
      %s409 = smul.addr %s408, 8
      %s410 = scalar_lea.vmem %s6, %s409
      %s411 = smul.u32 64, %s22
      %s412 = smul.u32 4, %s22
      %p413 = scmp.lt.s32.totalorder %s412, 7
      %s414 = scalar_select %p413, %s412, 7
      %s415 = smul.addr %s414, 8
      %s416 = scalar_lea.vmem %s10, %s415
      %s417 = smul.u32 4, %s22
      %p418 = scmp.eq.s32.totalorder %s22, 0
      // Predicated region
      $region57: #{multi_head_attention.5} parent=55 // pred_check
        %p419 = pneg %p418
      $region58: #{multi_head_attention.5} parent=55 // pred_check_branch
        %421 = sbr.rel (%p419) target = $region60
      $region59: #{multi_head_attention.5} parent=55 // pred_region
        %422 = vst [vmem:[%s9] sm:$0xff] 0.0
        %423 = vst [vmem:[%s9 + $0x8] sm:$0xff] 0.0
        %424 = vst [vmem:[%s9 + $0x10] sm:$0xff] 0.0
        %425 = vst [vmem:[%s9 + $0x18] sm:$0xff] 0.0
        %426 = vst [vmem:[%s9 + $0x20] sm:$0xff] 0.0
        %427 = vst [vmem:[%s9 + $0x28] sm:$0xff] 0.0
        %428 = vst [vmem:[%s9 + $0x30] sm:$0xff] 0.0
        %429 = vst [vmem:[%s9 + $0x38] sm:$0xff] 0.0
        %430 = vst [vmem:[%s9 + $0x40] sm:$0xff] 0.0
        %431 = vst [vmem:[%s9 + $0x48] sm:$0xff] 0.0
        %432 = vst [vmem:[%s9 + $0x50] sm:$0xff] 0.0
        %433 = vst [vmem:[%s9 + $0x58] sm:$0xff] 0.0
        %434 = vst [vmem:[%s9 + $0x60] sm:$0xff] 0.0
        %435 = vst [vmem:[%s9 + $0x68] sm:$0xff] 0.0
        %436 = vst [vmem:[%s9 + $0x70] sm:$0xff] 0.0
        %437 = vst [vmem:[%s9 + $0x78] sm:$0xff] 0.0
      $region60: #{multi_head_attention.5} parent=55 // pred_fallthru
        _
      %v438 = vlaneseq
      %v439 = vshrl.u32 %v438, 7
      %v440 = vadd.s32 %v439, 8
      %v441 = vadd.s32 %v439, 16
      %v442 = vadd.s32 %v439, 24
      %v443 = vadd.s32 %v439, 32
      %v444 = vadd.s32 %v439, 40
      %v445 = vadd.s32 %v439, 48
      %v446 = vadd.s32 %v439, 56
      %v447 = vadd.s32 %v439, 64
      %v448 = vadd.s32 %v439, 72
      %v449 = vadd.s32 %v439, 80
      %v450 = vadd.s32 %v439, 88
      %v451 = vadd.s32 %v439, 96
      %v452 = vadd.s32 %v439, 104
      %v453 = vadd.s32 %v439, 112
      %v454 = vadd.s32 %v439, 120
      %v455 = vld [vmem:[%s399] sm:$0xf]
      %v456 = vlaneseq
      %v457 = vshrl.u32 %v456, 7
      %v458 = vsub.s32 0, %v457
      %v459 = vrot.slane %v455, %v458
      %v460 = vlaneseq
      %v461 = vshrl.u32 %v460, 7
      %v462 = vsub.s32 1, %v461
      %v463 = vrot.slane %v455, %v462
      %v464 = vlaneseq
      %v465 = vshrl.u32 %v464, 7
      %v466 = vsub.s32 2, %v465
      %v467 = vrot.slane %v455, %v466
      %v468 = vlaneseq
      %v469 = vshrl.u32 %v468, 7
      %v470 = vsub.s32 3, %v469
      %v471 = vrot.slane %v455, %v470
      %vm472 = vcmp.eq.s32.totalorder %v439, %v459
      %vm473 = vcmp.eq.s32.totalorder %v439, %v463
      %vm474 = vcmp.eq.s32.totalorder %v439, %v467
      %vm475 = vcmp.eq.s32.totalorder %v439, %v471
      %vm476 = vcmp.eq.s32.totalorder %v440, %v459
      %vm477 = vcmp.eq.s32.totalorder %v440, %v463
      %vm478 = vcmp.eq.s32.totalorder %v440, %v467
      %vm479 = vcmp.eq.s32.totalorder %v440, %v471
      %vm480 = vcmp.eq.s32.totalorder %v441, %v459
      %vm481 = vcmp.eq.s32.totalorder %v441, %v463
      %vm482 = vcmp.eq.s32.totalorder %v441, %v467
      %vm483 = vcmp.eq.s32.totalorder %v441, %v471
      %vm484 = vcmp.eq.s32.totalorder %v442, %v459
      %vm485 = vcmp.eq.s32.totalorder %v442, %v463
      %vm486 = vcmp.eq.s32.totalorder %v442, %v467
      %vm487 = vcmp.eq.s32.totalorder %v442, %v471
      %vm488 = vcmp.eq.s32.totalorder %v443, %v459
      %vm489 = vcmp.eq.s32.totalorder %v443, %v463
      %vm490 = vcmp.eq.s32.totalorder %v443, %v467
      %vm491 = vcmp.eq.s32.totalorder %v443, %v471
      %vm492 = vcmp.eq.s32.totalorder %v444, %v459
      %vm493 = vcmp.eq.s32.totalorder %v444, %v463
      %vm494 = vcmp.eq.s32.totalorder %v444, %v467
      %vm495 = vcmp.eq.s32.totalorder %v444, %v471
      %vm496 = vcmp.eq.s32.totalorder %v445, %v459
      %vm497 = vcmp.eq.s32.totalorder %v445, %v463
      %vm498 = vcmp.eq.s32.totalorder %v445, %v467
      %vm499 = vcmp.eq.s32.totalorder %v445, %v471
      %vm500 = vcmp.eq.s32.totalorder %v446, %v459
      %vm501 = vcmp.eq.s32.totalorder %v446, %v463
      %vm502 = vcmp.eq.s32.totalorder %v446, %v467
      %vm503 = vcmp.eq.s32.totalorder %v446, %v471
      %vm504 = vcmp.eq.s32.totalorder %v447, %v459
      %vm505 = vcmp.eq.s32.totalorder %v447, %v463
      %vm506 = vcmp.eq.s32.totalorder %v447, %v467
      %vm507 = vcmp.eq.s32.totalorder %v447, %v471
      %vm508 = vcmp.eq.s32.totalorder %v448, %v459
      %vm509 = vcmp.eq.s32.totalorder %v448, %v463
      %vm510 = vcmp.eq.s32.totalorder %v448, %v467
      %vm511 = vcmp.eq.s32.totalorder %v448, %v471
      %vm512 = vcmp.eq.s32.totalorder %v449, %v459
      %vm513 = vcmp.eq.s32.totalorder %v449, %v463
      %vm514 = vcmp.eq.s32.totalorder %v449, %v467
      %vm515 = vcmp.eq.s32.totalorder %v449, %v471
      %vm516 = vcmp.eq.s32.totalorder %v450, %v459
      %vm517 = vcmp.eq.s32.totalorder %v450, %v463
      %vm518 = vcmp.eq.s32.totalorder %v450, %v467
      %vm519 = vcmp.eq.s32.totalorder %v450, %v471
      %vm520 = vcmp.eq.s32.totalorder %v451, %v459
      %vm521 = vcmp.eq.s32.totalorder %v451, %v463
      %vm522 = vcmp.eq.s32.totalorder %v451, %v467
      %vm523 = vcmp.eq.s32.totalorder %v451, %v471
      %vm524 = vcmp.eq.s32.totalorder %v452, %v459
      %vm525 = vcmp.eq.s32.totalorder %v452, %v463
      %vm526 = vcmp.eq.s32.totalorder %v452, %v467
      %vm527 = vcmp.eq.s32.totalorder %v452, %v471
      %vm528 = vcmp.eq.s32.totalorder %v453, %v459
      %vm529 = vcmp.eq.s32.totalorder %v453, %v463
      %vm530 = vcmp.eq.s32.totalorder %v453, %v467
      %vm531 = vcmp.eq.s32.totalorder %v453, %v471
      %vm532 = vcmp.eq.s32.totalorder %v454, %v459
      %vm533 = vcmp.eq.s32.totalorder %v454, %v463
      %vm534 = vcmp.eq.s32.totalorder %v454, %v467
      %vm535 = vcmp.eq.s32.totalorder %v454, %v471
      %v536 = vsel %vm472, 1, 0
      %v537 = vsel %vm473, 1, 0
      %v538 = vsel %vm474, 1, 0
      %v539 = vsel %vm475, 1, 0
      %v540 = vsel %vm476, 1, 0
      %v541 = vsel %vm477, 1, 0
      %v542 = vsel %vm478, 1, 0
      %v543 = vsel %vm479, 1, 0
      %v544 = vsel %vm480, 1, 0
      %v545 = vsel %vm481, 1, 0
      %v546 = vsel %vm482, 1, 0
      %v547 = vsel %vm483, 1, 0
      %v548 = vsel %vm484, 1, 0
      %v549 = vsel %vm485, 1, 0
      %v550 = vsel %vm486, 1, 0
      %v551 = vsel %vm487, 1, 0
      %v552 = vsel %vm488, 1, 0
      %v553 = vsel %vm489, 1, 0
      %v554 = vsel %vm490, 1, 0
      %v555 = vsel %vm491, 1, 0
      %v556 = vsel %vm492, 1, 0
      %v557 = vsel %vm493, 1, 0
      %v558 = vsel %vm494, 1, 0
      %v559 = vsel %vm495, 1, 0
      %v560 = vsel %vm496, 1, 0
      %v561 = vsel %vm497, 1, 0
      %v562 = vsel %vm498, 1, 0
      %v563 = vsel %vm499, 1, 0
      %v564 = vsel %vm500, 1, 0
      %v565 = vsel %vm501, 1, 0
      %v566 = vsel %vm502, 1, 0
      %v567 = vsel %vm503, 1, 0
      %v568 = vsel %vm504, 1, 0
      %v569 = vsel %vm505, 1, 0
      %v570 = vsel %vm506, 1, 0
      %v571 = vsel %vm507, 1, 0
      %v572 = vsel %vm508, 1, 0
      %v573 = vsel %vm509, 1, 0
      %v574 = vsel %vm510, 1, 0
      %v575 = vsel %vm511, 1, 0
      %v576 = vsel %vm512, 1, 0
      %v577 = vsel %vm513, 1, 0
      %v578 = vsel %vm514, 1, 0
      %v579 = vsel %vm515, 1, 0
      %v580 = vsel %vm516, 1, 0
      %v581 = vsel %vm517, 1, 0
      %v582 = vsel %vm518, 1, 0
      %v583 = vsel %vm519, 1, 0
      %v584 = vsel %vm520, 1, 0
      %v585 = vsel %vm521, 1, 0
      %v586 = vsel %vm522, 1, 0
      %v587 = vsel %vm523, 1, 0
      %v588 = vsel %vm524, 1, 0
      %v589 = vsel %vm525, 1, 0
      %v590 = vsel %vm526, 1, 0
      %v591 = vsel %vm527, 1, 0
      %v592 = vsel %vm528, 1, 0
      %v593 = vsel %vm529, 1, 0
      %v594 = vsel %vm530, 1, 0
      %v595 = vsel %vm531, 1, 0
      %v596 = vsel %vm532, 1, 0
      %v597 = vsel %vm533, 1, 0
      %v598 = vsel %vm534, 1, 0
      %v599 = vsel %vm535, 1, 0
      %v600 = vcvt.s32.f32 %v536
      %v601 = vcvt.s32.f32 %v537
      %v602 = vcvt.s32.f32 %v538
      %v603 = vcvt.s32.f32 %v539
      %v604 = vcvt.s32.f32 %v540
      %v605 = vcvt.s32.f32 %v541
      %v606 = vcvt.s32.f32 %v542
      %v607 = vcvt.s32.f32 %v543
      %v608 = vcvt.s32.f32 %v544
      %v609 = vcvt.s32.f32 %v545
      %v610 = vcvt.s32.f32 %v546
      %v611 = vcvt.s32.f32 %v547
      %v612 = vcvt.s32.f32 %v548
      %v613 = vcvt.s32.f32 %v549
      %v614 = vcvt.s32.f32 %v550
      %v615 = vcvt.s32.f32 %v551
      %v616 = vcvt.s32.f32 %v552
      %v617 = vcvt.s32.f32 %v553
      %v618 = vcvt.s32.f32 %v554
      %v619 = vcvt.s32.f32 %v555
      %v620 = vcvt.s32.f32 %v556
      %v621 = vcvt.s32.f32 %v557
      %v622 = vcvt.s32.f32 %v558
      %v623 = vcvt.s32.f32 %v559
      %v624 = vcvt.s32.f32 %v560
      %v625 = vcvt.s32.f32 %v561
      %v626 = vcvt.s32.f32 %v562
      %v627 = vcvt.s32.f32 %v563
      %v628 = vcvt.s32.f32 %v564
      %v629 = vcvt.s32.f32 %v565
      %v630 = vcvt.s32.f32 %v566
      %v631 = vcvt.s32.f32 %v567
      %v632 = vcvt.s32.f32 %v568
      %v633 = vcvt.s32.f32 %v569
      %v634 = vcvt.s32.f32 %v570
      %v635 = vcvt.s32.f32 %v571
      %v636 = vcvt.s32.f32 %v572
      %v637 = vcvt.s32.f32 %v573
      %v638 = vcvt.s32.f32 %v574
      %v639 = vcvt.s32.f32 %v575
      %v640 = vcvt.s32.f32 %v576
      %v641 = vcvt.s32.f32 %v577
      %v642 = vcvt.s32.f32 %v578
      %v643 = vcvt.s32.f32 %v579
      %v644 = vcvt.s32.f32 %v580
      %v645 = vcvt.s32.f32 %v581
      %v646 = vcvt.s32.f32 %v582
      %v647 = vcvt.s32.f32 %v583
      %v648 = vcvt.s32.f32 %v584
      %v649 = vcvt.s32.f32 %v585
      %v650 = vcvt.s32.f32 %v586
      %v651 = vcvt.s32.f32 %v587
      %v652 = vcvt.s32.f32 %v588
      %v653 = vcvt.s32.f32 %v589
      %v654 = vcvt.s32.f32 %v590
      %v655 = vcvt.s32.f32 %v591
      %v656 = vcvt.s32.f32 %v592
      %v657 = vcvt.s32.f32 %v593
      %v658 = vcvt.s32.f32 %v594
      %v659 = vcvt.s32.f32 %v595
      %v660 = vcvt.s32.f32 %v596
      %v661 = vcvt.s32.f32 %v597
      %v662 = vcvt.s32.f32 %v598
      %v663 = vcvt.s32.f32 %v599
      %v664 = vld [vmem:[%s394] sm:$0xf]
      %v665 = vlaneseq
      %v666 = vshrl.u32 %v665, 7
      %v667 = vsub.s32 0, %v666
      %v668 = vrot.slane %v664, %v667
      %v669 = vlaneseq
      %v670 = vshrl.u32 %v669, 7
      %v671 = vsub.s32 1, %v670
      %v672 = vrot.slane %v664, %v671
      %v673 = vlaneseq
      %v674 = vshrl.u32 %v673, 7
      %v675 = vsub.s32 2, %v674
      %v676 = vrot.slane %v664, %v675
      %v677 = vlaneseq
      %v678 = vshrl.u32 %v677, 7
      %v679 = vsub.s32 3, %v678
      %v680 = vrot.slane %v664, %v679
      %vm681 = vcmp.eq.s32.totalorder %v439, %v668
      %vm682 = vcmp.eq.s32.totalorder %v439, %v672
      %vm683 = vcmp.eq.s32.totalorder %v439, %v676
      %vm684 = vcmp.eq.s32.totalorder %v439, %v680
      %vm685 = vcmp.eq.s32.totalorder %v440, %v668
      %vm686 = vcmp.eq.s32.totalorder %v440, %v672
      %vm687 = vcmp.eq.s32.totalorder %v440, %v676
      %vm688 = vcmp.eq.s32.totalorder %v440, %v680
      %vm689 = vcmp.eq.s32.totalorder %v441, %v668
      %vm690 = vcmp.eq.s32.totalorder %v441, %v672
      %vm691 = vcmp.eq.s32.totalorder %v441, %v676
      %vm692 = vcmp.eq.s32.totalorder %v441, %v680
      %vm693 = vcmp.eq.s32.totalorder %v442, %v668
      %vm694 = vcmp.eq.s32.totalorder %v442, %v672
      %vm695 = vcmp.eq.s32.totalorder %v442, %v676
      %vm696 = vcmp.eq.s32.totalorder %v442, %v680
      %vm697 = vcmp.eq.s32.totalorder %v443, %v668
      %vm698 = vcmp.eq.s32.totalorder %v443, %v672
      %vm699 = vcmp.eq.s32.totalorder %v443, %v676
      %vm700 = vcmp.eq.s32.totalorder %v443, %v680
      %vm701 = vcmp.eq.s32.totalorder %v444, %v668
      %vm702 = vcmp.eq.s32.totalorder %v444, %v672
      %vm703 = vcmp.eq.s32.totalorder %v444, %v676
      %vm704 = vcmp.eq.s32.totalorder %v444, %v680
      %vm705 = vcmp.eq.s32.totalorder %v445, %v668
      %vm706 = vcmp.eq.s32.totalorder %v445, %v672
      %vm707 = vcmp.eq.s32.totalorder %v445, %v676
      %vm708 = vcmp.eq.s32.totalorder %v445, %v680
      %vm709 = vcmp.eq.s32.totalorder %v446, %v668
      %vm710 = vcmp.eq.s32.totalorder %v446, %v672
      %vm711 = vcmp.eq.s32.totalorder %v446, %v676
      %vm712 = vcmp.eq.s32.totalorder %v446, %v680
      %vm713 = vcmp.eq.s32.totalorder %v447, %v668
      %vm714 = vcmp.eq.s32.totalorder %v447, %v672
      %vm715 = vcmp.eq.s32.totalorder %v447, %v676
      %vm716 = vcmp.eq.s32.totalorder %v447, %v680
      %vm717 = vcmp.eq.s32.totalorder %v448, %v668
      %vm718 = vcmp.eq.s32.totalorder %v448, %v672
      %vm719 = vcmp.eq.s32.totalorder %v448, %v676
      %vm720 = vcmp.eq.s32.totalorder %v448, %v680
      %vm721 = vcmp.eq.s32.totalorder %v449, %v668
      %vm722 = vcmp.eq.s32.totalorder %v449, %v672
      %vm723 = vcmp.eq.s32.totalorder %v449, %v676
      %vm724 = vcmp.eq.s32.totalorder %v449, %v680
      %vm725 = vcmp.eq.s32.totalorder %v450, %v668
      %vm726 = vcmp.eq.s32.totalorder %v450, %v672
      %vm727 = vcmp.eq.s32.totalorder %v450, %v676
      %vm728 = vcmp.eq.s32.totalorder %v450, %v680
      %vm729 = vcmp.eq.s32.totalorder %v451, %v668
      %vm730 = vcmp.eq.s32.totalorder %v451, %v672
      %vm731 = vcmp.eq.s32.totalorder %v451, %v676
      %vm732 = vcmp.eq.s32.totalorder %v451, %v680
      %vm733 = vcmp.eq.s32.totalorder %v452, %v668
      %vm734 = vcmp.eq.s32.totalorder %v452, %v672
      %vm735 = vcmp.eq.s32.totalorder %v452, %v676
      %vm736 = vcmp.eq.s32.totalorder %v452, %v680
      %vm737 = vcmp.eq.s32.totalorder %v453, %v668
      %vm738 = vcmp.eq.s32.totalorder %v453, %v672
      %vm739 = vcmp.eq.s32.totalorder %v453, %v676
      %vm740 = vcmp.eq.s32.totalorder %v453, %v680
      %vm741 = vcmp.eq.s32.totalorder %v454, %v668
      %vm742 = vcmp.eq.s32.totalorder %v454, %v672
      %vm743 = vcmp.eq.s32.totalorder %v454, %v676
      %vm744 = vcmp.eq.s32.totalorder %v454, %v680
      %v745 = vsel %vm681, 1, 0
      %v746 = vsel %vm682, 1, 0
      %v747 = vsel %vm683, 1, 0
      %v748 = vsel %vm684, 1, 0
      %v749 = vsel %vm685, 1, 0
      %v750 = vsel %vm686, 1, 0
      %v751 = vsel %vm687, 1, 0
      %v752 = vsel %vm688, 1, 0
      %v753 = vsel %vm689, 1, 0
      %v754 = vsel %vm690, 1, 0
      %v755 = vsel %vm691, 1, 0
      %v756 = vsel %vm692, 1, 0
      %v757 = vsel %vm693, 1, 0
      %v758 = vsel %vm694, 1, 0
      %v759 = vsel %vm695, 1, 0
      %v760 = vsel %vm696, 1, 0
      %v761 = vsel %vm697, 1, 0
      %v762 = vsel %vm698, 1, 0
      %v763 = vsel %vm699, 1, 0
      %v764 = vsel %vm700, 1, 0
      %v765 = vsel %vm701, 1, 0
      %v766 = vsel %vm702, 1, 0
      %v767 = vsel %vm703, 1, 0
      %v768 = vsel %vm704, 1, 0
      %v769 = vsel %vm705, 1, 0
      %v770 = vsel %vm706, 1, 0
      %v771 = vsel %vm707, 1, 0
      %v772 = vsel %vm708, 1, 0
      %v773 = vsel %vm709, 1, 0
      %v774 = vsel %vm710, 1, 0
      %v775 = vsel %vm711, 1, 0
      %v776 = vsel %vm712, 1, 0
      %v777 = vsel %vm713, 1, 0
      %v778 = vsel %vm714, 1, 0
      %v779 = vsel %vm715, 1, 0
      %v780 = vsel %vm716, 1, 0
      %v781 = vsel %vm717, 1, 0
      %v782 = vsel %vm718, 1, 0
      %v783 = vsel %vm719, 1, 0
      %v784 = vsel %vm720, 1, 0
      %v785 = vsel %vm721, 1, 0
      %v786 = vsel %vm722, 1, 0
      %v787 = vsel %vm723, 1, 0
      %v788 = vsel %vm724, 1, 0
      %v789 = vsel %vm725, 1, 0
      %v790 = vsel %vm726, 1, 0
      %v791 = vsel %vm727, 1, 0
      %v792 = vsel %vm728, 1, 0
      %v793 = vsel %vm729, 1, 0
      %v794 = vsel %vm730, 1, 0
      %v795 = vsel %vm731, 1, 0
      %v796 = vsel %vm732, 1, 0
      %v797 = vsel %vm733, 1, 0
      %v798 = vsel %vm734, 1, 0
      %v799 = vsel %vm735, 1, 0
      %v800 = vsel %vm736, 1, 0
      %v801 = vsel %vm737, 1, 0
      %v802 = vsel %vm738, 1, 0
      %v803 = vsel %vm739, 1, 0
      %v804 = vsel %vm740, 1, 0
      %v805 = vsel %vm741, 1, 0
      %v806 = vsel %vm742, 1, 0
      %v807 = vsel %vm743, 1, 0
      %v808 = vsel %vm744, 1, 0
      %v809 = vcvt.s32.f32 %v745
      %v810 = vcvt.s32.f32 %v746
      %v811 = vcvt.s32.f32 %v747
      %v812 = vcvt.s32.f32 %v748
      %v813 = vcvt.s32.f32 %v749
      %v814 = vcvt.s32.f32 %v750
      %v815 = vcvt.s32.f32 %v751
      %v816 = vcvt.s32.f32 %v752
      %v817 = vcvt.s32.f32 %v753
      %v818 = vcvt.s32.f32 %v754
      %v819 = vcvt.s32.f32 %v755
      %v820 = vcvt.s32.f32 %v756
      %v821 = vcvt.s32.f32 %v757
      %v822 = vcvt.s32.f32 %v758
      %v823 = vcvt.s32.f32 %v759
      %v824 = vcvt.s32.f32 %v760
      %v825 = vcvt.s32.f32 %v761
      %v826 = vcvt.s32.f32 %v762
      %v827 = vcvt.s32.f32 %v763
      %v828 = vcvt.s32.f32 %v764
      %v829 = vcvt.s32.f32 %v765
      %v830 = vcvt.s32.f32 %v766
      %v831 = vcvt.s32.f32 %v767
      %v832 = vcvt.s32.f32 %v768
      %v833 = vcvt.s32.f32 %v769
      %v834 = vcvt.s32.f32 %v770
      %v835 = vcvt.s32.f32 %v771
      %v836 = vcvt.s32.f32 %v772
      %v837 = vcvt.s32.f32 %v773
      %v838 = vcvt.s32.f32 %v774
      %v839 = vcvt.s32.f32 %v775
      %v840 = vcvt.s32.f32 %v776
      %v841 = vcvt.s32.f32 %v777
      %v842 = vcvt.s32.f32 %v778
      %v843 = vcvt.s32.f32 %v779
      %v844 = vcvt.s32.f32 %v780
      %v845 = vcvt.s32.f32 %v781
      %v846 = vcvt.s32.f32 %v782
      %v847 = vcvt.s32.f32 %v783
      %v848 = vcvt.s32.f32 %v784
      %v849 = vcvt.s32.f32 %v785
      %v850 = vcvt.s32.f32 %v786
      %v851 = vcvt.s32.f32 %v787
      %v852 = vcvt.s32.f32 %v788
      %v853 = vcvt.s32.f32 %v789
      %v854 = vcvt.s32.f32 %v790
      %v855 = vcvt.s32.f32 %v791
      %v856 = vcvt.s32.f32 %v792
      %v857 = vcvt.s32.f32 %v793
      %v858 = vcvt.s32.f32 %v794
      %v859 = vcvt.s32.f32 %v795
      %v860 = vcvt.s32.f32 %v796
      %v861 = vcvt.s32.f32 %v797
      %v862 = vcvt.s32.f32 %v798
      %v863 = vcvt.s32.f32 %v799
      %v864 = vcvt.s32.f32 %v800
      %v865 = vcvt.s32.f32 %v801
      %v866 = vcvt.s32.f32 %v802
      %v867 = vcvt.s32.f32 %v803
      %v868 = vcvt.s32.f32 %v804
      %v869 = vcvt.s32.f32 %v805
      %v870 = vcvt.s32.f32 %v806
      %v871 = vcvt.s32.f32 %v807
      %v872 = vcvt.s32.f32 %v808
      %v873 = vld [vmem:[%s3] sm:$0xff]
      %v874 = vld [vmem:[%s3 + $0x8] sm:$0xff]
      %v875 = vld [vmem:[%s3 + $0x10] sm:$0xff]
      %v876 = vld [vmem:[%s3 + $0x18] sm:$0xff]
      %v877 = vld [vmem:[%s3 + $0x20] sm:$0xff]
      %v878 = vld [vmem:[%s3 + $0x28] sm:$0xff]
      %v879 = vld [vmem:[%s3 + $0x30] sm:$0xff]
      %v880 = vld [vmem:[%s3 + $0x38] sm:$0xff]
      %v881 = vld [vmem:[%s3 + $0x40] sm:$0xff]
      %v882 = vld [vmem:[%s3 + $0x48] sm:$0xff]
      %v883 = vld [vmem:[%s3 + $0x50] sm:$0xff]
      %v884 = vld [vmem:[%s3 + $0x58] sm:$0xff]
      %v885 = vld [vmem:[%s3 + $0x60] sm:$0xff]
      %v886 = vld [vmem:[%s3 + $0x68] sm:$0xff]
      %v887 = vld [vmem:[%s3 + $0x70] sm:$0xff]
      %v888 = vld [vmem:[%s3 + $0x78] sm:$0xff]
      %889 = vxpose.xlu0.b32.start [1/16] %v600, 128
      %890 = vxpose.xlu0.b32.cont [2/16] %v604, 128
      %891 = vxpose.xlu0.b32.cont [3/16] %v608, 128
      %892 = vxpose.xlu0.b32.cont [4/16] %v612, 128
      %893 = vxpose.xlu0.b32.cont [5/16] %v616, 128
      %894 = vxpose.xlu0.b32.cont [6/16] %v620, 128
      %895 = vxpose.xlu0.b32.cont [7/16] %v624, 128
      %896 = vxpose.xlu0.b32.cont [8/16] %v628, 128
      %897 = vxpose.xlu0.b32.cont [9/16] %v632, 128
      %898 = vxpose.xlu0.b32.cont [10/16] %v636, 128
      %899 = vxpose.xlu0.b32.cont [11/16] %v640, 128
      %900 = vxpose.xlu0.b32.cont [12/16] %v644, 128
      %901 = vxpose.xlu0.b32.cont [13/16] %v648, 128
      %902 = vxpose.xlu0.b32.cont [14/16] %v652, 128
      %903 = vxpose.xlu0.b32.cont [15/16] %v656, 128
      %904 = vxpose.xlu0.b32.end [16/16] %v660, 128
      %v905 = vpop.trf.xlu0
      %v906 = vpop.trf.xlu0
      %v907 = vpop.trf.xlu0
      %v908 = vpop.trf.xlu0
      %v909 = vpop.trf.xlu0
      %v910 = vpop.trf.xlu0
      %v911 = vpop.trf.xlu0
      %v912 = vpop.trf.xlu0
      %v913 = vpop.trf.xlu0
      %v914 = vpop.trf.xlu0
      %v915 = vpop.trf.xlu0
      %v916 = vpop.trf.xlu0
      %v917 = vpop.trf.xlu0
      %v918 = vpop.trf.xlu0
      %v919 = vpop.trf.xlu0
      %v920 = vpop.trf.xlu0
      %921 = vxpose.xlu0.b32.start [1/16] %v601, 128
      %922 = vxpose.xlu0.b32.cont [2/16] %v605, 128
      %923 = vxpose.xlu0.b32.cont [3/16] %v609, 128
      %924 = vxpose.xlu0.b32.cont [4/16] %v613, 128
      %925 = vxpose.xlu0.b32.cont [5/16] %v617, 128
      %926 = vxpose.xlu0.b32.cont [6/16] %v621, 128
      %927 = vxpose.xlu0.b32.cont [7/16] %v625, 128
      %928 = vxpose.xlu0.b32.cont [8/16] %v629, 128
      %929 = vxpose.xlu0.b32.cont [9/16] %v633, 128
      %930 = vxpose.xlu0.b32.cont [10/16] %v637, 128
      %931 = vxpose.xlu0.b32.cont [11/16] %v641, 128
      %932 = vxpose.xlu0.b32.cont [12/16] %v645, 128
      %933 = vxpose.xlu0.b32.cont [13/16] %v649, 128
      %934 = vxpose.xlu0.b32.cont [14/16] %v653, 128
      %935 = vxpose.xlu0.b32.cont [15/16] %v657, 128
      %936 = vxpose.xlu0.b32.end [16/16] %v661, 128
      %v937 = vpop.trf.xlu0
      %v938 = vpop.trf.xlu0
      %v939 = vpop.trf.xlu0
      %v940 = vpop.trf.xlu0
      %v941 = vpop.trf.xlu0
      %v942 = vpop.trf.xlu0
      %v943 = vpop.trf.xlu0
      %v944 = vpop.trf.xlu0
      %v945 = vpop.trf.xlu0
      %v946 = vpop.trf.xlu0
      %v947 = vpop.trf.xlu0
      %v948 = vpop.trf.xlu0
      %v949 = vpop.trf.xlu0
      %v950 = vpop.trf.xlu0
      %v951 = vpop.trf.xlu0
      %v952 = vpop.trf.xlu0
      %953 = vxpose.xlu0.b32.start [1/16] %v602, 128
      %954 = vxpose.xlu0.b32.cont [2/16] %v606, 128
      %955 = vxpose.xlu0.b32.cont [3/16] %v610, 128
      %956 = vxpose.xlu0.b32.cont [4/16] %v614, 128
      %957 = vxpose.xlu0.b32.cont [5/16] %v618, 128
      %958 = vxpose.xlu0.b32.cont [6/16] %v622, 128
      %959 = vxpose.xlu0.b32.cont [7/16] %v626, 128
      %960 = vxpose.xlu0.b32.cont [8/16] %v630, 128
      %961 = vxpose.xlu0.b32.cont [9/16] %v634, 128
      %962 = vxpose.xlu0.b32.cont [10/16] %v638, 128
      %963 = vxpose.xlu0.b32.cont [11/16] %v642, 128
      %964 = vxpose.xlu0.b32.cont [12/16] %v646, 128
      %965 = vxpose.xlu0.b32.cont [13/16] %v650, 128
      %966 = vxpose.xlu0.b32.cont [14/16] %v654, 128
      %967 = vxpose.xlu0.b32.cont [15/16] %v658, 128
      %968 = vxpose.xlu0.b32.end [16/16] %v662, 128
      %v969 = vpop.trf.xlu0
      %v970 = vpop.trf.xlu0
      %v971 = vpop.trf.xlu0
      %v972 = vpop.trf.xlu0
      %v973 = vpop.trf.xlu0
      %v974 = vpop.trf.xlu0
      %v975 = vpop.trf.xlu0
      %v976 = vpop.trf.xlu0
      %v977 = vpop.trf.xlu0
      %v978 = vpop.trf.xlu0
      %v979 = vpop.trf.xlu0
      %v980 = vpop.trf.xlu0
      %v981 = vpop.trf.xlu0
      %v982 = vpop.trf.xlu0
      %v983 = vpop.trf.xlu0
      %v984 = vpop.trf.xlu0
      %985 = vxpose.xlu0.b32.start [1/16] %v603, 128
      %986 = vxpose.xlu0.b32.cont [2/16] %v607, 128
      %987 = vxpose.xlu0.b32.cont [3/16] %v611, 128
      %988 = vxpose.xlu0.b32.cont [4/16] %v615, 128
      %989 = vxpose.xlu0.b32.cont [5/16] %v619, 128
      %990 = vxpose.xlu0.b32.cont [6/16] %v623, 128
      %991 = vxpose.xlu0.b32.cont [7/16] %v627, 128
      %992 = vxpose.xlu0.b32.cont [8/16] %v631, 128
      %993 = vxpose.xlu0.b32.cont [9/16] %v635, 128
      %994 = vxpose.xlu0.b32.cont [10/16] %v639, 128
      %995 = vxpose.xlu0.b32.cont [11/16] %v643, 128
      %996 = vxpose.xlu0.b32.cont [12/16] %v647, 128
      %997 = vxpose.xlu0.b32.cont [13/16] %v651, 128
      %998 = vxpose.xlu0.b32.cont [14/16] %v655, 128
      %999 = vxpose.xlu0.b32.cont [15/16] %v659, 128
      %1000 = vxpose.xlu0.b32.end [16/16] %v663, 128
      %v1001 = vpop.trf.xlu0
      %v1002 = vpop.trf.xlu0
      %v1003 = vpop.trf.xlu0
      %v1004 = vpop.trf.xlu0
      %v1005 = vpop.trf.xlu0
      %v1006 = vpop.trf.xlu0
      %v1007 = vpop.trf.xlu0
      %v1008 = vpop.trf.xlu0
      %v1009 = vpop.trf.xlu0
      %v1010 = vpop.trf.xlu0
      %v1011 = vpop.trf.xlu0
      %v1012 = vpop.trf.xlu0
      %v1013 = vpop.trf.xlu0
      %v1014 = vpop.trf.xlu0
      %v1015 = vpop.trf.xlu0
      %v1016 = vpop.trf.xlu0
      %1017 = vmatprep.subr.mxu0 0.0
      %1018 = vmatpush1.msra.mxu0 %v873
      %1019 = vmatprep.subr.mxu0 0.0
      %1020 = vmatpush1.msra.mxu0 %v874
      %1021 = vmatprep.subr.mxu0 0.0
      %1022 = vmatpush1.msra.mxu0 %v875
      %1023 = vmatprep.subr.mxu0 0.0
      %1024 = vmatpush1.msra.mxu0 %v876
      %1025 = vmatprep.subr.mxu0 0.0
      %1026 = vmatpush1.msra.mxu0 %v877
      %1027 = vmatprep.subr.mxu0 0.0
      %1028 = vmatpush1.msra.mxu0 %v878
      %1029 = vmatprep.subr.mxu0 0.0
      %1030 = vmatpush1.msra.mxu0 %v879
      %1031 = vmatprep.subr.mxu0 0.0
      %1032 = vmatpush1.msra.mxu0 %v880
      %1033 = vmatprep.subr.mxu0 0.0
      %1034 = vmatpush1.msra.mxu0 %v881
      %1035 = vmatprep.subr.mxu0 0.0
      %1036 = vmatpush1.msra.mxu0 %v882
      %1037 = vmatprep.subr.mxu0 0.0
      %1038 = vmatpush1.msra.mxu0 %v883
      %1039 = vmatprep.subr.mxu0 0.0
      %1040 = vmatpush1.msra.mxu0 %v884
      %1041 = vmatprep.subr.mxu0 0.0
      %1042 = vmatpush1.msra.mxu0 %v885
      %1043 = vmatprep.subr.mxu0 0.0
      %1044 = vmatpush1.msra.mxu0 %v886
      %1045 = vmatprep.subr.mxu0 0.0
      %1046 = vmatpush1.msra.mxu0 %v887
      %1047 = vmatprep.subr.mxu0 0.0
      %1048 = vmatpush1.msra.mxu0 %v888
      %1049 = vmatprep.subr.mxu0 0.0
      %1050 = vmatpush1.msra.mxu0 0.0
      %1051 = vmatprep.subr.mxu0 0.0
      %1052 = vmatpush1.msra.mxu0 0.0
      %1053 = vmatprep.subr.mxu0 0.0
      %1054 = vmatpush1.msra.mxu0 0.0
      %1055 = vmatprep.subr.mxu0 0.0
      %1056 = vmatpush1.msra.mxu0 0.0
      %1057 = vmatprep.subr.mxu0 0.0
      %1058 = vmatpush1.msra.mxu0 0.0
      %1059 = vmatprep.subr.mxu0 0.0
      %1060 = vmatpush1.msra.mxu0 0.0
      %1061 = vmatprep.subr.mxu0 0.0
      %1062 = vmatpush1.msra.mxu0 0.0
      %1063 = vmatprep.subr.mxu0 0.0
      %1064 = vmatpush1.msra.mxu0 0.0
      %1065 = vmatprep.subr.mxu0 0.0
      %1066 = vmatpush1.msra.mxu0 0.0
      %1067 = vmatprep.subr.mxu0 0.0
      %1068 = vmatpush1.msra.mxu0 0.0
      %1069 = vmatprep.subr.mxu0 0.0
      %1070 = vmatpush1.msra.mxu0 0.0
      %1071 = vmatprep.subr.mxu0 0.0
      %1072 = vmatpush1.msra.mxu0 0.0
      %1073 = vmatprep.subr.mxu0 0.0
      %1074 = vmatpush1.msra.mxu0 0.0
      %1075 = vmatprep.subr.mxu0 0.0
      %1076 = vmatpush1.msra.mxu0 0.0
      %1077 = vmatprep.subr.mxu0 0.0
      %1078 = vmatpush1.msra.mxu0 0.0
      %1079 = vmatprep.subr.mxu0 0.0
      %1080 = vmatpush1.msra.mxu0 0.0
      %1081 = vmatprep.mubr.f32.mxu0 0.0
      %1082 = vmatmul.mubr.f32.gmra.mrb[0].mxu0 %v905
      %v1083 = vpop.f32.mrb[0].mxu0
      %v1084 = vadd.f32 0.0, %v1083
      %v1085 = vpop.f32.mrb[0].mxu0
      %1086 = vmatprep.mubr.f32.mxu0 0.0
      %1087 = vmatmul.mubr.f32.gmra.mrb[0].mxu0 %v906
      %v1088 = vpop.f32.mrb[0].mxu0
      %v1089 = vadd.f32 0.0, %v1088
      %v1090 = vpop.f32.mrb[0].mxu0
      %1091 = vmatprep.mubr.f32.mxu0 0.0
      %1092 = vmatmul.mubr.f32.gmra.mrb[0].mxu0 %v907
      %v1093 = vpop.f32.mrb[0].mxu0
      %v1094 = vadd.f32 0.0, %v1093
      %v1095 = vpop.f32.mrb[0].mxu0
      %1096 = vmatprep.mubr.f32.mxu0 0.0
      %1097 = vmatmul.mubr.f32.gmra.mrb[0].mxu0 %v908
      %v1098 = vpop.f32.mrb[0].mxu0
      %v1099 = vadd.f32 0.0, %v1098
      %v1100 = vpop.f32.mrb[0].mxu0
      %1101 = vmatprep.mubr.f32.mxu0 0.0
      %1102 = vmatmul.mubr.f32.gmra.mrb[0].mxu0 %v909
      %v1103 = vpop.f32.mrb[0].mxu0
      %v1104 = vadd.f32 0.0, %v1103
      %v1105 = vpop.f32.mrb[0].mxu0
      %1106 = vmatprep.mubr.f32.mxu0 0.0
      %1107 = vmatmul.mubr.f32.gmra.mrb[0].mxu0 %v910
      %v1108 = vpop.f32.mrb[0].mxu0
      %v1109 = vadd.f32 0.0, %v1108
      %v1110 = vpop.f32.mrb[0].mxu0
      %1111 = vmatprep.mubr.f32.mxu0 0.0
      %1112 = vmatmul.mubr.f32.gmra.mrb[0].mxu0 %v911
      %v1113 = vpop.f32.mrb[0].mxu0
      %v1114 = vadd.f32 0.0, %v1113
      %v1115 = vpop.f32.mrb[0].mxu0
      %1116 = vmatprep.mubr.f32.mxu0 0.0
      %1117 = vmatmul.mubr.f32.gmra.mrb[0].mxu0 %v912
      %v1118 = vpop.f32.mrb[0].mxu0
      %v1119 = vadd.f32 0.0, %v1118
      %v1120 = vpop.f32.mrb[0].mxu0
      %1121 = vmatprep.mubr.f32.mxu0 0.0
      %1122 = vmatmul.mubr.f32.gmra.mrb[0].mxu0 %v913
      %v1123 = vpop.f32.mrb[0].mxu0
      %v1124 = vadd.f32 0.0, %v1123
      %v1125 = vpop.f32.mrb[0].mxu0
      %1126 = vmatprep.mubr.f32.mxu0 0.0
      %1127 = vmatmul.mubr.f32.gmra.mrb[0].mxu0 %v914
      %v1128 = vpop.f32.mrb[0].mxu0
      %v1129 = vadd.f32 0.0, %v1128
      %v1130 = vpop.f32.mrb[0].mxu0
      %1131 = vmatprep.mubr.f32.mxu0 0.0
      %1132 = vmatmul.mubr.f32.gmra.mrb[0].mxu0 %v915
      %v1133 = vpop.f32.mrb[0].mxu0
      %v1134 = vadd.f32 0.0, %v1133
      %v1135 = vpop.f32.mrb[0].mxu0
      %1136 = vmatprep.mubr.f32.mxu0 0.0
      %1137 = vmatmul.mubr.f32.gmra.mrb[0].mxu0 %v916
      %v1138 = vpop.f32.mrb[0].mxu0
      %v1139 = vadd.f32 0.0, %v1138
      %v1140 = vpop.f32.mrb[0].mxu0
      %1141 = vmatprep.mubr.f32.mxu0 0.0
      %1142 = vmatmul.mubr.f32.gmra.mrb[0].mxu0 %v917
      %v1143 = vpop.f32.mrb[0].mxu0
      %v1144 = vadd.f32 0.0, %v1143
      %v1145 = vpop.f32.mrb[0].mxu0
      %1146 = vmatprep.mubr.f32.mxu0 0.0
      %1147 = vmatmul.mubr.f32.gmra.mrb[0].mxu0 %v918
      %v1148 = vpop.f32.mrb[0].mxu0
      %v1149 = vadd.f32 0.0, %v1148
      %v1150 = vpop.f32.mrb[0].mxu0
      %1151 = vmatprep.mubr.f32.mxu0 0.0
      %1152 = vmatmul.mubr.f32.gmra.mrb[0].mxu0 %v919
      %v1153 = vpop.f32.mrb[0].mxu0
      %v1154 = vadd.f32 0.0, %v1153
      %v1155 = vpop.f32.mrb[0].mxu0
      %1156 = vmatprep.mubr.f32.mxu0 0.0
      %1157 = vmatmul.mubr.f32.gmra.mrb[0].mxu0 %v920
      %v1158 = vpop.f32.mrb[0].mxu0
      %v1159 = vadd.f32 0.0, %v1158
      %v1160 = vpop.f32.mrb[0].mxu0
      %1161 = vmatprep.mubr.f32.mxu0 0.0
      %1162 = vmatmul.mubr.f32.gmra.mrb[0].mxu0 %v937
      %v1163 = vpop.f32.mrb[0].mxu0
      %v1164 = vadd.f32 0.0, %v1163
      %v1165 = vpop.f32.mrb[0].mxu0
      %1166 = vmatprep.mubr.f32.mxu0 0.0
      %1167 = vmatmul.mubr.f32.gmra.mrb[0].mxu0 %v938
      %v1168 = vpop.f32.mrb[0].mxu0
      %v1169 = vadd.f32 0.0, %v1168
      %v1170 = vpop.f32.mrb[0].mxu0
      %1171 = vmatprep.mubr.f32.mxu0 0.0
      %1172 = vmatmul.mubr.f32.gmra.mrb[0].mxu0 %v939
      %v1173 = vpop.f32.mrb[0].mxu0
      %v1174 = vadd.f32 0.0, %v1173
      %v1175 = vpop.f32.mrb[0].mxu0
      %1176 = vmatprep.mubr.f32.mxu0 0.0
      %1177 = vmatmul.mubr.f32.gmra.mrb[0].mxu0 %v940
      %v1178 = vpop.f32.mrb[0].mxu0
      %v1179 = vadd.f32 0.0, %v1178
      %v1180 = vpop.f32.mrb[0].mxu0
      %1181 = vmatprep.mubr.f32.mxu0 0.0
      %1182 = vmatmul.mubr.f32.gmra.mrb[0].mxu0 %v941
      %v1183 = vpop.f32.mrb[0].mxu0
      %v1184 = vadd.f32 0.0, %v1183
      %v1185 = vpop.f32.mrb[0].mxu0
      %1186 = vmatprep.mubr.f32.mxu0 0.0
      %1187 = vmatmul.mubr.f32.gmra.mrb[0].mxu0 %v942
      %v1188 = vpop.f32.mrb[0].mxu0
      %v1189 = vadd.f32 0.0, %v1188
      %v1190 = vpop.f32.mrb[0].mxu0
      %1191 = vmatprep.mubr.f32.mxu0 0.0
      %1192 = vmatmul.mubr.f32.gmra.mrb[0].mxu0 %v943
      %v1193 = vpop.f32.mrb[0].mxu0
      %v1194 = vadd.f32 0.0, %v1193
      %v1195 = vpop.f32.mrb[0].mxu0
      %1196 = vmatprep.mubr.f32.mxu0 0.0
      %1197 = vmatmul.mubr.f32.gmra.mrb[0].mxu0 %v944
      %v1198 = vpop.f32.mrb[0].mxu0
      %v1199 = vadd.f32 0.0, %v1198
      %v1200 = vpop.f32.mrb[0].mxu0
      %1201 = vmatprep.mubr.f32.mxu0 0.0
      %1202 = vmatmul.mubr.f32.gmra.mrb[0].mxu0 %v945
      %v1203 = vpop.f32.mrb[0].mxu0
      %v1204 = vadd.f32 0.0, %v1203
      %v1205 = vpop.f32.mrb[0].mxu0
      %1206 = vmatprep.mubr.f32.mxu0 0.0
      %1207 = vmatmul.mubr.f32.gmra.mrb[0].mxu0 %v946
      %v1208 = vpop.f32.mrb[0].mxu0
      %v1209 = vadd.f32 0.0, %v1208
      %v1210 = vpop.f32.mrb[0].mxu0
      %1211 = vmatprep.mubr.f32.mxu0 0.0
      %1212 = vmatmul.mubr.f32.gmra.mrb[0].mxu0 %v947
      %v1213 = vpop.f32.mrb[0].mxu0
      %v1214 = vadd.f32 0.0, %v1213
      %v1215 = vpop.f32.mrb[0].mxu0
      %1216 = vmatprep.mubr.f32.mxu0 0.0
      %1217 = vmatmul.mubr.f32.gmra.mrb[0].mxu0 %v948
      %v1218 = vpop.f32.mrb[0].mxu0
      %v1219 = vadd.f32 0.0, %v1218
      %v1220 = vpop.f32.mrb[0].mxu0
      %1221 = vmatprep.mubr.f32.mxu0 0.0
      %1222 = vmatmul.mubr.f32.gmra.mrb[0].mxu0 %v949
      %v1223 = vpop.f32.mrb[0].mxu0
      %v1224 = vadd.f32 0.0, %v1223
      %v1225 = vpop.f32.mrb[0].mxu0
      %1226 = vmatprep.mubr.f32.mxu0 0.0
      %1227 = vmatmul.mubr.f32.gmra.mrb[0].mxu0 %v950
      %v1228 = vpop.f32.mrb[0].mxu0
      %v1229 = vadd.f32 0.0, %v1228
      %v1230 = vpop.f32.mrb[0].mxu0
      %1231 = vmatprep.mubr.f32.mxu0 0.0
      %1232 = vmatmul.mubr.f32.gmra.mrb[0].mxu0 %v951
      %v1233 = vpop.f32.mrb[0].mxu0
      %v1234 = vadd.f32 0.0, %v1233
      %v1235 = vpop.f32.mrb[0].mxu0
      %1236 = vmatprep.mubr.f32.mxu0 0.0
      %1237 = vmatmul.mubr.f32.gmra.mrb[0].mxu0 %v952
      %v1238 = vpop.f32.mrb[0].mxu0
      %v1239 = vadd.f32 0.0, %v1238
      %v1240 = vpop.f32.mrb[0].mxu0
      %1241 = vmatprep.mubr.f32.mxu0 0.0
      %1242 = vmatmul.mubr.f32.gmra.mrb[0].mxu0 %v969
      %v1243 = vpop.f32.mrb[0].mxu0
      %v1244 = vadd.f32 0.0, %v1243
      %v1245 = vpop.f32.mrb[0].mxu0
      %1246 = vmatprep.mubr.f32.mxu0 0.0
      %1247 = vmatmul.mubr.f32.gmra.mrb[0].mxu0 %v970
      %v1248 = vpop.f32.mrb[0].mxu0
      %v1249 = vadd.f32 0.0, %v1248
      %v1250 = vpop.f32.mrb[0].mxu0
      %1251 = vmatprep.mubr.f32.mxu0 0.0
      %1252 = vmatmul.mubr.f32.gmra.mrb[0].mxu0 %v971
      %v1253 = vpop.f32.mrb[0].mxu0
      %v1254 = vadd.f32 0.0, %v1253
      %v1255 = vpop.f32.mrb[0].mxu0
      %1256 = vmatprep.mubr.f32.mxu0 0.0
      %1257 = vmatmul.mubr.f32.gmra.mrb[0].mxu0 %v972
      %v1258 = vpop.f32.mrb[0].mxu0
      %v1259 = vadd.f32 0.0, %v1258
      %v1260 = vpop.f32.mrb[0].mxu0
      %1261 = vmatprep.mubr.f32.mxu0 0.0
      %1262 = vmatmul.mubr.f32.gmra.mrb[0].mxu0 %v973
      %v1263 = vpop.f32.mrb[0].mxu0
      %v1264 = vadd.f32 0.0, %v1263
      %v1265 = vpop.f32.mrb[0].mxu0
      %1266 = vmatprep.mubr.f32.mxu0 0.0
      %1267 = vmatmul.mubr.f32.gmra.mrb[0].mxu0 %v974
      %v1268 = vpop.f32.mrb[0].mxu0
      %v1269 = vadd.f32 0.0, %v1268
      %v1270 = vpop.f32.mrb[0].mxu0
      %1271 = vmatprep.mubr.f32.mxu0 0.0
      %1272 = vmatmul.mubr.f32.gmra.mrb[0].mxu0 %v975
      %v1273 = vpop.f32.mrb[0].mxu0
      %v1274 = vadd.f32 0.0, %v1273
      %v1275 = vpop.f32.mrb[0].mxu0
      %1276 = vmatprep.mubr.f32.mxu0 0.0
      %1277 = vmatmul.mubr.f32.gmra.mrb[0].mxu0 %v976
      %v1278 = vpop.f32.mrb[0].mxu0
      %v1279 = vadd.f32 0.0, %v1278
      %v1280 = vpop.f32.mrb[0].mxu0
      %1281 = vmatprep.mubr.f32.mxu0 0.0
      %1282 = vmatmul.mubr.f32.gmra.mrb[0].mxu0 %v977
      %v1283 = vpop.f32.mrb[0].mxu0
      %v1284 = vadd.f32 0.0, %v1283
      %v1285 = vpop.f32.mrb[0].mxu0
      %1286 = vmatprep.mubr.f32.mxu0 0.0
      %1287 = vmatmul.mubr.f32.gmra.mrb[0].mxu0 %v978
      %v1288 = vpop.f32.mrb[0].mxu0
      %v1289 = vadd.f32 0.0, %v1288
      %v1290 = vpop.f32.mrb[0].mxu0
      %1291 = vmatprep.mubr.f32.mxu0 0.0
      %1292 = vmatmul.mubr.f32.gmra.mrb[0].mxu0 %v979
      %v1293 = vpop.f32.mrb[0].mxu0
      %v1294 = vadd.f32 0.0, %v1293
      %v1295 = vpop.f32.mrb[0].mxu0
      %1296 = vmatprep.mubr.f32.mxu0 0.0
      %1297 = vmatmul.mubr.f32.gmra.mrb[0].mxu0 %v980
      %v1298 = vpop.f32.mrb[0].mxu0
      %v1299 = vadd.f32 0.0, %v1298
      %v1300 = vpop.f32.mrb[0].mxu0
      %1301 = vmatprep.mubr.f32.mxu0 0.0
      %1302 = vmatmul.mubr.f32.gmra.mrb[0].mxu0 %v981
      %v1303 = vpop.f32.mrb[0].mxu0
      %v1304 = vadd.f32 0.0, %v1303
      %v1305 = vpop.f32.mrb[0].mxu0
      %1306 = vmatprep.mubr.f32.mxu0 0.0
      %1307 = vmatmul.mubr.f32.gmra.mrb[0].mxu0 %v982
      %v1308 = vpop.f32.mrb[0].mxu0
      %v1309 = vadd.f32 0.0, %v1308
      %v1310 = vpop.f32.mrb[0].mxu0
      %1311 = vmatprep.mubr.f32.mxu0 0.0
      %1312 = vmatmul.mubr.f32.gmra.mrb[0].mxu0 %v983
      %v1313 = vpop.f32.mrb[0].mxu0
      %v1314 = vadd.f32 0.0, %v1313
      %v1315 = vpop.f32.mrb[0].mxu0
      %1316 = vmatprep.mubr.f32.mxu0 0.0
      %1317 = vmatmul.mubr.f32.gmra.mrb[0].mxu0 %v984
      %v1318 = vpop.f32.mrb[0].mxu0
      %v1319 = vadd.f32 0.0, %v1318
      %v1320 = vpop.f32.mrb[0].mxu0
      %1321 = vmatprep.mubr.f32.mxu0 0.0
      %1322 = vmatmul.mubr.f32.gmra.mrb[0].mxu0 %v1001
      %v1323 = vpop.f32.mrb[0].mxu0
      %v1324 = vadd.f32 0.0, %v1323
      %v1325 = vpop.f32.mrb[0].mxu0
      %1326 = vmatprep.mubr.f32.mxu0 0.0
      %1327 = vmatmul.mubr.f32.gmra.mrb[0].mxu0 %v1002
      %v1328 = vpop.f32.mrb[0].mxu0
      %v1329 = vadd.f32 0.0, %v1328
      %v1330 = vpop.f32.mrb[0].mxu0
      %1331 = vmatprep.mubr.f32.mxu0 0.0
      %1332 = vmatmul.mubr.f32.gmra.mrb[0].mxu0 %v1003
      %v1333 = vpop.f32.mrb[0].mxu0
      %v1334 = vadd.f32 0.0, %v1333
      %v1335 = vpop.f32.mrb[0].mxu0
      %1336 = vmatprep.mubr.f32.mxu0 0.0
      %1337 = vmatmul.mubr.f32.gmra.mrb[0].mxu0 %v1004
      %v1338 = vpop.f32.mrb[0].mxu0
      %v1339 = vadd.f32 0.0, %v1338
      %v1340 = vpop.f32.mrb[0].mxu0
      %1341 = vmatprep.mubr.f32.mxu0 0.0
      %1342 = vmatmul.mubr.f32.gmra.mrb[0].mxu0 %v1005
      %v1343 = vpop.f32.mrb[0].mxu0
      %v1344 = vadd.f32 0.0, %v1343
      %v1345 = vpop.f32.mrb[0].mxu0
      %1346 = vmatprep.mubr.f32.mxu0 0.0
      %1347 = vmatmul.mubr.f32.gmra.mrb[0].mxu0 %v1006
      %v1348 = vpop.f32.mrb[0].mxu0
      %v1349 = vadd.f32 0.0, %v1348
      %v1350 = vpop.f32.mrb[0].mxu0
      %1351 = vmatprep.mubr.f32.mxu0 0.0
      %1352 = vmatmul.mubr.f32.gmra.mrb[0].mxu0 %v1007
      %v1353 = vpop.f32.mrb[0].mxu0
      %v1354 = vadd.f32 0.0, %v1353
      %v1355 = vpop.f32.mrb[0].mxu0
      %1356 = vmatprep.mubr.f32.mxu0 0.0
      %1357 = vmatmul.mubr.f32.gmra.mrb[0].mxu0 %v1008
      %v1358 = vpop.f32.mrb[0].mxu0
      %v1359 = vadd.f32 0.0, %v1358
      %v1360 = vpop.f32.mrb[0].mxu0
      %1361 = vmatprep.mubr.f32.mxu0 0.0
      %1362 = vmatmul.mubr.f32.gmra.mrb[0].mxu0 %v1009
      %v1363 = vpop.f32.mrb[0].mxu0
      %v1364 = vadd.f32 0.0, %v1363
      %v1365 = vpop.f32.mrb[0].mxu0
      %1366 = vmatprep.mubr.f32.mxu0 0.0
      %1367 = vmatmul.mubr.f32.gmra.mrb[0].mxu0 %v1010
      %v1368 = vpop.f32.mrb[0].mxu0
      %v1369 = vadd.f32 0.0, %v1368
      %v1370 = vpop.f32.mrb[0].mxu0
      %1371 = vmatprep.mubr.f32.mxu0 0.0
      %1372 = vmatmul.mubr.f32.gmra.mrb[0].mxu0 %v1011
      %v1373 = vpop.f32.mrb[0].mxu0
      %v1374 = vadd.f32 0.0, %v1373
      %v1375 = vpop.f32.mrb[0].mxu0
      %1376 = vmatprep.mubr.f32.mxu0 0.0
      %1377 = vmatmul.mubr.f32.gmra.mrb[0].mxu0 %v1012
      %v1378 = vpop.f32.mrb[0].mxu0
      %v1379 = vadd.f32 0.0, %v1378
      %v1380 = vpop.f32.mrb[0].mxu0
      %1381 = vmatprep.mubr.f32.mxu0 0.0
      %1382 = vmatmul.mubr.f32.gmra.mrb[0].mxu0 %v1013
      %v1383 = vpop.f32.mrb[0].mxu0
      %v1384 = vadd.f32 0.0, %v1383
      %v1385 = vpop.f32.mrb[0].mxu0
      %1386 = vmatprep.mubr.f32.mxu0 0.0
      %1387 = vmatmul.mubr.f32.gmra.mrb[0].mxu0 %v1014
      %v1388 = vpop.f32.mrb[0].mxu0
      %v1389 = vadd.f32 0.0, %v1388
      %v1390 = vpop.f32.mrb[0].mxu0
      %1391 = vmatprep.mubr.f32.mxu0 0.0
      %1392 = vmatmul.mubr.f32.gmra.mrb[0].mxu0 %v1015
      %v1393 = vpop.f32.mrb[0].mxu0
      %v1394 = vadd.f32 0.0, %v1393
      %v1395 = vpop.f32.mrb[0].mxu0
      %1396 = vmatprep.mubr.f32.mxu0 0.0
      %1397 = vmatmul.mubr.f32.gmra.mrb[0].mxu0 %v1016
      %v1398 = vpop.f32.mrb[0].mxu0
      %v1399 = vadd.f32 0.0, %v1398
      %v1400 = vpop.f32.mrb[0].mxu0
      %1401 = vdwg.mxu0
      %v1402 = vld [vmem:[%s4] sm:$0xff]
      %v1403 = vld [vmem:[%s4 + $0x8] sm:$0xff]
      %v1404 = vld [vmem:[%s4 + $0x10] sm:$0xff]
      %v1405 = vld [vmem:[%s4 + $0x18] sm:$0xff]
      %v1406 = vld [vmem:[%s4 + $0x20] sm:$0xff]
      %v1407 = vld [vmem:[%s4 + $0x28] sm:$0xff]
      %v1408 = vld [vmem:[%s4 + $0x30] sm:$0xff]
      %v1409 = vld [vmem:[%s4 + $0x38] sm:$0xff]
      %v1410 = vld [vmem:[%s4 + $0x40] sm:$0xff]
      %v1411 = vld [vmem:[%s4 + $0x48] sm:$0xff]
      %v1412 = vld [vmem:[%s4 + $0x50] sm:$0xff]
      %v1413 = vld [vmem:[%s4 + $0x58] sm:$0xff]
      %v1414 = vld [vmem:[%s4 + $0x60] sm:$0xff]
      %v1415 = vld [vmem:[%s4 + $0x68] sm:$0xff]
      %v1416 = vld [vmem:[%s4 + $0x70] sm:$0xff]
      %v1417 = vld [vmem:[%s4 + $0x78] sm:$0xff]
      %1418 = vxpose.xlu0.b32.start [1/16] %v809, 128
      %1419 = vxpose.xlu0.b32.cont [2/16] %v813, 128
      %1420 = vxpose.xlu0.b32.cont [3/16] %v817, 128
      %1421 = vxpose.xlu0.b32.cont [4/16] %v821, 128
      %1422 = vxpose.xlu0.b32.cont [5/16] %v825, 128
      %1423 = vxpose.xlu0.b32.cont [6/16] %v829, 128
      %1424 = vxpose.xlu0.b32.cont [7/16] %v833, 128
      %1425 = vxpose.xlu0.b32.cont [8/16] %v837, 128
      %1426 = vxpose.xlu0.b32.cont [9/16] %v841, 128
      %1427 = vxpose.xlu0.b32.cont [10/16] %v845, 128
      %1428 = vxpose.xlu0.b32.cont [11/16] %v849, 128
      %1429 = vxpose.xlu0.b32.cont [12/16] %v853, 128
      %1430 = vxpose.xlu0.b32.cont [13/16] %v857, 128
      %1431 = vxpose.xlu0.b32.cont [14/16] %v861, 128
      %1432 = vxpose.xlu0.b32.cont [15/16] %v865, 128
      %1433 = vxpose.xlu0.b32.end [16/16] %v869, 128
      %v1434 = vpop.trf.xlu0
      %v1435 = vpop.trf.xlu0
      %v1436 = vpop.trf.xlu0
      %v1437 = vpop.trf.xlu0
      %v1438 = vpop.trf.xlu0
      %v1439 = vpop.trf.xlu0
      %v1440 = vpop.trf.xlu0
      %v1441 = vpop.trf.xlu0
      %v1442 = vpop.trf.xlu0
      %v1443 = vpop.trf.xlu0
      %v1444 = vpop.trf.xlu0
      %v1445 = vpop.trf.xlu0
      %v1446 = vpop.trf.xlu0
      %v1447 = vpop.trf.xlu0
      %v1448 = vpop.trf.xlu0
      %v1449 = vpop.trf.xlu0
      %1450 = vxpose.xlu0.b32.start [1/16] %v810, 128
      %1451 = vxpose.xlu0.b32.cont [2/16] %v814, 128
      %1452 = vxpose.xlu0.b32.cont [3/16] %v818, 128
      %1453 = vxpose.xlu0.b32.cont [4/16] %v822, 128
      %1454 = vxpose.xlu0.b32.cont [5/16] %v826, 128
      %1455 = vxpose.xlu0.b32.cont [6/16] %v830, 128
      %1456 = vxpose.xlu0.b32.cont [7/16] %v834, 128
      %1457 = vxpose.xlu0.b32.cont [8/16] %v838, 128
      %1458 = vxpose.xlu0.b32.cont [9/16] %v842, 128
      %1459 = vxpose.xlu0.b32.cont [10/16] %v846, 128
      %1460 = vxpose.xlu0.b32.cont [11/16] %v850, 128
      %1461 = vxpose.xlu0.b32.cont [12/16] %v854, 128
      %1462 = vxpose.xlu0.b32.cont [13/16] %v858, 128
      %1463 = vxpose.xlu0.b32.cont [14/16] %v862, 128
      %1464 = vxpose.xlu0.b32.cont [15/16] %v866, 128
      %1465 = vxpose.xlu0.b32.end [16/16] %v870, 128
      %v1466 = vpop.trf.xlu0
      %v1467 = vpop.trf.xlu0
      %v1468 = vpop.trf.xlu0
      %v1469 = vpop.trf.xlu0
      %v1470 = vpop.trf.xlu0
      %v1471 = vpop.trf.xlu0
      %v1472 = vpop.trf.xlu0
      %v1473 = vpop.trf.xlu0
      %v1474 = vpop.trf.xlu0
      %v1475 = vpop.trf.xlu0
      %v1476 = vpop.trf.xlu0
      %v1477 = vpop.trf.xlu0
      %v1478 = vpop.trf.xlu0
      %v1479 = vpop.trf.xlu0
      %v1480 = vpop.trf.xlu0
      %v1481 = vpop.trf.xlu0
      %1482 = vxpose.xlu0.b32.start [1/16] %v811, 128
      %1483 = vxpose.xlu0.b32.cont [2/16] %v815, 128
      %1484 = vxpose.xlu0.b32.cont [3/16] %v819, 128
      %1485 = vxpose.xlu0.b32.cont [4/16] %v823, 128
      %1486 = vxpose.xlu0.b32.cont [5/16] %v827, 128
      %1487 = vxpose.xlu0.b32.cont [6/16] %v831, 128
      %1488 = vxpose.xlu0.b32.cont [7/16] %v835, 128
      %1489 = vxpose.xlu0.b32.cont [8/16] %v839, 128
      %1490 = vxpose.xlu0.b32.cont [9/16] %v843, 128
      %1491 = vxpose.xlu0.b32.cont [10/16] %v847, 128
      %1492 = vxpose.xlu0.b32.cont [11/16] %v851, 128
      %1493 = vxpose.xlu0.b32.cont [12/16] %v855, 128
      %1494 = vxpose.xlu0.b32.cont [13/16] %v859, 128
      %1495 = vxpose.xlu0.b32.cont [14/16] %v863, 128
      %1496 = vxpose.xlu0.b32.cont [15/16] %v867, 128
      %1497 = vxpose.xlu0.b32.end [16/16] %v871, 128
      %v1498 = vpop.trf.xlu0
      %v1499 = vpop.trf.xlu0
      %v1500 = vpop.trf.xlu0
      %v1501 = vpop.trf.xlu0
      %v1502 = vpop.trf.xlu0
      %v1503 = vpop.trf.xlu0
      %v1504 = vpop.trf.xlu0
      %v1505 = vpop.trf.xlu0
      %v1506 = vpop.trf.xlu0
      %v1507 = vpop.trf.xlu0
      %v1508 = vpop.trf.xlu0
      %v1509 = vpop.trf.xlu0
      %v1510 = vpop.trf.xlu0
      %v1511 = vpop.trf.xlu0
      %v1512 = vpop.trf.xlu0
      %v1513 = vpop.trf.xlu0
      %1514 = vxpose.xlu0.b32.start [1/16] %v812, 128
      %1515 = vxpose.xlu0.b32.cont [2/16] %v816, 128
      %1516 = vxpose.xlu0.b32.cont [3/16] %v820, 128
      %1517 = vxpose.xlu0.b32.cont [4/16] %v824, 128
      %1518 = vxpose.xlu0.b32.cont [5/16] %v828, 128
      %1519 = vxpose.xlu0.b32.cont [6/16] %v832, 128
      %1520 = vxpose.xlu0.b32.cont [7/16] %v836, 128
      %1521 = vxpose.xlu0.b32.cont [8/16] %v840, 128
      %1522 = vxpose.xlu0.b32.cont [9/16] %v844, 128
      %1523 = vxpose.xlu0.b32.cont [10/16] %v848, 128
      %1524 = vxpose.xlu0.b32.cont [11/16] %v852, 128
      %1525 = vxpose.xlu0.b32.cont [12/16] %v856, 128
      %1526 = vxpose.xlu0.b32.cont [13/16] %v860, 128
      %1527 = vxpose.xlu0.b32.cont [14/16] %v864, 128
      %1528 = vxpose.xlu0.b32.cont [15/16] %v868, 128
      %1529 = vxpose.xlu0.b32.end [16/16] %v872, 128
      %v1530 = vpop.trf.xlu0
      %v1531 = vpop.trf.xlu0
      %v1532 = vpop.trf.xlu0
      %v1533 = vpop.trf.xlu0
      %v1534 = vpop.trf.xlu0
      %v1535 = vpop.trf.xlu0
      %v1536 = vpop.trf.xlu0
      %v1537 = vpop.trf.xlu0
      %v1538 = vpop.trf.xlu0
      %v1539 = vpop.trf.xlu0
      %v1540 = vpop.trf.xlu0
      %v1541 = vpop.trf.xlu0
      %v1542 = vpop.trf.xlu0
      %v1543 = vpop.trf.xlu0
      %v1544 = vpop.trf.xlu0
      %v1545 = vpop.trf.xlu0
      %1546 = vmatprep.subr.mxu0 0.0
      %1547 = vmatpush1.msra.mxu0 %v1402
      %1548 = vmatprep.subr.mxu0 0.0
      %1549 = vmatpush1.msra.mxu0 %v1403
      %1550 = vmatprep.subr.mxu0 0.0
      %1551 = vmatpush1.msra.mxu0 %v1404
      %1552 = vmatprep.subr.mxu0 0.0
      %1553 = vmatpush1.msra.mxu0 %v1405
      %1554 = vmatprep.subr.mxu0 0.0
      %1555 = vmatpush1.msra.mxu0 %v1406
      %1556 = vmatprep.subr.mxu0 0.0
      %1557 = vmatpush1.msra.mxu0 %v1407
      %1558 = vmatprep.subr.mxu0 0.0
      %1559 = vmatpush1.msra.mxu0 %v1408
      %1560 = vmatprep.subr.mxu0 0.0
      %1561 = vmatpush1.msra.mxu0 %v1409
      %1562 = vmatprep.subr.mxu0 0.0
      %1563 = vmatpush1.msra.mxu0 %v1410
      %1564 = vmatprep.subr.mxu0 0.0
      %1565 = vmatpush1.msra.mxu0 %v1411
      %1566 = vmatprep.subr.mxu0 0.0
      %1567 = vmatpush1.msra.mxu0 %v1412
      %1568 = vmatprep.subr.mxu0 0.0
      %1569 = vmatpush1.msra.mxu0 %v1413
      %1570 = vmatprep.subr.mxu0 0.0
      %1571 = vmatpush1.msra.mxu0 %v1414
      %1572 = vmatprep.subr.mxu0 0.0
      %1573 = vmatpush1.msra.mxu0 %v1415
      %1574 = vmatprep.subr.mxu0 0.0
      %1575 = vmatpush1.msra.mxu0 %v1416
      %1576 = vmatprep.subr.mxu0 0.0
      %1577 = vmatpush1.msra.mxu0 %v1417
      %1578 = vmatprep.subr.mxu0 0.0
      %1579 = vmatpush1.msra.mxu0 0.0
      %1580 = vmatprep.subr.mxu0 0.0
      %1581 = vmatpush1.msra.mxu0 0.0
      %1582 = vmatprep.subr.mxu0 0.0
      %1583 = vmatpush1.msra.mxu0 0.0
      %1584 = vmatprep.subr.mxu0 0.0
      %1585 = vmatpush1.msra.mxu0 0.0
      %1586 = vmatprep.subr.mxu0 0.0
      %1587 = vmatpush1.msra.mxu0 0.0
      %1588 = vmatprep.subr.mxu0 0.0
      %1589 = vmatpush1.msra.mxu0 0.0
      %1590 = vmatprep.subr.mxu0 0.0
      %1591 = vmatpush1.msra.mxu0 0.0
      %1592 = vmatprep.subr.mxu0 0.0
      %1593 = vmatpush1.msra.mxu0 0.0
      %1594 = vmatprep.subr.mxu0 0.0
      %1595 = vmatpush1.msra.mxu0 0.0
      %1596 = vmatprep.subr.mxu0 0.0
      %1597 = vmatpush1.msra.mxu0 0.0
      %1598 = vmatprep.subr.mxu0 0.0
      %1599 = vmatpush1.msra.mxu0 0.0
      %1600 = vmatprep.subr.mxu0 0.0
      %1601 = vmatpush1.msra.mxu0 0.0
      %1602 = vmatprep.subr.mxu0 0.0
      %1603 = vmatpush1.msra.mxu0 0.0
      %1604 = vmatprep.subr.mxu0 0.0
      %1605 = vmatpush1.msra.mxu0 0.0
      %1606 = vmatprep.subr.mxu0 0.0
      %1607 = vmatpush1.msra.mxu0 0.0
      %1608 = vmatprep.subr.mxu0 0.0
      %1609 = vmatpush1.msra.mxu0 0.0
      %1610 = vmatprep.mubr.f32.mxu0 0.0
      %1611 = vmatmul.mubr.f32.gmra.mrb[0].mxu0 %v1434
      %v1612 = vpop.f32.mrb[0].mxu0
      %v1613 = vadd.f32 0.0, %v1612
      %v1614 = vpop.f32.mrb[0].mxu0
      %1615 = vmatprep.mubr.f32.mxu0 0.0
      %1616 = vmatmul.mubr.f32.gmra.mrb[0].mxu0 %v1435
      %v1617 = vpop.f32.mrb[0].mxu0
      %v1618 = vadd.f32 0.0, %v1617
      %v1619 = vpop.f32.mrb[0].mxu0
      %1620 = vmatprep.mubr.f32.mxu0 0.0
      %1621 = vmatmul.mubr.f32.gmra.mrb[0].mxu0 %v1436
      %v1622 = vpop.f32.mrb[0].mxu0
      %v1623 = vadd.f32 0.0, %v1622
      %v1624 = vpop.f32.mrb[0].mxu0
      %1625 = vmatprep.mubr.f32.mxu0 0.0
      %1626 = vmatmul.mubr.f32.gmra.mrb[0].mxu0 %v1437
      %v1627 = vpop.f32.mrb[0].mxu0
      %v1628 = vadd.f32 0.0, %v1627
      %v1629 = vpop.f32.mrb[0].mxu0
      %1630 = vmatprep.mubr.f32.mxu0 0.0
      %1631 = vmatmul.mubr.f32.gmra.mrb[0].mxu0 %v1438
      %v1632 = vpop.f32.mrb[0].mxu0
      %v1633 = vadd.f32 0.0, %v1632
      %v1634 = vpop.f32.mrb[0].mxu0
      %1635 = vmatprep.mubr.f32.mxu0 0.0
      %1636 = vmatmul.mubr.f32.gmra.mrb[0].mxu0 %v1439
      %v1637 = vpop.f32.mrb[0].mxu0
      %v1638 = vadd.f32 0.0, %v1637
      %v1639 = vpop.f32.mrb[0].mxu0
      %1640 = vmatprep.mubr.f32.mxu0 0.0
      %1641 = vmatmul.mubr.f32.gmra.mrb[0].mxu0 %v1440
      %v1642 = vpop.f32.mrb[0].mxu0
      %v1643 = vadd.f32 0.0, %v1642
      %v1644 = vpop.f32.mrb[0].mxu0
      %1645 = vmatprep.mubr.f32.mxu0 0.0
      %1646 = vmatmul.mubr.f32.gmra.mrb[0].mxu0 %v1441
      %v1647 = vpop.f32.mrb[0].mxu0
      %v1648 = vadd.f32 0.0, %v1647
      %v1649 = vpop.f32.mrb[0].mxu0
      %1650 = vmatprep.mubr.f32.mxu0 0.0
      %1651 = vmatmul.mubr.f32.gmra.mrb[0].mxu0 %v1442
      %v1652 = vpop.f32.mrb[0].mxu0
      %v1653 = vadd.f32 0.0, %v1652
      %v1654 = vpop.f32.mrb[0].mxu0
      %1655 = vmatprep.mubr.f32.mxu0 0.0
      %1656 = vmatmul.mubr.f32.gmra.mrb[0].mxu0 %v1443
      %v1657 = vpop.f32.mrb[0].mxu0
      %v1658 = vadd.f32 0.0, %v1657
      %v1659 = vpop.f32.mrb[0].mxu0
      %1660 = vmatprep.mubr.f32.mxu0 0.0
      %1661 = vmatmul.mubr.f32.gmra.mrb[0].mxu0 %v1444
      %v1662 = vpop.f32.mrb[0].mxu0
      %v1663 = vadd.f32 0.0, %v1662
      %v1664 = vpop.f32.mrb[0].mxu0
      %1665 = vmatprep.mubr.f32.mxu0 0.0
      %1666 = vmatmul.mubr.f32.gmra.mrb[0].mxu0 %v1445
      %v1667 = vpop.f32.mrb[0].mxu0
      %v1668 = vadd.f32 0.0, %v1667
      %v1669 = vpop.f32.mrb[0].mxu0
      %1670 = vmatprep.mubr.f32.mxu0 0.0
      %1671 = vmatmul.mubr.f32.gmra.mrb[0].mxu0 %v1446
      %v1672 = vpop.f32.mrb[0].mxu0
      %v1673 = vadd.f32 0.0, %v1672
      %v1674 = vpop.f32.mrb[0].mxu0
      %1675 = vmatprep.mubr.f32.mxu0 0.0
      %1676 = vmatmul.mubr.f32.gmra.mrb[0].mxu0 %v1447
      %v1677 = vpop.f32.mrb[0].mxu0
      %v1678 = vadd.f32 0.0, %v1677
      %v1679 = vpop.f32.mrb[0].mxu0
      %1680 = vmatprep.mubr.f32.mxu0 0.0
      %1681 = vmatmul.mubr.f32.gmra.mrb[0].mxu0 %v1448
      %v1682 = vpop.f32.mrb[0].mxu0
      %v1683 = vadd.f32 0.0, %v1682
      %v1684 = vpop.f32.mrb[0].mxu0
      %1685 = vmatprep.mubr.f32.mxu0 0.0
      %1686 = vmatmul.mubr.f32.gmra.mrb[0].mxu0 %v1449
      %v1687 = vpop.f32.mrb[0].mxu0
      %v1688 = vadd.f32 0.0, %v1687
      %v1689 = vpop.f32.mrb[0].mxu0
      %1690 = vmatprep.mubr.f32.mxu0 0.0
      %1691 = vmatmul.mubr.f32.gmra.mrb[0].mxu0 %v1466
      %v1692 = vpop.f32.mrb[0].mxu0
      %v1693 = vadd.f32 0.0, %v1692
      %v1694 = vpop.f32.mrb[0].mxu0
      %1695 = vmatprep.mubr.f32.mxu0 0.0
      %1696 = vmatmul.mubr.f32.gmra.mrb[0].mxu0 %v1467
      %v1697 = vpop.f32.mrb[0].mxu0
      %v1698 = vadd.f32 0.0, %v1697
      %v1699 = vpop.f32.mrb[0].mxu0
      %1700 = vmatprep.mubr.f32.mxu0 0.0
      %1701 = vmatmul.mubr.f32.gmra.mrb[0].mxu0 %v1468
      %v1702 = vpop.f32.mrb[0].mxu0
      %v1703 = vadd.f32 0.0, %v1702
      %v1704 = vpop.f32.mrb[0].mxu0
      %1705 = vmatprep.mubr.f32.mxu0 0.0
      %1706 = vmatmul.mubr.f32.gmra.mrb[0].mxu0 %v1469
      %v1707 = vpop.f32.mrb[0].mxu0
      %v1708 = vadd.f32 0.0, %v1707
      %v1709 = vpop.f32.mrb[0].mxu0
      %1710 = vmatprep.mubr.f32.mxu0 0.0
      %1711 = vmatmul.mubr.f32.gmra.mrb[0].mxu0 %v1470
      %v1712 = vpop.f32.mrb[0].mxu0
      %v1713 = vadd.f32 0.0, %v1712
      %v1714 = vpop.f32.mrb[0].mxu0
      %1715 = vmatprep.mubr.f32.mxu0 0.0
      %1716 = vmatmul.mubr.f32.gmra.mrb[0].mxu0 %v1471
      %v1717 = vpop.f32.mrb[0].mxu0
      %v1718 = vadd.f32 0.0, %v1717
      %v1719 = vpop.f32.mrb[0].mxu0
      %1720 = vmatprep.mubr.f32.mxu0 0.0
      %1721 = vmatmul.mubr.f32.gmra.mrb[0].mxu0 %v1472
      %v1722 = vpop.f32.mrb[0].mxu0
      %v1723 = vadd.f32 0.0, %v1722
      %v1724 = vpop.f32.mrb[0].mxu0
      %1725 = vmatprep.mubr.f32.mxu0 0.0
      %1726 = vmatmul.mubr.f32.gmra.mrb[0].mxu0 %v1473
      %v1727 = vpop.f32.mrb[0].mxu0
      %v1728 = vadd.f32 0.0, %v1727
      %v1729 = vpop.f32.mrb[0].mxu0
      %1730 = vmatprep.mubr.f32.mxu0 0.0
      %1731 = vmatmul.mubr.f32.gmra.mrb[0].mxu0 %v1474
      %v1732 = vpop.f32.mrb[0].mxu0
      %v1733 = vadd.f32 0.0, %v1732
      %v1734 = vpop.f32.mrb[0].mxu0
      %1735 = vmatprep.mubr.f32.mxu0 0.0
      %1736 = vmatmul.mubr.f32.gmra.mrb[0].mxu0 %v1475
      %v1737 = vpop.f32.mrb[0].mxu0
      %v1738 = vadd.f32 0.0, %v1737
      %v1739 = vpop.f32.mrb[0].mxu0
      %1740 = vmatprep.mubr.f32.mxu0 0.0
      %1741 = vmatmul.mubr.f32.gmra.mrb[0].mxu0 %v1476
      %v1742 = vpop.f32.mrb[0].mxu0
      %v1743 = vadd.f32 0.0, %v1742
      %v1744 = vpop.f32.mrb[0].mxu0
      %1745 = vmatprep.mubr.f32.mxu0 0.0
      %1746 = vmatmul.mubr.f32.gmra.mrb[0].mxu0 %v1477
      %v1747 = vpop.f32.mrb[0].mxu0
      %v1748 = vadd.f32 0.0, %v1747
      %v1749 = vpop.f32.mrb[0].mxu0
      %1750 = vmatprep.mubr.f32.mxu0 0.0
      %1751 = vmatmul.mubr.f32.gmra.mrb[0].mxu0 %v1478
      %v1752 = vpop.f32.mrb[0].mxu0
      %v1753 = vadd.f32 0.0, %v1752
      %v1754 = vpop.f32.mrb[0].mxu0
      %1755 = vmatprep.mubr.f32.mxu0 0.0
      %1756 = vmatmul.mubr.f32.gmra.mrb[0].mxu0 %v1479
      %v1757 = vpop.f32.mrb[0].mxu0
      %v1758 = vadd.f32 0.0, %v1757
      %v1759 = vpop.f32.mrb[0].mxu0
      %1760 = vmatprep.mubr.f32.mxu0 0.0
      %1761 = vmatmul.mubr.f32.gmra.mrb[0].mxu0 %v1480
      %v1762 = vpop.f32.mrb[0].mxu0
      %v1763 = vadd.f32 0.0, %v1762
      %v1764 = vpop.f32.mrb[0].mxu0
      %1765 = vmatprep.mubr.f32.mxu0 0.0
      %1766 = vmatmul.mubr.f32.gmra.mrb[0].mxu0 %v1481
      %v1767 = vpop.f32.mrb[0].mxu0
      %v1768 = vadd.f32 0.0, %v1767
      %v1769 = vpop.f32.mrb[0].mxu0
      %1770 = vmatprep.mubr.f32.mxu0 0.0
      %1771 = vmatmul.mubr.f32.gmra.mrb[0].mxu0 %v1498
      %v1772 = vpop.f32.mrb[0].mxu0
      %v1773 = vadd.f32 0.0, %v1772
      %v1774 = vpop.f32.mrb[0].mxu0
      %1775 = vmatprep.mubr.f32.mxu0 0.0
      %1776 = vmatmul.mubr.f32.gmra.mrb[0].mxu0 %v1499
      %v1777 = vpop.f32.mrb[0].mxu0
      %v1778 = vadd.f32 0.0, %v1777
      %v1779 = vpop.f32.mrb[0].mxu0
      %1780 = vmatprep.mubr.f32.mxu0 0.0
      %1781 = vmatmul.mubr.f32.gmra.mrb[0].mxu0 %v1500
      %v1782 = vpop.f32.mrb[0].mxu0
      %v1783 = vadd.f32 0.0, %v1782
      %v1784 = vpop.f32.mrb[0].mxu0
      %1785 = vmatprep.mubr.f32.mxu0 0.0
      %1786 = vmatmul.mubr.f32.gmra.mrb[0].mxu0 %v1501
      %v1787 = vpop.f32.mrb[0].mxu0
      %v1788 = vadd.f32 0.0, %v1787
      %v1789 = vpop.f32.mrb[0].mxu0
      %1790 = vmatprep.mubr.f32.mxu0 0.0
      %1791 = vmatmul.mubr.f32.gmra.mrb[0].mxu0 %v1502
      %v1792 = vpop.f32.mrb[0].mxu0
      %v1793 = vadd.f32 0.0, %v1792
      %v1794 = vpop.f32.mrb[0].mxu0
      %1795 = vmatprep.mubr.f32.mxu0 0.0
      %1796 = vmatmul.mubr.f32.gmra.mrb[0].mxu0 %v1503
      %v1797 = vpop.f32.mrb[0].mxu0
      %v1798 = vadd.f32 0.0, %v1797
      %v1799 = vpop.f32.mrb[0].mxu0
      %1800 = vmatprep.mubr.f32.mxu0 0.0
      %1801 = vmatmul.mubr.f32.gmra.mrb[0].mxu0 %v1504
      %v1802 = vpop.f32.mrb[0].mxu0
      %v1803 = vadd.f32 0.0, %v1802
      %v1804 = vpop.f32.mrb[0].mxu0
      %1805 = vmatprep.mubr.f32.mxu0 0.0
      %1806 = vmatmul.mubr.f32.gmra.mrb[0].mxu0 %v1505
      %v1807 = vpop.f32.mrb[0].mxu0
      %v1808 = vadd.f32 0.0, %v1807
      %v1809 = vpop.f32.mrb[0].mxu0
      %1810 = vmatprep.mubr.f32.mxu0 0.0
      %1811 = vmatmul.mubr.f32.gmra.mrb[0].mxu0 %v1506
      %v1812 = vpop.f32.mrb[0].mxu0
      %v1813 = vadd.f32 0.0, %v1812
      %v1814 = vpop.f32.mrb[0].mxu0
      %1815 = vmatprep.mubr.f32.mxu0 0.0
      %1816 = vmatmul.mubr.f32.gmra.mrb[0].mxu0 %v1507
      %v1817 = vpop.f32.mrb[0].mxu0
      %v1818 = vadd.f32 0.0, %v1817
      %v1819 = vpop.f32.mrb[0].mxu0
      %1820 = vmatprep.mubr.f32.mxu0 0.0
      %1821 = vmatmul.mubr.f32.gmra.mrb[0].mxu0 %v1508
      %v1822 = vpop.f32.mrb[0].mxu0
      %v1823 = vadd.f32 0.0, %v1822
      %v1824 = vpop.f32.mrb[0].mxu0
      %1825 = vmatprep.mubr.f32.mxu0 0.0
      %1826 = vmatmul.mubr.f32.gmra.mrb[0].mxu0 %v1509
      %v1827 = vpop.f32.mrb[0].mxu0
      %v1828 = vadd.f32 0.0, %v1827
      %v1829 = vpop.f32.mrb[0].mxu0
      %1830 = vmatprep.mubr.f32.mxu0 0.0
      %1831 = vmatmul.mubr.f32.gmra.mrb[0].mxu0 %v1510
      %v1832 = vpop.f32.mrb[0].mxu0
      %v1833 = vadd.f32 0.0, %v1832
      %v1834 = vpop.f32.mrb[0].mxu0
      %1835 = vmatprep.mubr.f32.mxu0 0.0
      %1836 = vmatmul.mubr.f32.gmra.mrb[0].mxu0 %v1511
      %v1837 = vpop.f32.mrb[0].mxu0
      %v1838 = vadd.f32 0.0, %v1837
      %v1839 = vpop.f32.mrb[0].mxu0
      %1840 = vmatprep.mubr.f32.mxu0 0.0
      %1841 = vmatmul.mubr.f32.gmra.mrb[0].mxu0 %v1512
      %v1842 = vpop.f32.mrb[0].mxu0
      %v1843 = vadd.f32 0.0, %v1842
      %v1844 = vpop.f32.mrb[0].mxu0
      %1845 = vmatprep.mubr.f32.mxu0 0.0
      %1846 = vmatmul.mubr.f32.gmra.mrb[0].mxu0 %v1513
      %v1847 = vpop.f32.mrb[0].mxu0
      %v1848 = vadd.f32 0.0, %v1847
      %v1849 = vpop.f32.mrb[0].mxu0
      %1850 = vmatprep.mubr.f32.mxu0 0.0
      %1851 = vmatmul.mubr.f32.gmra.mrb[0].mxu0 %v1530
      %v1852 = vpop.f32.mrb[0].mxu0
      %v1853 = vadd.f32 0.0, %v1852
      %v1854 = vpop.f32.mrb[0].mxu0
      %1855 = vmatprep.mubr.f32.mxu0 0.0
      %1856 = vmatmul.mubr.f32.gmra.mrb[0].mxu0 %v1531
      %v1857 = vpop.f32.mrb[0].mxu0
      %v1858 = vadd.f32 0.0, %v1857
      %v1859 = vpop.f32.mrb[0].mxu0
      %1860 = vmatprep.mubr.f32.mxu0 0.0
      %1861 = vmatmul.mubr.f32.gmra.mrb[0].mxu0 %v1532
      %v1862 = vpop.f32.mrb[0].mxu0
      %v1863 = vadd.f32 0.0, %v1862
      %v1864 = vpop.f32.mrb[0].mxu0
      %1865 = vmatprep.mubr.f32.mxu0 0.0
      %1866 = vmatmul.mubr.f32.gmra.mrb[0].mxu0 %v1533
      %v1867 = vpop.f32.mrb[0].mxu0
      %v1868 = vadd.f32 0.0, %v1867
      %v1869 = vpop.f32.mrb[0].mxu0
      %1870 = vmatprep.mubr.f32.mxu0 0.0
      %1871 = vmatmul.mubr.f32.gmra.mrb[0].mxu0 %v1534
      %v1872 = vpop.f32.mrb[0].mxu0
      %v1873 = vadd.f32 0.0, %v1872
      %v1874 = vpop.f32.mrb[0].mxu0
      %1875 = vmatprep.mubr.f32.mxu0 0.0
      %1876 = vmatmul.mubr.f32.gmra.mrb[0].mxu0 %v1535
      %v1877 = vpop.f32.mrb[0].mxu0
      %v1878 = vadd.f32 0.0, %v1877
      %v1879 = vpop.f32.mrb[0].mxu0
      %1880 = vmatprep.mubr.f32.mxu0 0.0
      %1881 = vmatmul.mubr.f32.gmra.mrb[0].mxu0 %v1536
      %v1882 = vpop.f32.mrb[0].mxu0
      %v1883 = vadd.f32 0.0, %v1882
      %v1884 = vpop.f32.mrb[0].mxu0
      %1885 = vmatprep.mubr.f32.mxu0 0.0
      %1886 = vmatmul.mubr.f32.gmra.mrb[0].mxu0 %v1537
      %v1887 = vpop.f32.mrb[0].mxu0
      %v1888 = vadd.f32 0.0, %v1887
      %v1889 = vpop.f32.mrb[0].mxu0
      %1890 = vmatprep.mubr.f32.mxu0 0.0
      %1891 = vmatmul.mubr.f32.gmra.mrb[0].mxu0 %v1538
      %v1892 = vpop.f32.mrb[0].mxu0
      %v1893 = vadd.f32 0.0, %v1892
      %v1894 = vpop.f32.mrb[0].mxu0
      %1895 = vmatprep.mubr.f32.mxu0 0.0
      %1896 = vmatmul.mubr.f32.gmra.mrb[0].mxu0 %v1539
      %v1897 = vpop.f32.mrb[0].mxu0
      %v1898 = vadd.f32 0.0, %v1897
      %v1899 = vpop.f32.mrb[0].mxu0
      %1900 = vmatprep.mubr.f32.mxu0 0.0
      %1901 = vmatmul.mubr.f32.gmra.mrb[0].mxu0 %v1540
      %v1902 = vpop.f32.mrb[0].mxu0
      %v1903 = vadd.f32 0.0, %v1902
      %v1904 = vpop.f32.mrb[0].mxu0
      %1905 = vmatprep.mubr.f32.mxu0 0.0
      %1906 = vmatmul.mubr.f32.gmra.mrb[0].mxu0 %v1541
      %v1907 = vpop.f32.mrb[0].mxu0
      %v1908 = vadd.f32 0.0, %v1907
      %v1909 = vpop.f32.mrb[0].mxu0
      %1910 = vmatprep.mubr.f32.mxu0 0.0
      %1911 = vmatmul.mubr.f32.gmra.mrb[0].mxu0 %v1542
      %v1912 = vpop.f32.mrb[0].mxu0
      %v1913 = vadd.f32 0.0, %v1912
      %v1914 = vpop.f32.mrb[0].mxu0
      %1915 = vmatprep.mubr.f32.mxu0 0.0
      %1916 = vmatmul.mubr.f32.gmra.mrb[0].mxu0 %v1543
      %v1917 = vpop.f32.mrb[0].mxu0
      %v1918 = vadd.f32 0.0, %v1917
      %v1919 = vpop.f32.mrb[0].mxu0
      %1920 = vmatprep.mubr.f32.mxu0 0.0
      %1921 = vmatmul.mubr.f32.gmra.mrb[0].mxu0 %v1544
      %v1922 = vpop.f32.mrb[0].mxu0
      %v1923 = vadd.f32 0.0, %v1922
      %v1924 = vpop.f32.mrb[0].mxu0
      %1925 = vmatprep.mubr.f32.mxu0 0.0
      %1926 = vmatmul.mubr.f32.gmra.mrb[0].mxu0 %v1545
      %v1927 = vpop.f32.mrb[0].mxu0
      %v1928 = vadd.f32 0.0, %v1927
      %v1929 = vpop.f32.mrb[0].mxu0
      %1930 = vdwg.mxu0
      %v1931 = vld [vmem:[%s5] sm:$0xff]
      %v1932 = vld [vmem:[%s5 + $0x8] sm:$0xff]
      %v1933 = vld [vmem:[%s5 + $0x10] sm:$0xff]
      %v1934 = vld [vmem:[%s5 + $0x18] sm:$0xff]
      %v1935 = vld [vmem:[%s5 + $0x20] sm:$0xff]
      %v1936 = vld [vmem:[%s5 + $0x28] sm:$0xff]
      %v1937 = vld [vmem:[%s5 + $0x30] sm:$0xff]
      %v1938 = vld [vmem:[%s5 + $0x38] sm:$0xff]
      %v1939 = vld [vmem:[%s5 + $0x40] sm:$0xff]
      %v1940 = vld [vmem:[%s5 + $0x48] sm:$0xff]
      %v1941 = vld [vmem:[%s5 + $0x50] sm:$0xff]
      %v1942 = vld [vmem:[%s5 + $0x58] sm:$0xff]
      %v1943 = vld [vmem:[%s5 + $0x60] sm:$0xff]
      %v1944 = vld [vmem:[%s5 + $0x68] sm:$0xff]
      %v1945 = vld [vmem:[%s5 + $0x70] sm:$0xff]
      %v1946 = vld [vmem:[%s5 + $0x78] sm:$0xff]
      %1947 = vmatprep.subr.mxu0 0.0
      %1948 = vmatpush1.msra.mxu0 %v1931
      %1949 = vmatprep.subr.mxu0 0.0
      %1950 = vmatpush1.msra.mxu0 %v1932
      %1951 = vmatprep.subr.mxu0 0.0
      %1952 = vmatpush1.msra.mxu0 %v1933
      %1953 = vmatprep.subr.mxu0 0.0
      %1954 = vmatpush1.msra.mxu0 %v1934
      %1955 = vmatprep.subr.mxu0 0.0
      %1956 = vmatpush1.msra.mxu0 %v1935
      %1957 = vmatprep.subr.mxu0 0.0
      %1958 = vmatpush1.msra.mxu0 %v1936
      %1959 = vmatprep.subr.mxu0 0.0
      %1960 = vmatpush1.msra.mxu0 %v1937
      %1961 = vmatprep.subr.mxu0 0.0
      %1962 = vmatpush1.msra.mxu0 %v1938
      %1963 = vmatprep.subr.mxu0 0.0
      %1964 = vmatpush1.msra.mxu0 %v1939
      %1965 = vmatprep.subr.mxu0 0.0
      %1966 = vmatpush1.msra.mxu0 %v1940
      %1967 = vmatprep.subr.mxu0 0.0
      %1968 = vmatpush1.msra.mxu0 %v1941
      %1969 = vmatprep.subr.mxu0 0.0
      %1970 = vmatpush1.msra.mxu0 %v1942
      %1971 = vmatprep.subr.mxu0 0.0
      %1972 = vmatpush1.msra.mxu0 %v1943
      %1973 = vmatprep.subr.mxu0 0.0
      %1974 = vmatpush1.msra.mxu0 %v1944
      %1975 = vmatprep.subr.mxu0 0.0
      %1976 = vmatpush1.msra.mxu0 %v1945
      %1977 = vmatprep.subr.mxu0 0.0
      %1978 = vmatpush1.msra.mxu0 %v1946
      %1979 = vmatprep.subr.mxu0 0.0
      %1980 = vmatpush1.msra.mxu0 0.0
      %1981 = vmatprep.subr.mxu0 0.0
      %1982 = vmatpush1.msra.mxu0 0.0
      %1983 = vmatprep.subr.mxu0 0.0
      %1984 = vmatpush1.msra.mxu0 0.0
      %1985 = vmatprep.subr.mxu0 0.0
      %1986 = vmatpush1.msra.mxu0 0.0
      %1987 = vmatprep.subr.mxu0 0.0
      %1988 = vmatpush1.msra.mxu0 0.0
      %1989 = vmatprep.subr.mxu0 0.0
      %1990 = vmatpush1.msra.mxu0 0.0
      %1991 = vmatprep.subr.mxu0 0.0
      %1992 = vmatpush1.msra.mxu0 0.0
      %1993 = vmatprep.subr.mxu0 0.0
      %1994 = vmatpush1.msra.mxu0 0.0
      %1995 = vmatprep.subr.mxu0 0.0
      %1996 = vmatpush1.msra.mxu0 0.0
      %1997 = vmatprep.subr.mxu0 0.0
      %1998 = vmatpush1.msra.mxu0 0.0
      %1999 = vmatprep.subr.mxu0 0.0
      %2000 = vmatpush1.msra.mxu0 0.0
      %2001 = vmatprep.subr.mxu0 0.0
      %2002 = vmatpush1.msra.mxu0 0.0
      %2003 = vmatprep.subr.mxu0 0.0
      %2004 = vmatpush1.msra.mxu0 0.0
      %2005 = vmatprep.subr.mxu0 0.0
      %2006 = vmatpush1.msra.mxu0 0.0
      %2007 = vmatprep.subr.mxu0 0.0
      %2008 = vmatpush1.msra.mxu0 0.0
      %2009 = vmatprep.subr.mxu0 0.0
      %2010 = vmatpush1.msra.mxu0 0.0
      %2011 = vmatprep.mubr.f32.mxu0 0.0
      %2012 = vmatmul.mubr.f32.gmra.mrb[0].mxu0 %v1434
      %v2013 = vpop.f32.mrb[0].mxu0
      %v2014 = vadd.f32 0.0, %v2013
      %v2015 = vpop.f32.mrb[0].mxu0
      %2016 = vmatprep.mubr.f32.mxu0 0.0
      %2017 = vmatmul.mubr.f32.gmra.mrb[0].mxu0 %v1435
      %v2018 = vpop.f32.mrb[0].mxu0
      %v2019 = vadd.f32 0.0, %v2018
      %v2020 = vpop.f32.mrb[0].mxu0
      %2021 = vmatprep.mubr.f32.mxu0 0.0
      %2022 = vmatmul.mubr.f32.gmra.mrb[0].mxu0 %v1436
      %v2023 = vpop.f32.mrb[0].mxu0
      %v2024 = vadd.f32 0.0, %v2023
      %v2025 = vpop.f32.mrb[0].mxu0
      %2026 = vmatprep.mubr.f32.mxu0 0.0
      %2027 = vmatmul.mubr.f32.gmra.mrb[0].mxu0 %v1437
      %v2028 = vpop.f32.mrb[0].mxu0
      %v2029 = vadd.f32 0.0, %v2028
      %v2030 = vpop.f32.mrb[0].mxu0
      %2031 = vmatprep.mubr.f32.mxu0 0.0
      %2032 = vmatmul.mubr.f32.gmra.mrb[0].mxu0 %v1438
      %v2033 = vpop.f32.mrb[0].mxu0
      %v2034 = vadd.f32 0.0, %v2033
      %v2035 = vpop.f32.mrb[0].mxu0
      %2036 = vmatprep.mubr.f32.mxu0 0.0
      %2037 = vmatmul.mubr.f32.gmra.mrb[0].mxu0 %v1439
      %v2038 = vpop.f32.mrb[0].mxu0
      %v2039 = vadd.f32 0.0, %v2038
      %v2040 = vpop.f32.mrb[0].mxu0
      %2041 = vmatprep.mubr.f32.mxu0 0.0
      %2042 = vmatmul.mubr.f32.gmra.mrb[0].mxu0 %v1440
      %v2043 = vpop.f32.mrb[0].mxu0
      %v2044 = vadd.f32 0.0, %v2043
      %v2045 = vpop.f32.mrb[0].mxu0
      %2046 = vmatprep.mubr.f32.mxu0 0.0
      %2047 = vmatmul.mubr.f32.gmra.mrb[0].mxu0 %v1441
      %v2048 = vpop.f32.mrb[0].mxu0
      %v2049 = vadd.f32 0.0, %v2048
      %v2050 = vpop.f32.mrb[0].mxu0
      %2051 = vmatprep.mubr.f32.mxu0 0.0
      %2052 = vmatmul.mubr.f32.gmra.mrb[0].mxu0 %v1442
      %v2053 = vpop.f32.mrb[0].mxu0
      %v2054 = vadd.f32 0.0, %v2053
      %v2055 = vpop.f32.mrb[0].mxu0
      %2056 = vmatprep.mubr.f32.mxu0 0.0
      %2057 = vmatmul.mubr.f32.gmra.mrb[0].mxu0 %v1443
      %v2058 = vpop.f32.mrb[0].mxu0
      %v2059 = vadd.f32 0.0, %v2058
      %v2060 = vpop.f32.mrb[0].mxu0
      %2061 = vmatprep.mubr.f32.mxu0 0.0
      %2062 = vmatmul.mubr.f32.gmra.mrb[0].mxu0 %v1444
      %v2063 = vpop.f32.mrb[0].mxu0
      %v2064 = vadd.f32 0.0, %v2063
      %v2065 = vpop.f32.mrb[0].mxu0
      %2066 = vmatprep.mubr.f32.mxu0 0.0
      %2067 = vmatmul.mubr.f32.gmra.mrb[0].mxu0 %v1445
      %v2068 = vpop.f32.mrb[0].mxu0
      %v2069 = vadd.f32 0.0, %v2068
      %v2070 = vpop.f32.mrb[0].mxu0
      %2071 = vmatprep.mubr.f32.mxu0 0.0
      %2072 = vmatmul.mubr.f32.gmra.mrb[0].mxu0 %v1446
      %v2073 = vpop.f32.mrb[0].mxu0
      %v2074 = vadd.f32 0.0, %v2073
      %v2075 = vpop.f32.mrb[0].mxu0
      %2076 = vmatprep.mubr.f32.mxu0 0.0
      %2077 = vmatmul.mubr.f32.gmra.mrb[0].mxu0 %v1447
      %v2078 = vpop.f32.mrb[0].mxu0
      %v2079 = vadd.f32 0.0, %v2078
      %v2080 = vpop.f32.mrb[0].mxu0
      %2081 = vmatprep.mubr.f32.mxu0 0.0
      %2082 = vmatmul.mubr.f32.gmra.mrb[0].mxu0 %v1448
      %v2083 = vpop.f32.mrb[0].mxu0
      %v2084 = vadd.f32 0.0, %v2083
      %v2085 = vpop.f32.mrb[0].mxu0
      %2086 = vmatprep.mubr.f32.mxu0 0.0
      %2087 = vmatmul.mubr.f32.gmra.mrb[0].mxu0 %v1449
      %v2088 = vpop.f32.mrb[0].mxu0
      %v2089 = vadd.f32 0.0, %v2088
      %v2090 = vpop.f32.mrb[0].mxu0
      %2091 = vmatprep.mubr.f32.mxu0 0.0
      %2092 = vmatmul.mubr.f32.gmra.mrb[0].mxu0 %v1466
      %v2093 = vpop.f32.mrb[0].mxu0
      %v2094 = vadd.f32 0.0, %v2093
      %v2095 = vpop.f32.mrb[0].mxu0
      %2096 = vmatprep.mubr.f32.mxu0 0.0
      %2097 = vmatmul.mubr.f32.gmra.mrb[0].mxu0 %v1467
      %v2098 = vpop.f32.mrb[0].mxu0
      %v2099 = vadd.f32 0.0, %v2098
      %v2100 = vpop.f32.mrb[0].mxu0
      %2101 = vmatprep.mubr.f32.mxu0 0.0
      %2102 = vmatmul.mubr.f32.gmra.mrb[0].mxu0 %v1468
      %v2103 = vpop.f32.mrb[0].mxu0
      %v2104 = vadd.f32 0.0, %v2103
      %v2105 = vpop.f32.mrb[0].mxu0
      %2106 = vmatprep.mubr.f32.mxu0 0.0
      %2107 = vmatmul.mubr.f32.gmra.mrb[0].mxu0 %v1469
      %v2108 = vpop.f32.mrb[0].mxu0
      %v2109 = vadd.f32 0.0, %v2108
      %v2110 = vpop.f32.mrb[0].mxu0
      %2111 = vmatprep.mubr.f32.mxu0 0.0
      %2112 = vmatmul.mubr.f32.gmra.mrb[0].mxu0 %v1470
      %v2113 = vpop.f32.mrb[0].mxu0
      %v2114 = vadd.f32 0.0, %v2113
      %v2115 = vpop.f32.mrb[0].mxu0
      %2116 = vmatprep.mubr.f32.mxu0 0.0
      %2117 = vmatmul.mubr.f32.gmra.mrb[0].mxu0 %v1471
      %v2118 = vpop.f32.mrb[0].mxu0
      %v2119 = vadd.f32 0.0, %v2118
      %v2120 = vpop.f32.mrb[0].mxu0
      %2121 = vmatprep.mubr.f32.mxu0 0.0
      %2122 = vmatmul.mubr.f32.gmra.mrb[0].mxu0 %v1472
      %v2123 = vpop.f32.mrb[0].mxu0
      %v2124 = vadd.f32 0.0, %v2123
      %v2125 = vpop.f32.mrb[0].mxu0
      %2126 = vmatprep.mubr.f32.mxu0 0.0
      %2127 = vmatmul.mubr.f32.gmra.mrb[0].mxu0 %v1473
      %v2128 = vpop.f32.mrb[0].mxu0
      %v2129 = vadd.f32 0.0, %v2128
      %v2130 = vpop.f32.mrb[0].mxu0
      %2131 = vmatprep.mubr.f32.mxu0 0.0
      %2132 = vmatmul.mubr.f32.gmra.mrb[0].mxu0 %v1474
      %v2133 = vpop.f32.mrb[0].mxu0
      %v2134 = vadd.f32 0.0, %v2133
      %v2135 = vpop.f32.mrb[0].mxu0
      %2136 = vmatprep.mubr.f32.mxu0 0.0
      %2137 = vmatmul.mubr.f32.gmra.mrb[0].mxu0 %v1475
      %v2138 = vpop.f32.mrb[0].mxu0
      %v2139 = vadd.f32 0.0, %v2138
      %v2140 = vpop.f32.mrb[0].mxu0
      %2141 = vmatprep.mubr.f32.mxu0 0.0
      %2142 = vmatmul.mubr.f32.gmra.mrb[0].mxu0 %v1476
      %v2143 = vpop.f32.mrb[0].mxu0
      %v2144 = vadd.f32 0.0, %v2143
      %v2145 = vpop.f32.mrb[0].mxu0
      %2146 = vmatprep.mubr.f32.mxu0 0.0
      %2147 = vmatmul.mubr.f32.gmra.mrb[0].mxu0 %v1477
      %v2148 = vpop.f32.mrb[0].mxu0
      %v2149 = vadd.f32 0.0, %v2148
      %v2150 = vpop.f32.mrb[0].mxu0
      %2151 = vmatprep.mubr.f32.mxu0 0.0
      %2152 = vmatmul.mubr.f32.gmra.mrb[0].mxu0 %v1478
      %v2153 = vpop.f32.mrb[0].mxu0
      %v2154 = vadd.f32 0.0, %v2153
      %v2155 = vpop.f32.mrb[0].mxu0
      %2156 = vmatprep.mubr.f32.mxu0 0.0
      %2157 = vmatmul.mubr.f32.gmra.mrb[0].mxu0 %v1479
      %v2158 = vpop.f32.mrb[0].mxu0
      %v2159 = vadd.f32 0.0, %v2158
      %v2160 = vpop.f32.mrb[0].mxu0
      %2161 = vmatprep.mubr.f32.mxu0 0.0
      %2162 = vmatmul.mubr.f32.gmra.mrb[0].mxu0 %v1480
      %v2163 = vpop.f32.mrb[0].mxu0
      %v2164 = vadd.f32 0.0, %v2163
      %v2165 = vpop.f32.mrb[0].mxu0
      %2166 = vmatprep.mubr.f32.mxu0 0.0
      %2167 = vmatmul.mubr.f32.gmra.mrb[0].mxu0 %v1481
      %v2168 = vpop.f32.mrb[0].mxu0
      %v2169 = vadd.f32 0.0, %v2168
      %v2170 = vpop.f32.mrb[0].mxu0
      %2171 = vmatprep.mubr.f32.mxu0 0.0
      %2172 = vmatmul.mubr.f32.gmra.mrb[0].mxu0 %v1498
      %v2173 = vpop.f32.mrb[0].mxu0
      %v2174 = vadd.f32 0.0, %v2173
      %v2175 = vpop.f32.mrb[0].mxu0
      %2176 = vmatprep.mubr.f32.mxu0 0.0
      %2177 = vmatmul.mubr.f32.gmra.mrb[0].mxu0 %v1499
      %v2178 = vpop.f32.mrb[0].mxu0
      %v2179 = vadd.f32 0.0, %v2178
      %v2180 = vpop.f32.mrb[0].mxu0
      %2181 = vmatprep.mubr.f32.mxu0 0.0
      %2182 = vmatmul.mubr.f32.gmra.mrb[0].mxu0 %v1500
      %v2183 = vpop.f32.mrb[0].mxu0
      %v2184 = vadd.f32 0.0, %v2183
      %v2185 = vpop.f32.mrb[0].mxu0
      %2186 = vmatprep.mubr.f32.mxu0 0.0
      %2187 = vmatmul.mubr.f32.gmra.mrb[0].mxu0 %v1501
      %v2188 = vpop.f32.mrb[0].mxu0
      %v2189 = vadd.f32 0.0, %v2188
      %v2190 = vpop.f32.mrb[0].mxu0
      %2191 = vmatprep.mubr.f32.mxu0 0.0
      %2192 = vmatmul.mubr.f32.gmra.mrb[0].mxu0 %v1502
      %v2193 = vpop.f32.mrb[0].mxu0
      %v2194 = vadd.f32 0.0, %v2193
      %v2195 = vpop.f32.mrb[0].mxu0
      %2196 = vmatprep.mubr.f32.mxu0 0.0
      %2197 = vmatmul.mubr.f32.gmra.mrb[0].mxu0 %v1503
      %v2198 = vpop.f32.mrb[0].mxu0
      %v2199 = vadd.f32 0.0, %v2198
      %v2200 = vpop.f32.mrb[0].mxu0
      %2201 = vmatprep.mubr.f32.mxu0 0.0
      %2202 = vmatmul.mubr.f32.gmra.mrb[0].mxu0 %v1504
      %v2203 = vpop.f32.mrb[0].mxu0
      %v2204 = vadd.f32 0.0, %v2203
      %v2205 = vpop.f32.mrb[0].mxu0
      %2206 = vmatprep.mubr.f32.mxu0 0.0
      %2207 = vmatmul.mubr.f32.gmra.mrb[0].mxu0 %v1505
      %v2208 = vpop.f32.mrb[0].mxu0
      %v2209 = vadd.f32 0.0, %v2208
      %v2210 = vpop.f32.mrb[0].mxu0
      %2211 = vmatprep.mubr.f32.mxu0 0.0
      %2212 = vmatmul.mubr.f32.gmra.mrb[0].mxu0 %v1506
      %v2213 = vpop.f32.mrb[0].mxu0
      %v2214 = vadd.f32 0.0, %v2213
      %v2215 = vpop.f32.mrb[0].mxu0
      %2216 = vmatprep.mubr.f32.mxu0 0.0
      %2217 = vmatmul.mubr.f32.gmra.mrb[0].mxu0 %v1507
      %v2218 = vpop.f32.mrb[0].mxu0
      %v2219 = vadd.f32 0.0, %v2218
      %v2220 = vpop.f32.mrb[0].mxu0
      %2221 = vmatprep.mubr.f32.mxu0 0.0
      %2222 = vmatmul.mubr.f32.gmra.mrb[0].mxu0 %v1508
      %v2223 = vpop.f32.mrb[0].mxu0
      %v2224 = vadd.f32 0.0, %v2223
      %v2225 = vpop.f32.mrb[0].mxu0
      %2226 = vmatprep.mubr.f32.mxu0 0.0
      %2227 = vmatmul.mubr.f32.gmra.mrb[0].mxu0 %v1509
      %v2228 = vpop.f32.mrb[0].mxu0
      %v2229 = vadd.f32 0.0, %v2228
      %v2230 = vpop.f32.mrb[0].mxu0
      %2231 = vmatprep.mubr.f32.mxu0 0.0
      %2232 = vmatmul.mubr.f32.gmra.mrb[0].mxu0 %v1510
      %v2233 = vpop.f32.mrb[0].mxu0
      %v2234 = vadd.f32 0.0, %v2233
      %v2235 = vpop.f32.mrb[0].mxu0
      %2236 = vmatprep.mubr.f32.mxu0 0.0
      %2237 = vmatmul.mubr.f32.gmra.mrb[0].mxu0 %v1511
      %v2238 = vpop.f32.mrb[0].mxu0
      %v2239 = vadd.f32 0.0, %v2238
      %v2240 = vpop.f32.mrb[0].mxu0
      %2241 = vmatprep.mubr.f32.mxu0 0.0
      %2242 = vmatmul.mubr.f32.gmra.mrb[0].mxu0 %v1512
      %v2243 = vpop.f32.mrb[0].mxu0
      %v2244 = vadd.f32 0.0, %v2243
      %v2245 = vpop.f32.mrb[0].mxu0
      %2246 = vmatprep.mubr.f32.mxu0 0.0
      %2247 = vmatmul.mubr.f32.gmra.mrb[0].mxu0 %v1513
      %v2248 = vpop.f32.mrb[0].mxu0
      %v2249 = vadd.f32 0.0, %v2248
      %v2250 = vpop.f32.mrb[0].mxu0
      %2251 = vmatprep.mubr.f32.mxu0 0.0
      %2252 = vmatmul.mubr.f32.gmra.mrb[0].mxu0 %v1530
      %v2253 = vpop.f32.mrb[0].mxu0
      %v2254 = vadd.f32 0.0, %v2253
      %v2255 = vpop.f32.mrb[0].mxu0
      %2256 = vmatprep.mubr.f32.mxu0 0.0
      %2257 = vmatmul.mubr.f32.gmra.mrb[0].mxu0 %v1531
      %v2258 = vpop.f32.mrb[0].mxu0
      %v2259 = vadd.f32 0.0, %v2258
      %v2260 = vpop.f32.mrb[0].mxu0
      %2261 = vmatprep.mubr.f32.mxu0 0.0
      %2262 = vmatmul.mubr.f32.gmra.mrb[0].mxu0 %v1532
      %v2263 = vpop.f32.mrb[0].mxu0
      %v2264 = vadd.f32 0.0, %v2263
      %v2265 = vpop.f32.mrb[0].mxu0
      %2266 = vmatprep.mubr.f32.mxu0 0.0
      %2267 = vmatmul.mubr.f32.gmra.mrb[0].mxu0 %v1533
      %v2268 = vpop.f32.mrb[0].mxu0
      %v2269 = vadd.f32 0.0, %v2268
      %v2270 = vpop.f32.mrb[0].mxu0
      %2271 = vmatprep.mubr.f32.mxu0 0.0
      %2272 = vmatmul.mubr.f32.gmra.mrb[0].mxu0 %v1534
      %v2273 = vpop.f32.mrb[0].mxu0
      %v2274 = vadd.f32 0.0, %v2273
      %v2275 = vpop.f32.mrb[0].mxu0
      %2276 = vmatprep.mubr.f32.mxu0 0.0
      %2277 = vmatmul.mubr.f32.gmra.mrb[0].mxu0 %v1535
      %v2278 = vpop.f32.mrb[0].mxu0
      %v2279 = vadd.f32 0.0, %v2278
      %v2280 = vpop.f32.mrb[0].mxu0
      %2281 = vmatprep.mubr.f32.mxu0 0.0
      %2282 = vmatmul.mubr.f32.gmra.mrb[0].mxu0 %v1536
      %v2283 = vpop.f32.mrb[0].mxu0
      %v2284 = vadd.f32 0.0, %v2283
      %v2285 = vpop.f32.mrb[0].mxu0
      %2286 = vmatprep.mubr.f32.mxu0 0.0
      %2287 = vmatmul.mubr.f32.gmra.mrb[0].mxu0 %v1537
      %v2288 = vpop.f32.mrb[0].mxu0
      %v2289 = vadd.f32 0.0, %v2288
      %v2290 = vpop.f32.mrb[0].mxu0
      %2291 = vmatprep.mubr.f32.mxu0 0.0
      %2292 = vmatmul.mubr.f32.gmra.mrb[0].mxu0 %v1538
      %v2293 = vpop.f32.mrb[0].mxu0
      %v2294 = vadd.f32 0.0, %v2293
      %v2295 = vpop.f32.mrb[0].mxu0
      %2296 = vmatprep.mubr.f32.mxu0 0.0
      %2297 = vmatmul.mubr.f32.gmra.mrb[0].mxu0 %v1539
      %v2298 = vpop.f32.mrb[0].mxu0
      %v2299 = vadd.f32 0.0, %v2298
      %v2300 = vpop.f32.mrb[0].mxu0
      %2301 = vmatprep.mubr.f32.mxu0 0.0
      %2302 = vmatmul.mubr.f32.gmra.mrb[0].mxu0 %v1540
      %v2303 = vpop.f32.mrb[0].mxu0
      %v2304 = vadd.f32 0.0, %v2303
      %v2305 = vpop.f32.mrb[0].mxu0
      %2306 = vmatprep.mubr.f32.mxu0 0.0
      %2307 = vmatmul.mubr.f32.gmra.mrb[0].mxu0 %v1541
      %v2308 = vpop.f32.mrb[0].mxu0
      %v2309 = vadd.f32 0.0, %v2308
      %v2310 = vpop.f32.mrb[0].mxu0
      %2311 = vmatprep.mubr.f32.mxu0 0.0
      %2312 = vmatmul.mubr.f32.gmra.mrb[0].mxu0 %v1542
      %v2313 = vpop.f32.mrb[0].mxu0
      %v2314 = vadd.f32 0.0, %v2313
      %v2315 = vpop.f32.mrb[0].mxu0
      %2316 = vmatprep.mubr.f32.mxu0 0.0
      %2317 = vmatmul.mubr.f32.gmra.mrb[0].mxu0 %v1543
      %v2318 = vpop.f32.mrb[0].mxu0
      %v2319 = vadd.f32 0.0, %v2318
      %v2320 = vpop.f32.mrb[0].mxu0
      %2321 = vmatprep.mubr.f32.mxu0 0.0
      %2322 = vmatmul.mubr.f32.gmra.mrb[0].mxu0 %v1544
      %v2323 = vpop.f32.mrb[0].mxu0
      %v2324 = vadd.f32 0.0, %v2323
      %v2325 = vpop.f32.mrb[0].mxu0
      %2326 = vmatprep.mubr.f32.mxu0 0.0
      %2327 = vmatmul.mubr.f32.gmra.mrb[0].mxu0 %v1545
      %v2328 = vpop.f32.mrb[0].mxu0
      %v2329 = vadd.f32 0.0, %v2328
      %v2330 = vpop.f32.mrb[0].mxu0
      %2331 = vdwg.mxu0
      %v2332 = vmul.f32 %v1613, %v1084
      %v2333 = vmul.f32 %v1618, %v1089
      %v2334 = vmul.f32 %v1623, %v1094
      %v2335 = vmul.f32 %v1628, %v1099
      %v2336 = vmul.f32 %v1633, %v1104
      %v2337 = vmul.f32 %v1638, %v1109
      %v2338 = vmul.f32 %v1643, %v1114
      %v2339 = vmul.f32 %v1648, %v1119
      %v2340 = vmul.f32 %v1653, %v1124
      %v2341 = vmul.f32 %v1658, %v1129
      %v2342 = vmul.f32 %v1663, %v1134
      %v2343 = vmul.f32 %v1668, %v1139
      %v2344 = vmul.f32 %v1673, %v1144
      %v2345 = vmul.f32 %v1678, %v1149
      %v2346 = vmul.f32 %v1683, %v1154
      %v2347 = vmul.f32 %v1688, %v1159
      %v2348 = vmul.f32 %v1693, %v1164
      %v2349 = vmul.f32 %v1698, %v1169
      %v2350 = vmul.f32 %v1703, %v1174
      %v2351 = vmul.f32 %v1708, %v1179
      %v2352 = vmul.f32 %v1713, %v1184
      %v2353 = vmul.f32 %v1718, %v1189
      %v2354 = vmul.f32 %v1723, %v1194
      %v2355 = vmul.f32 %v1728, %v1199
      %v2356 = vmul.f32 %v1733, %v1204
      %v2357 = vmul.f32 %v1738, %v1209
      %v2358 = vmul.f32 %v1743, %v1214
      %v2359 = vmul.f32 %v1748, %v1219
      %v2360 = vmul.f32 %v1753, %v1224
      %v2361 = vmul.f32 %v1758, %v1229
      %v2362 = vmul.f32 %v1763, %v1234
      %v2363 = vmul.f32 %v1768, %v1239
      %v2364 = vmul.f32 %v1773, %v1244
      %v2365 = vmul.f32 %v1778, %v1249
      %v2366 = vmul.f32 %v1783, %v1254
      %v2367 = vmul.f32 %v1788, %v1259
      %v2368 = vmul.f32 %v1793, %v1264
      %v2369 = vmul.f32 %v1798, %v1269
      %v2370 = vmul.f32 %v1803, %v1274
      %v2371 = vmul.f32 %v1808, %v1279
      %v2372 = vmul.f32 %v1813, %v1284
      %v2373 = vmul.f32 %v1818, %v1289
      %v2374 = vmul.f32 %v1823, %v1294
      %v2375 = vmul.f32 %v1828, %v1299
      %v2376 = vmul.f32 %v1833, %v1304
      %v2377 = vmul.f32 %v1838, %v1309
      %v2378 = vmul.f32 %v1843, %v1314
      %v2379 = vmul.f32 %v1848, %v1319
      %v2380 = vmul.f32 %v1853, %v1324
      %v2381 = vmul.f32 %v1858, %v1329
      %v2382 = vmul.f32 %v1863, %v1334
      %v2383 = vmul.f32 %v1868, %v1339
      %v2384 = vmul.f32 %v1873, %v1344
      %v2385 = vmul.f32 %v1878, %v1349
      %v2386 = vmul.f32 %v1883, %v1354
      %v2387 = vmul.f32 %v1888, %v1359
      %v2388 = vmul.f32 %v1893, %v1364
      %v2389 = vmul.f32 %v1898, %v1369
      %v2390 = vmul.f32 %v1903, %v1374
      %v2391 = vmul.f32 %v1908, %v1379
      %v2392 = vmul.f32 %v1913, %v1384
      %v2393 = vmul.f32 %v1918, %v1389
      %v2394 = vmul.f32 %v1923, %v1394
      %v2395 = vmul.f32 %v1928, %v1399
      %v2396 = vld [vmem:[%s410] sm:$0xff]
      %v2397 = vld [vmem:[%s410 + $0x8] sm:$0xff]
      %v2398 = vld [vmem:[%s410 + $0x10] sm:$0xff]
      %v2399 = vld [vmem:[%s410 + $0x18] sm:$0xff]
      %v2400 = vld [vmem:[%s410 + $0x20] sm:$0xff]
      %v2401 = vld [vmem:[%s410 + $0x28] sm:$0xff]
      %v2402 = vld [vmem:[%s410 + $0x30] sm:$0xff]
      %v2403 = vld [vmem:[%s410 + $0x38] sm:$0xff]
      %v2404 = vld [vmem:[%s410 + $0x40] sm:$0xff]
      %v2405 = vld [vmem:[%s410 + $0x48] sm:$0xff]
      %v2406 = vld [vmem:[%s410 + $0x50] sm:$0xff]
      %v2407 = vld [vmem:[%s410 + $0x58] sm:$0xff]
      %v2408 = vld [vmem:[%s410 + $0x60] sm:$0xff]
      %v2409 = vld [vmem:[%s410 + $0x68] sm:$0xff]
      %v2410 = vld [vmem:[%s410 + $0x70] sm:$0xff]
      %v2411 = vld [vmem:[%s410 + $0x78] sm:$0xff]
      %v2412 = vld [vmem:[%s410 + $0x80] sm:$0xff]
      %v2413 = vld [vmem:[%s410 + $0x88] sm:$0xff]
      %v2414 = vld [vmem:[%s410 + $0x90] sm:$0xff]
      %v2415 = vld [vmem:[%s410 + $0x98] sm:$0xff]
      %v2416 = vld [vmem:[%s410 + $0xa0] sm:$0xff]
      %v2417 = vld [vmem:[%s410 + $0xa8] sm:$0xff]
      %v2418 = vld [vmem:[%s410 + $0xb0] sm:$0xff]
      %v2419 = vld [vmem:[%s410 + $0xb8] sm:$0xff]
      %v2420 = vld [vmem:[%s410 + $0xc0] sm:$0xff]
      %v2421 = vld [vmem:[%s410 + $0xc8] sm:$0xff]
      %v2422 = vld [vmem:[%s410 + $0xd0] sm:$0xff]
      %v2423 = vld [vmem:[%s410 + $0xd8] sm:$0xff]
      %v2424 = vld [vmem:[%s410 + $0xe0] sm:$0xff]
      %v2425 = vld [vmem:[%s410 + $0xe8] sm:$0xff]
      %v2426 = vld [vmem:[%s410 + $0xf0] sm:$0xff]
      %v2427 = vld [vmem:[%s410 + $0xf8] sm:$0xff]
      %v2428 = vld [vmem:[%s410 + $0x100] sm:$0xff]
      %v2429 = vld [vmem:[%s410 + $0x108] sm:$0xff]
      %v2430 = vld [vmem:[%s410 + $0x110] sm:$0xff]
      %v2431 = vld [vmem:[%s410 + $0x118] sm:$0xff]
      %v2432 = vld [vmem:[%s410 + $0x120] sm:$0xff]
      %v2433 = vld [vmem:[%s410 + $0x128] sm:$0xff]
      %v2434 = vld [vmem:[%s410 + $0x130] sm:$0xff]
      %v2435 = vld [vmem:[%s410 + $0x138] sm:$0xff]
      %v2436 = vld [vmem:[%s410 + $0x140] sm:$0xff]
      %v2437 = vld [vmem:[%s410 + $0x148] sm:$0xff]
      %v2438 = vld [vmem:[%s410 + $0x150] sm:$0xff]
      %v2439 = vld [vmem:[%s410 + $0x158] sm:$0xff]
      %v2440 = vld [vmem:[%s410 + $0x160] sm:$0xff]
      %v2441 = vld [vmem:[%s410 + $0x168] sm:$0xff]
      %v2442 = vld [vmem:[%s410 + $0x170] sm:$0xff]
      %v2443 = vld [vmem:[%s410 + $0x178] sm:$0xff]
      %v2444 = vld [vmem:[%s410 + $0x180] sm:$0xff]
      %v2445 = vld [vmem:[%s410 + $0x188] sm:$0xff]
      %v2446 = vld [vmem:[%s410 + $0x190] sm:$0xff]
      %v2447 = vld [vmem:[%s410 + $0x198] sm:$0xff]
      %v2448 = vld [vmem:[%s410 + $0x1a0] sm:$0xff]
      %v2449 = vld [vmem:[%s410 + $0x1a8] sm:$0xff]
      %v2450 = vld [vmem:[%s410 + $0x1b0] sm:$0xff]
      %v2451 = vld [vmem:[%s410 + $0x1b8] sm:$0xff]
      %v2452 = vld [vmem:[%s410 + $0x1c0] sm:$0xff]
      %v2453 = vld [vmem:[%s410 + $0x1c8] sm:$0xff]
      %v2454 = vld [vmem:[%s410 + $0x1d0] sm:$0xff]
      %v2455 = vld [vmem:[%s410 + $0x1d8] sm:$0xff]
      %v2456 = vld [vmem:[%s410 + $0x1e0] sm:$0xff]
      %v2457 = vld [vmem:[%s410 + $0x1e8] sm:$0xff]
      %v2458 = vld [vmem:[%s410 + $0x1f0] sm:$0xff]
      %v2459 = vld [vmem:[%s410 + $0x1f8] sm:$0xff]
      %v2460 = vmul.f32 %v2332, %v2396
      %v2461 = vmul.f32 %v2333, %v2397
      %v2462 = vmul.f32 %v2334, %v2398
      %v2463 = vmul.f32 %v2335, %v2399
      %v2464 = vmul.f32 %v2336, %v2400
      %v2465 = vmul.f32 %v2337, %v2401
      %v2466 = vmul.f32 %v2338, %v2402
      %v2467 = vmul.f32 %v2339, %v2403
      %v2468 = vmul.f32 %v2340, %v2404
      %v2469 = vmul.f32 %v2341, %v2405
      %v2470 = vmul.f32 %v2342, %v2406
      %v2471 = vmul.f32 %v2343, %v2407
      %v2472 = vmul.f32 %v2344, %v2408
      %v2473 = vmul.f32 %v2345, %v2409
      %v2474 = vmul.f32 %v2346, %v2410
      %v2475 = vmul.f32 %v2347, %v2411
      %v2476 = vmul.f32 %v2348, %v2412
      %v2477 = vmul.f32 %v2349, %v2413
      %v2478 = vmul.f32 %v2350, %v2414
      %v2479 = vmul.f32 %v2351, %v2415
      %v2480 = vmul.f32 %v2352, %v2416
      %v2481 = vmul.f32 %v2353, %v2417
      %v2482 = vmul.f32 %v2354, %v2418
      %v2483 = vmul.f32 %v2355, %v2419
      %v2484 = vmul.f32 %v2356, %v2420
      %v2485 = vmul.f32 %v2357, %v2421
      %v2486 = vmul.f32 %v2358, %v2422
      %v2487 = vmul.f32 %v2359, %v2423
      %v2488 = vmul.f32 %v2360, %v2424
      %v2489 = vmul.f32 %v2361, %v2425
      %v2490 = vmul.f32 %v2362, %v2426
      %v2491 = vmul.f32 %v2363, %v2427
      %v2492 = vmul.f32 %v2364, %v2428
      %v2493 = vmul.f32 %v2365, %v2429
      %v2494 = vmul.f32 %v2366, %v2430
      %v2495 = vmul.f32 %v2367, %v2431
      %v2496 = vmul.f32 %v2368, %v2432
      %v2497 = vmul.f32 %v2369, %v2433
      %v2498 = vmul.f32 %v2370, %v2434
      %v2499 = vmul.f32 %v2371, %v2435
      %v2500 = vmul.f32 %v2372, %v2436
      %v2501 = vmul.f32 %v2373, %v2437
      %v2502 = vmul.f32 %v2374, %v2438
      %v2503 = vmul.f32 %v2375, %v2439
      %v2504 = vmul.f32 %v2376, %v2440
      %v2505 = vmul.f32 %v2377, %v2441
      %v2506 = vmul.f32 %v2378, %v2442
      %v2507 = vmul.f32 %v2379, %v2443
      %v2508 = vmul.f32 %v2380, %v2444
      %v2509 = vmul.f32 %v2381, %v2445
      %v2510 = vmul.f32 %v2382, %v2446
      %v2511 = vmul.f32 %v2383, %v2447
      %v2512 = vmul.f32 %v2384, %v2448
      %v2513 = vmul.f32 %v2385, %v2449
      %v2514 = vmul.f32 %v2386, %v2450
      %v2515 = vmul.f32 %v2387, %v2451
      %v2516 = vmul.f32 %v2388, %v2452
      %v2517 = vmul.f32 %v2389, %v2453
      %v2518 = vmul.f32 %v2390, %v2454
      %v2519 = vmul.f32 %v2391, %v2455
      %v2520 = vmul.f32 %v2392, %v2456
      %v2521 = vmul.f32 %v2393, %v2457
      %v2522 = vmul.f32 %v2394, %v2458
      %v2523 = vmul.f32 %v2395, %v2459
      %v2524 = vld [vmem:[%s7] sm:$0xff]
      %v2525 = vld [vmem:[%s7 + $0x8] sm:$0xff]
      %v2526 = vld [vmem:[%s7 + $0x10] sm:$0xff]
      %v2527 = vld [vmem:[%s7 + $0x18] sm:$0xff]
      %v2528 = vld [vmem:[%s7 + $0x20] sm:$0xff]
      %v2529 = vld [vmem:[%s7 + $0x28] sm:$0xff]
      %v2530 = vld [vmem:[%s7 + $0x30] sm:$0xff]
      %v2531 = vld [vmem:[%s7 + $0x38] sm:$0xff]
      %2532 = vxpose.xlu0.b32.start [1/16] %v2524, 128
      %2533 = vxpose.xlu0.b32.cont [2/16] %v2525, 128
      %2534 = vxpose.xlu0.b32.cont [3/16] %v2526, 128
      %2535 = vxpose.xlu0.b32.cont [4/16] %v2527, 128
      %2536 = vxpose.xlu0.b32.cont [5/16] %v2528, 128
      %2537 = vxpose.xlu0.b32.cont [6/16] %v2529, 128
      %2538 = vxpose.xlu0.b32.cont [7/16] %v2530, 128
      %2539 = vxpose.xlu0.b32.cont [8/16] %v2531, 128
      %2540 = vxpose.xlu0.b32.cont [9/16] 0.0, 128
      %2541 = vxpose.xlu0.b32.cont [10/16] 0.0, 128
      %2542 = vxpose.xlu0.b32.cont [11/16] 0.0, 128
      %2543 = vxpose.xlu0.b32.cont [12/16] 0.0, 128
      %2544 = vxpose.xlu0.b32.cont [13/16] 0.0, 128
      %2545 = vxpose.xlu0.b32.cont [14/16] 0.0, 128
      %2546 = vxpose.xlu0.b32.cont [15/16] 0.0, 128
      %2547 = vxpose.xlu0.b32.end [16/16] 0.0, 128
      %v2548 = vpop.trf.xlu0
      %v2549 = vpop.trf.xlu0
      %v2550 = vpop.trf.xlu0
      %v2551 = vpop.trf.xlu0
      %v2552 = vpop.trf.xlu0
      %v2553 = vpop.trf.xlu0
      %v2554 = vpop.trf.xlu0
      %v2555 = vpop.trf.xlu0
      %v2556 = vpop.trf.xlu0
      %v2557 = vpop.trf.xlu0
      %v2558 = vpop.trf.xlu0
      %v2559 = vpop.trf.xlu0
      %v2560 = vpop.trf.xlu0
      %v2561 = vpop.trf.xlu0
      %v2562 = vpop.trf.xlu0
      %v2563 = vpop.trf.xlu0
      %vm2564 = vcmask 523264
      %v2566 = vsel %vm2564, %v2548, 0
      %v2569 = vsel %vm2564, %v2460, 0
      %v2572 = vsel %vm2564, %v2461, 0
      %v2575 = vsel %vm2564, %v2462, 0
      %v2578 = vsel %vm2564, %v2463, 0
      %v2581 = vsel %vm2564, %v2464, 0
      %v2584 = vsel %vm2564, %v2465, 0
      %v2587 = vsel %vm2564, %v2466, 0
      %v2590 = vsel %vm2564, %v2467, 0
      %v2593 = vsel %vm2564, %v2468, 0
      %v2596 = vsel %vm2564, %v2469, 0
      %v2599 = vsel %vm2564, %v2470, 0
      %v2602 = vsel %vm2564, %v2471, 0
      %v2605 = vsel %vm2564, %v2472, 0
      %v2608 = vsel %vm2564, %v2473, 0
      %v2611 = vsel %vm2564, %v2474, 0
      %v2614 = vsel %vm2564, %v2475, 0
      %v2617 = vsel %vm2564, %v2476, 0
      %v2620 = vsel %vm2564, %v2477, 0
      %v2623 = vsel %vm2564, %v2478, 0
      %v2626 = vsel %vm2564, %v2479, 0
      %v2629 = vsel %vm2564, %v2480, 0
      %v2632 = vsel %vm2564, %v2481, 0
      %v2635 = vsel %vm2564, %v2482, 0
      %v2638 = vsel %vm2564, %v2483, 0
      %v2641 = vsel %vm2564, %v2484, 0
      %v2644 = vsel %vm2564, %v2485, 0
      %v2647 = vsel %vm2564, %v2486, 0
      %v2650 = vsel %vm2564, %v2487, 0
      %v2653 = vsel %vm2564, %v2488, 0
      %v2656 = vsel %vm2564, %v2489, 0
      %v2659 = vsel %vm2564, %v2490, 0
      %v2662 = vsel %vm2564, %v2491, 0
      %v2665 = vsel %vm2564, %v2492, 0
      %v2668 = vsel %vm2564, %v2493, 0
      %v2671 = vsel %vm2564, %v2494, 0
      %v2674 = vsel %vm2564, %v2495, 0
      %v2677 = vsel %vm2564, %v2496, 0
      %v2680 = vsel %vm2564, %v2497, 0
      %v2683 = vsel %vm2564, %v2498, 0
      %v2686 = vsel %vm2564, %v2499, 0
      %v2689 = vsel %vm2564, %v2500, 0
      %v2692 = vsel %vm2564, %v2501, 0
      %v2695 = vsel %vm2564, %v2502, 0
      %v2698 = vsel %vm2564, %v2503, 0
      %v2701 = vsel %vm2564, %v2504, 0
      %v2704 = vsel %vm2564, %v2505, 0
      %v2707 = vsel %vm2564, %v2506, 0
      %v2710 = vsel %vm2564, %v2507, 0
      %v2713 = vsel %vm2564, %v2508, 0
      %v2716 = vsel %vm2564, %v2509, 0
      %v2719 = vsel %vm2564, %v2510, 0
      %v2722 = vsel %vm2564, %v2511, 0
      %v2725 = vsel %vm2564, %v2512, 0
      %v2728 = vsel %vm2564, %v2513, 0
      %v2731 = vsel %vm2564, %v2514, 0
      %v2734 = vsel %vm2564, %v2515, 0
      %v2737 = vsel %vm2564, %v2516, 0
      %v2740 = vsel %vm2564, %v2517, 0
      %v2743 = vsel %vm2564, %v2518, 0
      %v2746 = vsel %vm2564, %v2519, 0
      %v2749 = vsel %vm2564, %v2520, 0
      %v2752 = vsel %vm2564, %v2521, 0
      %v2755 = vsel %vm2564, %v2522, 0
      %v2758 = vsel %vm2564, %v2523, 0
      %2760 = vmatprep.subr.mxu0 0.0
      %2761 = vmatpush1.xpose.msra.mxu0 %v2569
      %2762 = vmatprep.subr.mxu0 0.0
      %2763 = vmatpush1.xpose.msra.mxu0 %v2572
      %2764 = vmatprep.subr.mxu0 0.0
      %2765 = vmatpush1.xpose.msra.mxu0 %v2575
      %2766 = vmatprep.subr.mxu0 0.0
      %2767 = vmatpush1.xpose.msra.mxu0 %v2578
      %2768 = vmatprep.subr.mxu0 0.0
      %2769 = vmatpush1.xpose.msra.mxu0 %v2581
      %2770 = vmatprep.subr.mxu0 0.0
      %2771 = vmatpush1.xpose.msra.mxu0 %v2584
      %2772 = vmatprep.subr.mxu0 0.0
      %2773 = vmatpush1.xpose.msra.mxu0 %v2587
      %2774 = vmatprep.subr.mxu0 0.0
      %2775 = vmatpush1.xpose.msra.mxu0 %v2590
      %2776 = vmatprep.subr.mxu0 0.0
      %2777 = vmatpush1.xpose.msra.mxu0 %v2593
      %2778 = vmatprep.subr.mxu0 0.0
      %2779 = vmatpush1.xpose.msra.mxu0 %v2596
      %2780 = vmatprep.subr.mxu0 0.0
      %2781 = vmatpush1.xpose.msra.mxu0 %v2599
      %2782 = vmatprep.subr.mxu0 0.0
      %2783 = vmatpush1.xpose.msra.mxu0 %v2602
      %2784 = vmatprep.subr.mxu0 0.0
      %2785 = vmatpush1.xpose.msra.mxu0 %v2605
      %2786 = vmatprep.subr.mxu0 0.0
      %2787 = vmatpush1.xpose.msra.mxu0 %v2608
      %2788 = vmatprep.subr.mxu0 0.0
      %2789 = vmatpush1.xpose.msra.mxu0 %v2611
      %2790 = vmatprep.subr.mxu0 0.0
      %2791 = vmatpush1.xpose.msra.mxu0 %v2614
      %2792 = vmatprep.subr.mxu0 0.0
      %2793 = vmatpush1.xpose.msra.mxu0 %v2617
      %2794 = vmatprep.subr.mxu0 0.0
      %2795 = vmatpush1.xpose.msra.mxu0 %v2620
      %2796 = vmatprep.subr.mxu0 0.0
      %2797 = vmatpush1.xpose.msra.mxu0 %v2623
      %2798 = vmatprep.subr.mxu0 0.0
      %2799 = vmatpush1.xpose.msra.mxu0 %v2626
      %2800 = vmatprep.subr.mxu0 0.0
      %2801 = vmatpush1.xpose.msra.mxu0 %v2629
      %2802 = vmatprep.subr.mxu0 0.0
      %2803 = vmatpush1.xpose.msra.mxu0 %v2632
      %2804 = vmatprep.subr.mxu0 0.0
      %2805 = vmatpush1.xpose.msra.mxu0 %v2635
      %2806 = vmatprep.subr.mxu0 0.0
      %2807 = vmatpush1.xpose.msra.mxu0 %v2638
      %2808 = vmatprep.subr.mxu0 0.0
      %2809 = vmatpush1.xpose.msra.mxu0 %v2641
      %2810 = vmatprep.subr.mxu0 0.0
      %2811 = vmatpush1.xpose.msra.mxu0 %v2644
      %2812 = vmatprep.subr.mxu0 0.0
      %2813 = vmatpush1.xpose.msra.mxu0 %v2647
      %2814 = vmatprep.subr.mxu0 0.0
      %2815 = vmatpush1.xpose.msra.mxu0 %v2650
      %2816 = vmatprep.subr.mxu0 0.0
      %2817 = vmatpush1.xpose.msra.mxu0 %v2653
      %2818 = vmatprep.subr.mxu0 0.0
      %2819 = vmatpush1.xpose.msra.mxu0 %v2656
      %2820 = vmatprep.subr.mxu0 0.0
      %2821 = vmatpush1.xpose.msra.mxu0 %v2659
      %2822 = vmatprep.subr.mxu0 0.0
      %2823 = vmatpush1.xpose.msra.mxu0 %v2662
      %2824 = vmatprep.mubr.f32.mxu0 0.0
      %2825 = vmatmul.mubr.f32.gmra.mrb[0].mxu0 %v2566
      %v2826 = vpop.f32.mrb[0].mxu0
      %v2827 = vadd.f32 0.0, %v2826
      %v2828 = vpop.f32.mrb[0].mxu0
      %v2829 = vadd.f32 0.0, %v2828
      %2830 = vdwg.mxu0
      %2831 = vmatprep.subr.mxu0 0.0
      %2832 = vmatpush1.xpose.msra.mxu0 %v2665
      %2833 = vmatprep.subr.mxu0 0.0
      %2834 = vmatpush1.xpose.msra.mxu0 %v2668
      %2835 = vmatprep.subr.mxu0 0.0
      %2836 = vmatpush1.xpose.msra.mxu0 %v2671
      %2837 = vmatprep.subr.mxu0 0.0
      %2838 = vmatpush1.xpose.msra.mxu0 %v2674
      %2839 = vmatprep.subr.mxu0 0.0
      %2840 = vmatpush1.xpose.msra.mxu0 %v2677
      %2841 = vmatprep.subr.mxu0 0.0
      %2842 = vmatpush1.xpose.msra.mxu0 %v2680
      %2843 = vmatprep.subr.mxu0 0.0
      %2844 = vmatpush1.xpose.msra.mxu0 %v2683
      %2845 = vmatprep.subr.mxu0 0.0
      %2846 = vmatpush1.xpose.msra.mxu0 %v2686
      %2847 = vmatprep.subr.mxu0 0.0
      %2848 = vmatpush1.xpose.msra.mxu0 %v2689
      %2849 = vmatprep.subr.mxu0 0.0
      %2850 = vmatpush1.xpose.msra.mxu0 %v2692
      %2851 = vmatprep.subr.mxu0 0.0
      %2852 = vmatpush1.xpose.msra.mxu0 %v2695
      %2853 = vmatprep.subr.mxu0 0.0
      %2854 = vmatpush1.xpose.msra.mxu0 %v2698
      %2855 = vmatprep.subr.mxu0 0.0
      %2856 = vmatpush1.xpose.msra.mxu0 %v2701
      %2857 = vmatprep.subr.mxu0 0.0
      %2858 = vmatpush1.xpose.msra.mxu0 %v2704
      %2859 = vmatprep.subr.mxu0 0.0
      %2860 = vmatpush1.xpose.msra.mxu0 %v2707
      %2861 = vmatprep.subr.mxu0 0.0
      %2862 = vmatpush1.xpose.msra.mxu0 %v2710
      %2863 = vmatprep.subr.mxu0 0.0
      %2864 = vmatpush1.xpose.msra.mxu0 %v2713
      %2865 = vmatprep.subr.mxu0 0.0
      %2866 = vmatpush1.xpose.msra.mxu0 %v2716
      %2867 = vmatprep.subr.mxu0 0.0
      %2868 = vmatpush1.xpose.msra.mxu0 %v2719
      %2869 = vmatprep.subr.mxu0 0.0
      %2870 = vmatpush1.xpose.msra.mxu0 %v2722
      %2871 = vmatprep.subr.mxu0 0.0
      %2872 = vmatpush1.xpose.msra.mxu0 %v2725
      %2873 = vmatprep.subr.mxu0 0.0
      %2874 = vmatpush1.xpose.msra.mxu0 %v2728
      %2875 = vmatprep.subr.mxu0 0.0
      %2876 = vmatpush1.xpose.msra.mxu0 %v2731
      %2877 = vmatprep.subr.mxu0 0.0
      %2878 = vmatpush1.xpose.msra.mxu0 %v2734
      %2879 = vmatprep.subr.mxu0 0.0
      %2880 = vmatpush1.xpose.msra.mxu0 %v2737
      %2881 = vmatprep.subr.mxu0 0.0
      %2882 = vmatpush1.xpose.msra.mxu0 %v2740
      %2883 = vmatprep.subr.mxu0 0.0
      %2884 = vmatpush1.xpose.msra.mxu0 %v2743
      %2885 = vmatprep.subr.mxu0 0.0
      %2886 = vmatpush1.xpose.msra.mxu0 %v2746
      %2887 = vmatprep.subr.mxu0 0.0
      %2888 = vmatpush1.xpose.msra.mxu0 %v2749
      %2889 = vmatprep.subr.mxu0 0.0
      %2890 = vmatpush1.xpose.msra.mxu0 %v2752
      %2891 = vmatprep.subr.mxu0 0.0
      %2892 = vmatpush1.xpose.msra.mxu0 %v2755
      %2893 = vmatprep.subr.mxu0 0.0
      %2894 = vmatpush1.xpose.msra.mxu0 %v2758
      %2895 = vmatprep.mubr.f32.mxu0 0.0
      %2896 = vmatmul.mubr.f32.gmra.mrb[0].mxu0 %v2566
      %v2897 = vpop.f32.mrb[0].mxu0
      %v2898 = vadd.f32 0.0, %v2897
      %v2899 = vpop.f32.mrb[0].mxu0
      %v2900 = vadd.f32 0.0, %v2899
      %2901 = vdwg.mxu0
      %v2902 = vmax.f32 %v2827, -5.0
      %v2903 = vmax.f32 %v2829, -5.0
      %v2904 = vmax.f32 %v2898, -5.0
      %v2905 = vmax.f32 %v2900, -5.0
      %v2906 = vmin.f32 %v2902, 5.0
      %v2907 = vmin.f32 %v2903, 5.0
      %v2908 = vmin.f32 %v2904, 5.0
      %v2909 = vmin.f32 %v2905, 5.0
      %v2910 = vmul.f32 %v2906, 1.442695
      %v2911 = vpow.pop %v2910
      %v2912 = vmul.f32 %v2907, 1.442695
      %v2913 = vpow.pop %v2912
      %v2914 = vmul.f32 %v2908, 1.442695
      %v2915 = vpow.pop %v2914
      %v2916 = vmul.f32 %v2909, 1.442695
      %v2917 = vpow.pop %v2916
      %v2918 = vld [vmem:[%s404] sm:$0xf]
      %v2920 = vlaneseq
      %v2921 = vshrl.u32 %v2920, 7
      %v2922 = vsub.s32 0, %v2921
      %v2923 = vrot.slane %v2918, %v2922
      %v2924 = vlaneseq
      %v2925 = vshrl.u32 %v2924, 7
      %v2926 = vsub.s32 1, %v2925
      %v2927 = vrot.slane %v2918, %v2926
      %v2928 = vlaneseq
      %v2929 = vshrl.u32 %v2928, 7
      %v2930 = vsub.s32 2, %v2929
      %v2931 = vrot.slane %v2918, %v2930
      %v2932 = vlaneseq
      %v2933 = vshrl.u32 %v2932, 7
      %v2934 = vsub.s32 3, %v2933
      %v2935 = vrot.slane %v2918, %v2934
      %v2940 = vmul.f32 %v2911, %v2923
      %v2941 = vmul.f32 %v2913, %v2927
      %v2942 = vmul.f32 %v2915, %v2931
      %v2943 = vmul.f32 %v2917, %v2935
      %2944 = vst [vmem:[%s416] sm:$0xff] %v2940
      %2945 = vst [vmem:[%s416 + $0x8] sm:$0xff] %v2941
      %2946 = vst [vmem:[%s416 + $0x10] sm:$0xff] %v2942
      %2947 = vst [vmem:[%s416 + $0x18] sm:$0xff] %v2943
      %v2948 = vld [vmem:[%s8] sm:$0xff]
      %2949 = vxpose.xlu0.b32.start [1/16] %v2940, 128
      %2950 = vxpose.xlu0.b32.cont [2/16] 0.0, 128
      %2951 = vxpose.xlu0.b32.cont [3/16] 0.0, 128
      %2952 = vxpose.xlu0.b32.cont [4/16] 0.0, 128
      %2953 = vxpose.xlu0.b32.cont [5/16] 0.0, 128
      %2954 = vxpose.xlu0.b32.cont [6/16] 0.0, 128
      %2955 = vxpose.xlu0.b32.cont [7/16] 0.0, 128
      %2956 = vxpose.xlu0.b32.cont [8/16] 0.0, 128
      %2957 = vxpose.xlu0.b32.cont [9/16] 0.0, 128
      %2958 = vxpose.xlu0.b32.cont [10/16] 0.0, 128
      %2959 = vxpose.xlu0.b32.cont [11/16] 0.0, 128
      %2960 = vxpose.xlu0.b32.cont [12/16] 0.0, 128
      %2961 = vxpose.xlu0.b32.cont [13/16] 0.0, 128
      %2962 = vxpose.xlu0.b32.cont [14/16] 0.0, 128
      %2963 = vxpose.xlu0.b32.cont [15/16] 0.0, 128
      %2964 = vxpose.xlu0.b32.end [16/16] 0.0, 128
      %v2965 = vpop.trf.xlu0
      %v2966 = vpop.trf.xlu0
      %v2967 = vpop.trf.xlu0
      %v2968 = vpop.trf.xlu0
      %v2969 = vpop.trf.xlu0
      %v2970 = vpop.trf.xlu0
      %v2971 = vpop.trf.xlu0
      %v2972 = vpop.trf.xlu0
      %v2973 = vpop.trf.xlu0
      %v2974 = vpop.trf.xlu0
      %v2975 = vpop.trf.xlu0
      %v2976 = vpop.trf.xlu0
      %v2977 = vpop.trf.xlu0
      %v2978 = vpop.trf.xlu0
      %v2979 = vpop.trf.xlu0
      %v2980 = vpop.trf.xlu0
      %2981 = vxpose.xlu0.b32.start [1/16] %v2941, 128
      %2982 = vxpose.xlu0.b32.cont [2/16] 0.0, 128
      %2983 = vxpose.xlu0.b32.cont [3/16] 0.0, 128
      %2984 = vxpose.xlu0.b32.cont [4/16] 0.0, 128
      %2985 = vxpose.xlu0.b32.cont [5/16] 0.0, 128
      %2986 = vxpose.xlu0.b32.cont [6/16] 0.0, 128
      %2987 = vxpose.xlu0.b32.cont [7/16] 0.0, 128
      %2988 = vxpose.xlu0.b32.cont [8/16] 0.0, 128
      %2989 = vxpose.xlu0.b32.cont [9/16] 0.0, 128
      %2990 = vxpose.xlu0.b32.cont [10/16] 0.0, 128
      %2991 = vxpose.xlu0.b32.cont [11/16] 0.0, 128
      %2992 = vxpose.xlu0.b32.cont [12/16] 0.0, 128
      %2993 = vxpose.xlu0.b32.cont [13/16] 0.0, 128
      %2994 = vxpose.xlu0.b32.cont [14/16] 0.0, 128
      %2995 = vxpose.xlu0.b32.cont [15/16] 0.0, 128
      %2996 = vxpose.xlu0.b32.end [16/16] 0.0, 128
      %v2997 = vpop.trf.xlu0
      %v2998 = vpop.trf.xlu0
      %v2999 = vpop.trf.xlu0
      %v3000 = vpop.trf.xlu0
      %v3001 = vpop.trf.xlu0
      %v3002 = vpop.trf.xlu0
      %v3003 = vpop.trf.xlu0
      %v3004 = vpop.trf.xlu0
      %v3005 = vpop.trf.xlu0
      %v3006 = vpop.trf.xlu0
      %v3007 = vpop.trf.xlu0
      %v3008 = vpop.trf.xlu0
      %v3009 = vpop.trf.xlu0
      %v3010 = vpop.trf.xlu0
      %v3011 = vpop.trf.xlu0
      %v3012 = vpop.trf.xlu0
      %3013 = vxpose.xlu0.b32.start [1/16] %v2942, 128
      %3014 = vxpose.xlu0.b32.cont [2/16] 0.0, 128
      %3015 = vxpose.xlu0.b32.cont [3/16] 0.0, 128
      %3016 = vxpose.xlu0.b32.cont [4/16] 0.0, 128
      %3017 = vxpose.xlu0.b32.cont [5/16] 0.0, 128
      %3018 = vxpose.xlu0.b32.cont [6/16] 0.0, 128
      %3019 = vxpose.xlu0.b32.cont [7/16] 0.0, 128
      %3020 = vxpose.xlu0.b32.cont [8/16] 0.0, 128
      %3021 = vxpose.xlu0.b32.cont [9/16] 0.0, 128
      %3022 = vxpose.xlu0.b32.cont [10/16] 0.0, 128
      %3023 = vxpose.xlu0.b32.cont [11/16] 0.0, 128
      %3024 = vxpose.xlu0.b32.cont [12/16] 0.0, 128
      %3025 = vxpose.xlu0.b32.cont [13/16] 0.0, 128
      %3026 = vxpose.xlu0.b32.cont [14/16] 0.0, 128
      %3027 = vxpose.xlu0.b32.cont [15/16] 0.0, 128
      %3028 = vxpose.xlu0.b32.end [16/16] 0.0, 128
      %v3029 = vpop.trf.xlu0
      %v3030 = vpop.trf.xlu0
      %v3031 = vpop.trf.xlu0
      %v3032 = vpop.trf.xlu0
      %v3033 = vpop.trf.xlu0
      %v3034 = vpop.trf.xlu0
      %v3035 = vpop.trf.xlu0
      %v3036 = vpop.trf.xlu0
      %v3037 = vpop.trf.xlu0
      %v3038 = vpop.trf.xlu0
      %v3039 = vpop.trf.xlu0
      %v3040 = vpop.trf.xlu0
      %v3041 = vpop.trf.xlu0
      %v3042 = vpop.trf.xlu0
      %v3043 = vpop.trf.xlu0
      %v3044 = vpop.trf.xlu0
      %3045 = vxpose.xlu0.b32.start [1/16] %v2943, 128
      %3046 = vxpose.xlu0.b32.cont [2/16] 0.0, 128
      %3047 = vxpose.xlu0.b32.cont [3/16] 0.0, 128
      %3048 = vxpose.xlu0.b32.cont [4/16] 0.0, 128
      %3049 = vxpose.xlu0.b32.cont [5/16] 0.0, 128
      %3050 = vxpose.xlu0.b32.cont [6/16] 0.0, 128
      %3051 = vxpose.xlu0.b32.cont [7/16] 0.0, 128
      %3052 = vxpose.xlu0.b32.cont [8/16] 0.0, 128
      %3053 = vxpose.xlu0.b32.cont [9/16] 0.0, 128
      %3054 = vxpose.xlu0.b32.cont [10/16] 0.0, 128
      %3055 = vxpose.xlu0.b32.cont [11/16] 0.0, 128
      %3056 = vxpose.xlu0.b32.cont [12/16] 0.0, 128
      %3057 = vxpose.xlu0.b32.cont [13/16] 0.0, 128
      %3058 = vxpose.xlu0.b32.cont [14/16] 0.0, 128
      %3059 = vxpose.xlu0.b32.cont [15/16] 0.0, 128
      %3060 = vxpose.xlu0.b32.end [16/16] 0.0, 128
      %v3061 = vpop.trf.xlu0
      %v3062 = vpop.trf.xlu0
      %v3063 = vpop.trf.xlu0
      %v3064 = vpop.trf.xlu0
      %v3065 = vpop.trf.xlu0
      %v3066 = vpop.trf.xlu0
      %v3067 = vpop.trf.xlu0
      %v3068 = vpop.trf.xlu0
      %v3069 = vpop.trf.xlu0
      %v3070 = vpop.trf.xlu0
      %v3071 = vpop.trf.xlu0
      %v3072 = vpop.trf.xlu0
      %v3073 = vpop.trf.xlu0
      %v3074 = vpop.trf.xlu0
      %v3075 = vpop.trf.xlu0
      %v3076 = vpop.trf.xlu0
      %vm3077 = vcmask 64512
      %v3079 = vsel %vm3077, %v2965, 0
      %v3082 = vsel %vm3077, %v2966, 0
      %v3085 = vsel %vm3077, %v2967, 0
      %v3088 = vsel %vm3077, %v2968, 0
      %v3091 = vsel %vm3077, %v2969, 0
      %v3094 = vsel %vm3077, %v2970, 0
      %v3097 = vsel %vm3077, %v2971, 0
      %v3100 = vsel %vm3077, %v2972, 0
      %v3103 = vsel %vm3077, %v2973, 0
      %v3106 = vsel %vm3077, %v2974, 0
      %v3109 = vsel %vm3077, %v2975, 0
      %v3112 = vsel %vm3077, %v2976, 0
      %v3115 = vsel %vm3077, %v2977, 0
      %v3118 = vsel %vm3077, %v2978, 0
      %v3121 = vsel %vm3077, %v2979, 0
      %v3124 = vsel %vm3077, %v2980, 0
      %v3127 = vsel %vm3077, %v2997, 0
      %v3130 = vsel %vm3077, %v2998, 0
      %v3133 = vsel %vm3077, %v2999, 0
      %v3136 = vsel %vm3077, %v3000, 0
      %v3139 = vsel %vm3077, %v3001, 0
      %v3142 = vsel %vm3077, %v3002, 0
      %v3145 = vsel %vm3077, %v3003, 0
      %v3148 = vsel %vm3077, %v3004, 0
      %v3151 = vsel %vm3077, %v3005, 0
      %v3154 = vsel %vm3077, %v3006, 0
      %v3157 = vsel %vm3077, %v3007, 0
      %v3160 = vsel %vm3077, %v3008, 0
      %v3163 = vsel %vm3077, %v3009, 0
      %v3166 = vsel %vm3077, %v3010, 0
      %v3169 = vsel %vm3077, %v3011, 0
      %v3172 = vsel %vm3077, %v3012, 0
      %v3175 = vsel %vm3077, %v3029, 0
      %v3178 = vsel %vm3077, %v3030, 0
      %v3181 = vsel %vm3077, %v3031, 0
      %v3184 = vsel %vm3077, %v3032, 0
      %v3187 = vsel %vm3077, %v3033, 0
      %v3190 = vsel %vm3077, %v3034, 0
      %v3193 = vsel %vm3077, %v3035, 0
      %v3196 = vsel %vm3077, %v3036, 0
      %v3199 = vsel %vm3077, %v3037, 0
      %v3202 = vsel %vm3077, %v3038, 0
      %v3205 = vsel %vm3077, %v3039, 0
      %v3208 = vsel %vm3077, %v3040, 0
      %v3211 = vsel %vm3077, %v3041, 0
      %v3214 = vsel %vm3077, %v3042, 0
      %v3217 = vsel %vm3077, %v3043, 0
      %v3220 = vsel %vm3077, %v3044, 0
      %v3223 = vsel %vm3077, %v3061, 0
      %v3226 = vsel %vm3077, %v3062, 0
      %v3229 = vsel %vm3077, %v3063, 0
      %v3232 = vsel %vm3077, %v3064, 0
      %v3235 = vsel %vm3077, %v3065, 0
      %v3238 = vsel %vm3077, %v3066, 0
      %v3241 = vsel %vm3077, %v3067, 0
      %v3244 = vsel %vm3077, %v3068, 0
      %v3247 = vsel %vm3077, %v3069, 0
      %v3250 = vsel %vm3077, %v3070, 0
      %v3253 = vsel %vm3077, %v3071, 0
      %v3256 = vsel %vm3077, %v3072, 0
      %v3259 = vsel %vm3077, %v3073, 0
      %v3262 = vsel %vm3077, %v3074, 0
      %v3265 = vsel %vm3077, %v3075, 0
      %v3268 = vsel %vm3077, %v3076, 0
      %3270 = vmatprep.subr.mxu0 0.0
      %3271 = vmatpush1.msra.mxu0 %v2948
      %3272 = vmatprep.subr.mxu0 0.0
      %3273 = vmatpush1.msra.mxu0 0.0
      %3274 = vmatprep.subr.mxu0 0.0
      %3275 = vmatpush1.msra.mxu0 0.0
      %3276 = vmatprep.subr.mxu0 0.0
      %3277 = vmatpush1.msra.mxu0 0.0
      %3278 = vmatprep.subr.mxu0 0.0
      %3279 = vmatpush1.msra.mxu0 0.0
      %3280 = vmatprep.subr.mxu0 0.0
      %3281 = vmatpush1.msra.mxu0 0.0
      %3282 = vmatprep.subr.mxu0 0.0
      %3283 = vmatpush1.msra.mxu0 0.0
      %3284 = vmatprep.subr.mxu0 0.0
      %3285 = vmatpush1.msra.mxu0 0.0
      %3286 = vmatprep.subr.mxu0 0.0
      %3287 = vmatpush1.msra.mxu0 0.0
      %3288 = vmatprep.subr.mxu0 0.0
      %3289 = vmatpush1.msra.mxu0 0.0
      %3290 = vmatprep.subr.mxu0 0.0
      %3291 = vmatpush1.msra.mxu0 0.0
      %3292 = vmatprep.subr.mxu0 0.0
      %3293 = vmatpush1.msra.mxu0 0.0
      %3294 = vmatprep.subr.mxu0 0.0
      %3295 = vmatpush1.msra.mxu0 0.0
      %3296 = vmatprep.subr.mxu0 0.0
      %3297 = vmatpush1.msra.mxu0 0.0
      %3298 = vmatprep.subr.mxu0 0.0
      %3299 = vmatpush1.msra.mxu0 0.0
      %3300 = vmatprep.subr.mxu0 0.0
      %3301 = vmatpush1.msra.mxu0 0.0
      %3302 = vmatprep.subr.mxu0 0.0
      %3303 = vmatpush1.msra.mxu0 0.0
      %3304 = vmatprep.subr.mxu0 0.0
      %3305 = vmatpush1.msra.mxu0 0.0
      %3306 = vmatprep.subr.mxu0 0.0
      %3307 = vmatpush1.msra.mxu0 0.0
      %3308 = vmatprep.subr.mxu0 0.0
      %3309 = vmatpush1.msra.mxu0 0.0
      %3310 = vmatprep.subr.mxu0 0.0
      %3311 = vmatpush1.msra.mxu0 0.0
      %3312 = vmatprep.subr.mxu0 0.0
      %3313 = vmatpush1.msra.mxu0 0.0
      %3314 = vmatprep.subr.mxu0 0.0
      %3315 = vmatpush1.msra.mxu0 0.0
      %3316 = vmatprep.subr.mxu0 0.0
      %3317 = vmatpush1.msra.mxu0 0.0
      %3318 = vmatprep.subr.mxu0 0.0
      %3319 = vmatpush1.msra.mxu0 0.0
      %3320 = vmatprep.subr.mxu0 0.0
      %3321 = vmatpush1.msra.mxu0 0.0
      %3322 = vmatprep.subr.mxu0 0.0
      %3323 = vmatpush1.msra.mxu0 0.0
      %3324 = vmatprep.subr.mxu0 0.0
      %3325 = vmatpush1.msra.mxu0 0.0
      %3326 = vmatprep.subr.mxu0 0.0
      %3327 = vmatpush1.msra.mxu0 0.0
      %3328 = vmatprep.subr.mxu0 0.0
      %3329 = vmatpush1.msra.mxu0 0.0
      %3330 = vmatprep.subr.mxu0 0.0
      %3331 = vmatpush1.msra.mxu0 0.0
      %3332 = vmatprep.subr.mxu0 0.0
      %3333 = vmatpush1.msra.mxu0 0.0
      %3334 = vmatprep.mubr.f32.mxu0 0.0
      %3335 = vmatmul.mubr.f32.gmra.mrb[0].mxu0 %v3079
      %v3336 = vpop.f32.mrb[0].mxu0
      %v3337 = vadd.f32 0.0, %v3336
      %v3338 = vpop.f32.mrb[0].mxu0
      %3339 = vmatprep.mubr.f32.mxu0 0.0
      %3340 = vmatmul.mubr.f32.gmra.mrb[0].mxu0 %v3082
      %v3341 = vpop.f32.mrb[0].mxu0
      %v3342 = vadd.f32 0.0, %v3341
      %v3343 = vpop.f32.mrb[0].mxu0
      %3344 = vmatprep.mubr.f32.mxu0 0.0
      %3345 = vmatmul.mubr.f32.gmra.mrb[0].mxu0 %v3085
      %v3346 = vpop.f32.mrb[0].mxu0
      %v3347 = vadd.f32 0.0, %v3346
      %v3348 = vpop.f32.mrb[0].mxu0
      %3349 = vmatprep.mubr.f32.mxu0 0.0
      %3350 = vmatmul.mubr.f32.gmra.mrb[0].mxu0 %v3088
      %v3351 = vpop.f32.mrb[0].mxu0
      %v3352 = vadd.f32 0.0, %v3351
      %v3353 = vpop.f32.mrb[0].mxu0
      %3354 = vmatprep.mubr.f32.mxu0 0.0
      %3355 = vmatmul.mubr.f32.gmra.mrb[0].mxu0 %v3091
      %v3356 = vpop.f32.mrb[0].mxu0
      %v3357 = vadd.f32 0.0, %v3356
      %v3358 = vpop.f32.mrb[0].mxu0
      %3359 = vmatprep.mubr.f32.mxu0 0.0
      %3360 = vmatmul.mubr.f32.gmra.mrb[0].mxu0 %v3094
      %v3361 = vpop.f32.mrb[0].mxu0
      %v3362 = vadd.f32 0.0, %v3361
      %v3363 = vpop.f32.mrb[0].mxu0
      %3364 = vmatprep.mubr.f32.mxu0 0.0
      %3365 = vmatmul.mubr.f32.gmra.mrb[0].mxu0 %v3097
      %v3366 = vpop.f32.mrb[0].mxu0
      %v3367 = vadd.f32 0.0, %v3366
      %v3368 = vpop.f32.mrb[0].mxu0
      %3369 = vmatprep.mubr.f32.mxu0 0.0
      %3370 = vmatmul.mubr.f32.gmra.mrb[0].mxu0 %v3100
      %v3371 = vpop.f32.mrb[0].mxu0
      %v3372 = vadd.f32 0.0, %v3371
      %v3373 = vpop.f32.mrb[0].mxu0
      %3374 = vmatprep.mubr.f32.mxu0 0.0
      %3375 = vmatmul.mubr.f32.gmra.mrb[0].mxu0 %v3103
      %v3376 = vpop.f32.mrb[0].mxu0
      %v3377 = vadd.f32 0.0, %v3376
      %v3378 = vpop.f32.mrb[0].mxu0
      %3379 = vmatprep.mubr.f32.mxu0 0.0
      %3380 = vmatmul.mubr.f32.gmra.mrb[0].mxu0 %v3106
      %v3381 = vpop.f32.mrb[0].mxu0
      %v3382 = vadd.f32 0.0, %v3381
      %v3383 = vpop.f32.mrb[0].mxu0
      %3384 = vmatprep.mubr.f32.mxu0 0.0
      %3385 = vmatmul.mubr.f32.gmra.mrb[0].mxu0 %v3109
      %v3386 = vpop.f32.mrb[0].mxu0
      %v3387 = vadd.f32 0.0, %v3386
      %v3388 = vpop.f32.mrb[0].mxu0
      %3389 = vmatprep.mubr.f32.mxu0 0.0
      %3390 = vmatmul.mubr.f32.gmra.mrb[0].mxu0 %v3112
      %v3391 = vpop.f32.mrb[0].mxu0
      %v3392 = vadd.f32 0.0, %v3391
      %v3393 = vpop.f32.mrb[0].mxu0
      %3394 = vmatprep.mubr.f32.mxu0 0.0
      %3395 = vmatmul.mubr.f32.gmra.mrb[0].mxu0 %v3115
      %v3396 = vpop.f32.mrb[0].mxu0
      %v3397 = vadd.f32 0.0, %v3396
      %v3398 = vpop.f32.mrb[0].mxu0
      %3399 = vmatprep.mubr.f32.mxu0 0.0
      %3400 = vmatmul.mubr.f32.gmra.mrb[0].mxu0 %v3118
      %v3401 = vpop.f32.mrb[0].mxu0
      %v3402 = vadd.f32 0.0, %v3401
      %v3403 = vpop.f32.mrb[0].mxu0
      %3404 = vmatprep.mubr.f32.mxu0 0.0
      %3405 = vmatmul.mubr.f32.gmra.mrb[0].mxu0 %v3121
      %v3406 = vpop.f32.mrb[0].mxu0
      %v3407 = vadd.f32 0.0, %v3406
      %v3408 = vpop.f32.mrb[0].mxu0
      %3409 = vmatprep.mubr.f32.mxu0 0.0
      %3410 = vmatmul.mubr.f32.gmra.mrb[0].mxu0 %v3124
      %v3411 = vpop.f32.mrb[0].mxu0
      %v3412 = vadd.f32 0.0, %v3411
      %v3413 = vpop.f32.mrb[0].mxu0
      %3414 = vmatprep.mubr.f32.mxu0 0.0
      %3415 = vmatmul.mubr.f32.gmra.mrb[0].mxu0 %v3127
      %v3416 = vpop.f32.mrb[0].mxu0
      %v3417 = vadd.f32 0.0, %v3416
      %v3418 = vpop.f32.mrb[0].mxu0
      %3419 = vmatprep.mubr.f32.mxu0 0.0
      %3420 = vmatmul.mubr.f32.gmra.mrb[0].mxu0 %v3130
      %v3421 = vpop.f32.mrb[0].mxu0
      %v3422 = vadd.f32 0.0, %v3421
      %v3423 = vpop.f32.mrb[0].mxu0
      %3424 = vmatprep.mubr.f32.mxu0 0.0
      %3425 = vmatmul.mubr.f32.gmra.mrb[0].mxu0 %v3133
      %v3426 = vpop.f32.mrb[0].mxu0
      %v3427 = vadd.f32 0.0, %v3426
      %v3428 = vpop.f32.mrb[0].mxu0
      %3429 = vmatprep.mubr.f32.mxu0 0.0
      %3430 = vmatmul.mubr.f32.gmra.mrb[0].mxu0 %v3136
      %v3431 = vpop.f32.mrb[0].mxu0
      %v3432 = vadd.f32 0.0, %v3431
      %v3433 = vpop.f32.mrb[0].mxu0
      %3434 = vmatprep.mubr.f32.mxu0 0.0
      %3435 = vmatmul.mubr.f32.gmra.mrb[0].mxu0 %v3139
      %v3436 = vpop.f32.mrb[0].mxu0
      %v3437 = vadd.f32 0.0, %v3436
      %v3438 = vpop.f32.mrb[0].mxu0
      %3439 = vmatprep.mubr.f32.mxu0 0.0
      %3440 = vmatmul.mubr.f32.gmra.mrb[0].mxu0 %v3142
      %v3441 = vpop.f32.mrb[0].mxu0
      %v3442 = vadd.f32 0.0, %v3441
      %v3443 = vpop.f32.mrb[0].mxu0
      %3444 = vmatprep.mubr.f32.mxu0 0.0
      %3445 = vmatmul.mubr.f32.gmra.mrb[0].mxu0 %v3145
      %v3446 = vpop.f32.mrb[0].mxu0
      %v3447 = vadd.f32 0.0, %v3446
      %v3448 = vpop.f32.mrb[0].mxu0
      %3449 = vmatprep.mubr.f32.mxu0 0.0
      %3450 = vmatmul.mubr.f32.gmra.mrb[0].mxu0 %v3148
      %v3451 = vpop.f32.mrb[0].mxu0
      %v3452 = vadd.f32 0.0, %v3451
      %v3453 = vpop.f32.mrb[0].mxu0
      %3454 = vmatprep.mubr.f32.mxu0 0.0
      %3455 = vmatmul.mubr.f32.gmra.mrb[0].mxu0 %v3151
      %v3456 = vpop.f32.mrb[0].mxu0
      %v3457 = vadd.f32 0.0, %v3456
      %v3458 = vpop.f32.mrb[0].mxu0
      %3459 = vmatprep.mubr.f32.mxu0 0.0
      %3460 = vmatmul.mubr.f32.gmra.mrb[0].mxu0 %v3154
      %v3461 = vpop.f32.mrb[0].mxu0
      %v3462 = vadd.f32 0.0, %v3461
      %v3463 = vpop.f32.mrb[0].mxu0
      %3464 = vmatprep.mubr.f32.mxu0 0.0
      %3465 = vmatmul.mubr.f32.gmra.mrb[0].mxu0 %v3157
      %v3466 = vpop.f32.mrb[0].mxu0
      %v3467 = vadd.f32 0.0, %v3466
      %v3468 = vpop.f32.mrb[0].mxu0
      %3469 = vmatprep.mubr.f32.mxu0 0.0
      %3470 = vmatmul.mubr.f32.gmra.mrb[0].mxu0 %v3160
      %v3471 = vpop.f32.mrb[0].mxu0
      %v3472 = vadd.f32 0.0, %v3471
      %v3473 = vpop.f32.mrb[0].mxu0
      %3474 = vmatprep.mubr.f32.mxu0 0.0
      %3475 = vmatmul.mubr.f32.gmra.mrb[0].mxu0 %v3163
      %v3476 = vpop.f32.mrb[0].mxu0
      %v3477 = vadd.f32 0.0, %v3476
      %v3478 = vpop.f32.mrb[0].mxu0
      %3479 = vmatprep.mubr.f32.mxu0 0.0
      %3480 = vmatmul.mubr.f32.gmra.mrb[0].mxu0 %v3166
      %v3481 = vpop.f32.mrb[0].mxu0
      %v3482 = vadd.f32 0.0, %v3481
      %v3483 = vpop.f32.mrb[0].mxu0
      %3484 = vmatprep.mubr.f32.mxu0 0.0
      %3485 = vmatmul.mubr.f32.gmra.mrb[0].mxu0 %v3169
      %v3486 = vpop.f32.mrb[0].mxu0
      %v3487 = vadd.f32 0.0, %v3486
      %v3488 = vpop.f32.mrb[0].mxu0
      %3489 = vmatprep.mubr.f32.mxu0 0.0
      %3490 = vmatmul.mubr.f32.gmra.mrb[0].mxu0 %v3172
      %v3491 = vpop.f32.mrb[0].mxu0
      %v3492 = vadd.f32 0.0, %v3491
      %v3493 = vpop.f32.mrb[0].mxu0
      %3494 = vmatprep.mubr.f32.mxu0 0.0
      %3495 = vmatmul.mubr.f32.gmra.mrb[0].mxu0 %v3175
      %v3496 = vpop.f32.mrb[0].mxu0
      %v3497 = vadd.f32 0.0, %v3496
      %v3498 = vpop.f32.mrb[0].mxu0
      %3499 = vmatprep.mubr.f32.mxu0 0.0
      %3500 = vmatmul.mubr.f32.gmra.mrb[0].mxu0 %v3178
      %v3501 = vpop.f32.mrb[0].mxu0
      %v3502 = vadd.f32 0.0, %v3501
      %v3503 = vpop.f32.mrb[0].mxu0
      %3504 = vmatprep.mubr.f32.mxu0 0.0
      %3505 = vmatmul.mubr.f32.gmra.mrb[0].mxu0 %v3181
      %v3506 = vpop.f32.mrb[0].mxu0
      %v3507 = vadd.f32 0.0, %v3506
      %v3508 = vpop.f32.mrb[0].mxu0
      %3509 = vmatprep.mubr.f32.mxu0 0.0
      %3510 = vmatmul.mubr.f32.gmra.mrb[0].mxu0 %v3184
      %v3511 = vpop.f32.mrb[0].mxu0
      %v3512 = vadd.f32 0.0, %v3511
      %v3513 = vpop.f32.mrb[0].mxu0
      %3514 = vmatprep.mubr.f32.mxu0 0.0
      %3515 = vmatmul.mubr.f32.gmra.mrb[0].mxu0 %v3187
      %v3516 = vpop.f32.mrb[0].mxu0
      %v3517 = vadd.f32 0.0, %v3516
      %v3518 = vpop.f32.mrb[0].mxu0
      %3519 = vmatprep.mubr.f32.mxu0 0.0
      %3520 = vmatmul.mubr.f32.gmra.mrb[0].mxu0 %v3190
      %v3521 = vpop.f32.mrb[0].mxu0
      %v3522 = vadd.f32 0.0, %v3521
      %v3523 = vpop.f32.mrb[0].mxu0
      %3524 = vmatprep.mubr.f32.mxu0 0.0
      %3525 = vmatmul.mubr.f32.gmra.mrb[0].mxu0 %v3193
      %v3526 = vpop.f32.mrb[0].mxu0
      %v3527 = vadd.f32 0.0, %v3526
      %v3528 = vpop.f32.mrb[0].mxu0
      %3529 = vmatprep.mubr.f32.mxu0 0.0
      %3530 = vmatmul.mubr.f32.gmra.mrb[0].mxu0 %v3196
      %v3531 = vpop.f32.mrb[0].mxu0
      %v3532 = vadd.f32 0.0, %v3531
      %v3533 = vpop.f32.mrb[0].mxu0
      %3534 = vmatprep.mubr.f32.mxu0 0.0
      %3535 = vmatmul.mubr.f32.gmra.mrb[0].mxu0 %v3199
      %v3536 = vpop.f32.mrb[0].mxu0
      %v3537 = vadd.f32 0.0, %v3536
      %v3538 = vpop.f32.mrb[0].mxu0
      %3539 = vmatprep.mubr.f32.mxu0 0.0
      %3540 = vmatmul.mubr.f32.gmra.mrb[0].mxu0 %v3202
      %v3541 = vpop.f32.mrb[0].mxu0
      %v3542 = vadd.f32 0.0, %v3541
      %v3543 = vpop.f32.mrb[0].mxu0
      %3544 = vmatprep.mubr.f32.mxu0 0.0
      %3545 = vmatmul.mubr.f32.gmra.mrb[0].mxu0 %v3205
      %v3546 = vpop.f32.mrb[0].mxu0
      %v3547 = vadd.f32 0.0, %v3546
      %v3548 = vpop.f32.mrb[0].mxu0
      %3549 = vmatprep.mubr.f32.mxu0 0.0
      %3550 = vmatmul.mubr.f32.gmra.mrb[0].mxu0 %v3208
      %v3551 = vpop.f32.mrb[0].mxu0
      %v3552 = vadd.f32 0.0, %v3551
      %v3553 = vpop.f32.mrb[0].mxu0
      %3554 = vmatprep.mubr.f32.mxu0 0.0
      %3555 = vmatmul.mubr.f32.gmra.mrb[0].mxu0 %v3211
      %v3556 = vpop.f32.mrb[0].mxu0
      %v3557 = vadd.f32 0.0, %v3556
      %v3558 = vpop.f32.mrb[0].mxu0
      %3559 = vmatprep.mubr.f32.mxu0 0.0
      %3560 = vmatmul.mubr.f32.gmra.mrb[0].mxu0 %v3214
      %v3561 = vpop.f32.mrb[0].mxu0
      %v3562 = vadd.f32 0.0, %v3561
      %v3563 = vpop.f32.mrb[0].mxu0
      %3564 = vmatprep.mubr.f32.mxu0 0.0
      %3565 = vmatmul.mubr.f32.gmra.mrb[0].mxu0 %v3217
      %v3566 = vpop.f32.mrb[0].mxu0
      %v3567 = vadd.f32 0.0, %v3566
      %v3568 = vpop.f32.mrb[0].mxu0
      %3569 = vmatprep.mubr.f32.mxu0 0.0
      %3570 = vmatmul.mubr.f32.gmra.mrb[0].mxu0 %v3220
      %v3571 = vpop.f32.mrb[0].mxu0
      %v3572 = vadd.f32 0.0, %v3571
      %v3573 = vpop.f32.mrb[0].mxu0
      %3574 = vmatprep.mubr.f32.mxu0 0.0
      %3575 = vmatmul.mubr.f32.gmra.mrb[0].mxu0 %v3223
      %v3576 = vpop.f32.mrb[0].mxu0
      %v3577 = vadd.f32 0.0, %v3576
      %v3578 = vpop.f32.mrb[0].mxu0
      %3579 = vmatprep.mubr.f32.mxu0 0.0
      %3580 = vmatmul.mubr.f32.gmra.mrb[0].mxu0 %v3226
      %v3581 = vpop.f32.mrb[0].mxu0
      %v3582 = vadd.f32 0.0, %v3581
      %v3583 = vpop.f32.mrb[0].mxu0
      %3584 = vmatprep.mubr.f32.mxu0 0.0
      %3585 = vmatmul.mubr.f32.gmra.mrb[0].mxu0 %v3229
      %v3586 = vpop.f32.mrb[0].mxu0
      %v3587 = vadd.f32 0.0, %v3586
      %v3588 = vpop.f32.mrb[0].mxu0
      %3589 = vmatprep.mubr.f32.mxu0 0.0
      %3590 = vmatmul.mubr.f32.gmra.mrb[0].mxu0 %v3232
      %v3591 = vpop.f32.mrb[0].mxu0
      %v3592 = vadd.f32 0.0, %v3591
      %v3593 = vpop.f32.mrb[0].mxu0
      %3594 = vmatprep.mubr.f32.mxu0 0.0
      %3595 = vmatmul.mubr.f32.gmra.mrb[0].mxu0 %v3235
      %v3596 = vpop.f32.mrb[0].mxu0
      %v3597 = vadd.f32 0.0, %v3596
      %v3598 = vpop.f32.mrb[0].mxu0
      %3599 = vmatprep.mubr.f32.mxu0 0.0
      %3600 = vmatmul.mubr.f32.gmra.mrb[0].mxu0 %v3238
      %v3601 = vpop.f32.mrb[0].mxu0
      %v3602 = vadd.f32 0.0, %v3601
      %v3603 = vpop.f32.mrb[0].mxu0
      %3604 = vmatprep.mubr.f32.mxu0 0.0
      %3605 = vmatmul.mubr.f32.gmra.mrb[0].mxu0 %v3241
      %v3606 = vpop.f32.mrb[0].mxu0
      %v3607 = vadd.f32 0.0, %v3606
      %v3608 = vpop.f32.mrb[0].mxu0
      %3609 = vmatprep.mubr.f32.mxu0 0.0
      %3610 = vmatmul.mubr.f32.gmra.mrb[0].mxu0 %v3244
      %v3611 = vpop.f32.mrb[0].mxu0
      %v3612 = vadd.f32 0.0, %v3611
      %v3613 = vpop.f32.mrb[0].mxu0
      %3614 = vmatprep.mubr.f32.mxu0 0.0
      %3615 = vmatmul.mubr.f32.gmra.mrb[0].mxu0 %v3247
      %v3616 = vpop.f32.mrb[0].mxu0
      %v3617 = vadd.f32 0.0, %v3616
      %v3618 = vpop.f32.mrb[0].mxu0
      %3619 = vmatprep.mubr.f32.mxu0 0.0
      %3620 = vmatmul.mubr.f32.gmra.mrb[0].mxu0 %v3250
      %v3621 = vpop.f32.mrb[0].mxu0
      %v3622 = vadd.f32 0.0, %v3621
      %v3623 = vpop.f32.mrb[0].mxu0
      %3624 = vmatprep.mubr.f32.mxu0 0.0
      %3625 = vmatmul.mubr.f32.gmra.mrb[0].mxu0 %v3253
      %v3626 = vpop.f32.mrb[0].mxu0
      %v3627 = vadd.f32 0.0, %v3626
      %v3628 = vpop.f32.mrb[0].mxu0
      %3629 = vmatprep.mubr.f32.mxu0 0.0
      %3630 = vmatmul.mubr.f32.gmra.mrb[0].mxu0 %v3256
      %v3631 = vpop.f32.mrb[0].mxu0
      %v3632 = vadd.f32 0.0, %v3631
      %v3633 = vpop.f32.mrb[0].mxu0
      %3634 = vmatprep.mubr.f32.mxu0 0.0
      %3635 = vmatmul.mubr.f32.gmra.mrb[0].mxu0 %v3259
      %v3636 = vpop.f32.mrb[0].mxu0
      %v3637 = vadd.f32 0.0, %v3636
      %v3638 = vpop.f32.mrb[0].mxu0
      %3639 = vmatprep.mubr.f32.mxu0 0.0
      %3640 = vmatmul.mubr.f32.gmra.mrb[0].mxu0 %v3262
      %v3641 = vpop.f32.mrb[0].mxu0
      %v3642 = vadd.f32 0.0, %v3641
      %v3643 = vpop.f32.mrb[0].mxu0
      %3644 = vmatprep.mubr.f32.mxu0 0.0
      %3645 = vmatmul.mubr.f32.gmra.mrb[0].mxu0 %v3265
      %v3646 = vpop.f32.mrb[0].mxu0
      %v3647 = vadd.f32 0.0, %v3646
      %v3648 = vpop.f32.mrb[0].mxu0
      %3649 = vmatprep.mubr.f32.mxu0 0.0
      %3650 = vmatmul.mubr.f32.gmra.mrb[0].mxu0 %v3268
      %v3651 = vpop.f32.mrb[0].mxu0
      %v3652 = vadd.f32 0.0, %v3651
      %v3653 = vpop.f32.mrb[0].mxu0
      %3654 = vdwg.mxu0
      %v3655 = vmul.f32 %v2014, %v3337
      %v3656 = vmul.f32 %v2019, %v3342
      %v3657 = vmul.f32 %v2024, %v3347
      %v3658 = vmul.f32 %v2029, %v3352
      %v3659 = vmul.f32 %v2034, %v3357
      %v3660 = vmul.f32 %v2039, %v3362
      %v3661 = vmul.f32 %v2044, %v3367
      %v3662 = vmul.f32 %v2049, %v3372
      %v3663 = vmul.f32 %v2054, %v3377
      %v3664 = vmul.f32 %v2059, %v3382
      %v3665 = vmul.f32 %v2064, %v3387
      %v3666 = vmul.f32 %v2069, %v3392
      %v3667 = vmul.f32 %v2074, %v3397
      %v3668 = vmul.f32 %v2079, %v3402
      %v3669 = vmul.f32 %v2084, %v3407
      %v3670 = vmul.f32 %v2089, %v3412
      %v3671 = vmul.f32 %v2094, %v3417
      %v3672 = vmul.f32 %v2099, %v3422
      %v3673 = vmul.f32 %v2104, %v3427
      %v3674 = vmul.f32 %v2109, %v3432
      %v3675 = vmul.f32 %v2114, %v3437
      %v3676 = vmul.f32 %v2119, %v3442
      %v3677 = vmul.f32 %v2124, %v3447
      %v3678 = vmul.f32 %v2129, %v3452
      %v3679 = vmul.f32 %v2134, %v3457
      %v3680 = vmul.f32 %v2139, %v3462
      %v3681 = vmul.f32 %v2144, %v3467
      %v3682 = vmul.f32 %v2149, %v3472
      %v3683 = vmul.f32 %v2154, %v3477
      %v3684 = vmul.f32 %v2159, %v3482
      %v3685 = vmul.f32 %v2164, %v3487
      %v3686 = vmul.f32 %v2169, %v3492
      %v3687 = vmul.f32 %v2174, %v3497
      %v3688 = vmul.f32 %v2179, %v3502
      %v3689 = vmul.f32 %v2184, %v3507
      %v3690 = vmul.f32 %v2189, %v3512
      %v3691 = vmul.f32 %v2194, %v3517
      %v3692 = vmul.f32 %v2199, %v3522
      %v3693 = vmul.f32 %v2204, %v3527
      %v3694 = vmul.f32 %v2209, %v3532
      %v3695 = vmul.f32 %v2214, %v3537
      %v3696 = vmul.f32 %v2219, %v3542
      %v3697 = vmul.f32 %v2224, %v3547
      %v3698 = vmul.f32 %v2229, %v3552
      %v3699 = vmul.f32 %v2234, %v3557
      %v3700 = vmul.f32 %v2239, %v3562
      %v3701 = vmul.f32 %v2244, %v3567
      %v3702 = vmul.f32 %v2249, %v3572
      %v3703 = vmul.f32 %v2254, %v3577
      %v3704 = vmul.f32 %v2259, %v3582
      %v3705 = vmul.f32 %v2264, %v3587
      %v3706 = vmul.f32 %v2269, %v3592
      %v3707 = vmul.f32 %v2274, %v3597
      %v3708 = vmul.f32 %v2279, %v3602
      %v3709 = vmul.f32 %v2284, %v3607
      %v3710 = vmul.f32 %v2289, %v3612
      %v3711 = vmul.f32 %v2294, %v3617
      %v3712 = vmul.f32 %v2299, %v3622
      %v3713 = vmul.f32 %v2304, %v3627
      %v3714 = vmul.f32 %v2309, %v3632
      %v3715 = vmul.f32 %v2314, %v3637
      %v3716 = vmul.f32 %v2319, %v3642
      %v3717 = vmul.f32 %v2324, %v3647
      %v3718 = vmul.f32 %v2329, %v3652
      %3783 = vrot.lane.b32.xlu0 %v3337, 64
      %v3784 = vpop.permute.xlu0 %3783
      %3785 = vrot.lane.b32.xlu0 %v3342, 64
      %v3786 = vpop.permute.xlu0 %3785
      %3787 = vrot.lane.b32.xlu0 %v3347, 64
      %v3788 = vpop.permute.xlu0 %3787
      %3789 = vrot.lane.b32.xlu0 %v3352, 64
      %v3790 = vpop.permute.xlu0 %3789
      %3791 = vrot.lane.b32.xlu0 %v3357, 64
      %v3792 = vpop.permute.xlu0 %3791
      %3793 = vrot.lane.b32.xlu0 %v3362, 64
      %v3794 = vpop.permute.xlu0 %3793
      %3795 = vrot.lane.b32.xlu0 %v3367, 64
      %v3796 = vpop.permute.xlu0 %3795
      %3797 = vrot.lane.b32.xlu0 %v3372, 64
      %v3798 = vpop.permute.xlu0 %3797
      %3799 = vrot.lane.b32.xlu0 %v3377, 64
      %v3800 = vpop.permute.xlu0 %3799
      %3801 = vrot.lane.b32.xlu0 %v3382, 64
      %v3802 = vpop.permute.xlu0 %3801
      %3803 = vrot.lane.b32.xlu0 %v3387, 64
      %v3804 = vpop.permute.xlu0 %3803
      %3805 = vrot.lane.b32.xlu0 %v3392, 64
      %v3806 = vpop.permute.xlu0 %3805
      %3807 = vrot.lane.b32.xlu0 %v3397, 64
      %v3808 = vpop.permute.xlu0 %3807
      %3809 = vrot.lane.b32.xlu0 %v3402, 64
      %v3810 = vpop.permute.xlu0 %3809
      %3811 = vrot.lane.b32.xlu0 %v3407, 64
      %v3812 = vpop.permute.xlu0 %3811
      %3813 = vrot.lane.b32.xlu0 %v3412, 64
      %v3814 = vpop.permute.xlu0 %3813
      %3815 = vrot.lane.b32.xlu0 %v3417, 64
      %v3816 = vpop.permute.xlu0 %3815
      %3817 = vrot.lane.b32.xlu0 %v3422, 64
      %v3818 = vpop.permute.xlu0 %3817
      %3819 = vrot.lane.b32.xlu0 %v3427, 64
      %v3820 = vpop.permute.xlu0 %3819
      %3821 = vrot.lane.b32.xlu0 %v3432, 64
      %v3822 = vpop.permute.xlu0 %3821
      %3823 = vrot.lane.b32.xlu0 %v3437, 64
      %v3824 = vpop.permute.xlu0 %3823
      %3825 = vrot.lane.b32.xlu0 %v3442, 64
      %v3826 = vpop.permute.xlu0 %3825
      %3827 = vrot.lane.b32.xlu0 %v3447, 64
      %v3828 = vpop.permute.xlu0 %3827
      %3829 = vrot.lane.b32.xlu0 %v3452, 64
      %v3830 = vpop.permute.xlu0 %3829
      %3831 = vrot.lane.b32.xlu0 %v3457, 64
      %v3832 = vpop.permute.xlu0 %3831
      %3833 = vrot.lane.b32.xlu0 %v3462, 64
      %v3834 = vpop.permute.xlu0 %3833
      %3835 = vrot.lane.b32.xlu0 %v3467, 64
      %v3836 = vpop.permute.xlu0 %3835
      %3837 = vrot.lane.b32.xlu0 %v3472, 64
      %v3838 = vpop.permute.xlu0 %3837
      %3839 = vrot.lane.b32.xlu0 %v3477, 64
      %v3840 = vpop.permute.xlu0 %3839
      %3841 = vrot.lane.b32.xlu0 %v3482, 64
      %v3842 = vpop.permute.xlu0 %3841
      %3843 = vrot.lane.b32.xlu0 %v3487, 64
      %v3844 = vpop.permute.xlu0 %3843
      %3845 = vrot.lane.b32.xlu0 %v3492, 64
      %v3846 = vpop.permute.xlu0 %3845
      %3847 = vrot.lane.b32.xlu0 %v3497, 64
      %v3848 = vpop.permute.xlu0 %3847
      %3849 = vrot.lane.b32.xlu0 %v3502, 64
      %v3850 = vpop.permute.xlu0 %3849
      %3851 = vrot.lane.b32.xlu0 %v3507, 64
      %v3852 = vpop.permute.xlu0 %3851
      %3853 = vrot.lane.b32.xlu0 %v3512, 64
      %v3854 = vpop.permute.xlu0 %3853
      %3855 = vrot.lane.b32.xlu0 %v3517, 64
      %v3856 = vpop.permute.xlu0 %3855
      %3857 = vrot.lane.b32.xlu0 %v3522, 64
      %v3858 = vpop.permute.xlu0 %3857
      %3859 = vrot.lane.b32.xlu0 %v3527, 64
      %v3860 = vpop.permute.xlu0 %3859
      %3861 = vrot.lane.b32.xlu0 %v3532, 64
      %v3862 = vpop.permute.xlu0 %3861
      %3863 = vrot.lane.b32.xlu0 %v3537, 64
      %v3864 = vpop.permute.xlu0 %3863
      %3865 = vrot.lane.b32.xlu0 %v3542, 64
      %v3866 = vpop.permute.xlu0 %3865
      %3867 = vrot.lane.b32.xlu0 %v3547, 64
      %v3868 = vpop.permute.xlu0 %3867
      %3869 = vrot.lane.b32.xlu0 %v3552, 64
      %v3870 = vpop.permute.xlu0 %3869
      %3871 = vrot.lane.b32.xlu0 %v3557, 64
      %v3872 = vpop.permute.xlu0 %3871
      %3873 = vrot.lane.b32.xlu0 %v3562, 64
      %v3874 = vpop.permute.xlu0 %3873
      %3875 = vrot.lane.b32.xlu0 %v3567, 64
      %v3876 = vpop.permute.xlu0 %3875
      %3877 = vrot.lane.b32.xlu0 %v3572, 64
      %v3878 = vpop.permute.xlu0 %3877
      %3879 = vrot.lane.b32.xlu0 %v3577, 64
      %v3880 = vpop.permute.xlu0 %3879
      %3881 = vrot.lane.b32.xlu0 %v3582, 64
      %v3882 = vpop.permute.xlu0 %3881
      %3883 = vrot.lane.b32.xlu0 %v3587, 64
      %v3884 = vpop.permute.xlu0 %3883
      %3885 = vrot.lane.b32.xlu0 %v3592, 64
      %v3886 = vpop.permute.xlu0 %3885
      %3887 = vrot.lane.b32.xlu0 %v3597, 64
      %v3888 = vpop.permute.xlu0 %3887
      %3889 = vrot.lane.b32.xlu0 %v3602, 64
      %v3890 = vpop.permute.xlu0 %3889
      %3891 = vrot.lane.b32.xlu0 %v3607, 64
      %v3892 = vpop.permute.xlu0 %3891
      %3893 = vrot.lane.b32.xlu0 %v3612, 64
      %v3894 = vpop.permute.xlu0 %3893
      %3895 = vrot.lane.b32.xlu0 %v3617, 64
      %v3896 = vpop.permute.xlu0 %3895
      %3897 = vrot.lane.b32.xlu0 %v3622, 64
      %v3898 = vpop.permute.xlu0 %3897
      %3899 = vrot.lane.b32.xlu0 %v3627, 64
      %v3900 = vpop.permute.xlu0 %3899
      %3901 = vrot.lane.b32.xlu0 %v3632, 64
      %v3902 = vpop.permute.xlu0 %3901
      %3903 = vrot.lane.b32.xlu0 %v3637, 64
      %v3904 = vpop.permute.xlu0 %3903
      %3905 = vrot.lane.b32.xlu0 %v3642, 64
      %v3906 = vpop.permute.xlu0 %3905
      %3907 = vrot.lane.b32.xlu0 %v3647, 64
      %v3908 = vpop.permute.xlu0 %3907
      %3909 = vrot.lane.b32.xlu0 %v3652, 64
      %v3910 = vpop.permute.xlu0 %3909
      %v3975 = vsel %vm2564, %v3655, %v3784
      %v3976 = vsel %vm2564, %v3656, %v3786
      %v3977 = vsel %vm2564, %v3657, %v3788
      %v3978 = vsel %vm2564, %v3658, %v3790
      %v3979 = vsel %vm2564, %v3659, %v3792
      %v3980 = vsel %vm2564, %v3660, %v3794
      %v3981 = vsel %vm2564, %v3661, %v3796
      %v3982 = vsel %vm2564, %v3662, %v3798
      %v3983 = vsel %vm2564, %v3663, %v3800
      %v3984 = vsel %vm2564, %v3664, %v3802
      %v3985 = vsel %vm2564, %v3665, %v3804
      %v3986 = vsel %vm2564, %v3666, %v3806
      %v3987 = vsel %vm2564, %v3667, %v3808
      %v3988 = vsel %vm2564, %v3668, %v3810
      %v3989 = vsel %vm2564, %v3669, %v3812
      %v3990 = vsel %vm2564, %v3670, %v3814
      %v3991 = vsel %vm2564, %v3671, %v3816
      %v3992 = vsel %vm2564, %v3672, %v3818
      %v3993 = vsel %vm2564, %v3673, %v3820
      %v3994 = vsel %vm2564, %v3674, %v3822
      %v3995 = vsel %vm2564, %v3675, %v3824
      %v3996 = vsel %vm2564, %v3676, %v3826
      %v3997 = vsel %vm2564, %v3677, %v3828
      %v3998 = vsel %vm2564, %v3678, %v3830
      %v3999 = vsel %vm2564, %v3679, %v3832
      %v4000 = vsel %vm2564, %v3680, %v3834
      %v4001 = vsel %vm2564, %v3681, %v3836
      %v4002 = vsel %vm2564, %v3682, %v3838
      %v4003 = vsel %vm2564, %v3683, %v3840
      %v4004 = vsel %vm2564, %v3684, %v3842
      %v4005 = vsel %vm2564, %v3685, %v3844
      %v4006 = vsel %vm2564, %v3686, %v3846
      %v4007 = vsel %vm2564, %v3687, %v3848
      %v4008 = vsel %vm2564, %v3688, %v3850
      %v4009 = vsel %vm2564, %v3689, %v3852
      %v4010 = vsel %vm2564, %v3690, %v3854
      %v4011 = vsel %vm2564, %v3691, %v3856
      %v4012 = vsel %vm2564, %v3692, %v3858
      %v4013 = vsel %vm2564, %v3693, %v3860
      %v4014 = vsel %vm2564, %v3694, %v3862
      %v4015 = vsel %vm2564, %v3695, %v3864
      %v4016 = vsel %vm2564, %v3696, %v3866
      %v4017 = vsel %vm2564, %v3697, %v3868
      %v4018 = vsel %vm2564, %v3698, %v3870
      %v4019 = vsel %vm2564, %v3699, %v3872
      %v4020 = vsel %vm2564, %v3700, %v3874
      %v4021 = vsel %vm2564, %v3701, %v3876
      %v4022 = vsel %vm2564, %v3702, %v3878
      %v4023 = vsel %vm2564, %v3703, %v3880
      %v4024 = vsel %vm2564, %v3704, %v3882
      %v4025 = vsel %vm2564, %v3705, %v3884
      %v4026 = vsel %vm2564, %v3706, %v3886
      %v4027 = vsel %vm2564, %v3707, %v3888
      %v4028 = vsel %vm2564, %v3708, %v3890
      %v4029 = vsel %vm2564, %v3709, %v3892
      %v4030 = vsel %vm2564, %v3710, %v3894
      %v4031 = vsel %vm2564, %v3711, %v3896
      %v4032 = vsel %vm2564, %v3712, %v3898
      %v4033 = vsel %vm2564, %v3713, %v3900
      %v4034 = vsel %vm2564, %v3714, %v3902
      %v4035 = vsel %vm2564, %v3715, %v3904
      %v4036 = vsel %vm2564, %v3716, %v3906
      %v4037 = vsel %vm2564, %v3717, %v3908
      %v4038 = vsel %vm2564, %v3718, %v3910
      %v4039 = vld [vmem:[%s9] sm:$0xff]
      %v4040 = vld [vmem:[%s9 + $0x8] sm:$0xff]
      %v4041 = vld [vmem:[%s9 + $0x10] sm:$0xff]
      %v4042 = vld [vmem:[%s9 + $0x18] sm:$0xff]
      %v4043 = vld [vmem:[%s9 + $0x20] sm:$0xff]
      %v4044 = vld [vmem:[%s9 + $0x28] sm:$0xff]
      %v4045 = vld [vmem:[%s9 + $0x30] sm:$0xff]
      %v4046 = vld [vmem:[%s9 + $0x38] sm:$0xff]
      %v4047 = vld [vmem:[%s9 + $0x40] sm:$0xff]
      %v4048 = vld [vmem:[%s9 + $0x48] sm:$0xff]
      %v4049 = vld [vmem:[%s9 + $0x50] sm:$0xff]
      %v4050 = vld [vmem:[%s9 + $0x58] sm:$0xff]
      %v4051 = vld [vmem:[%s9 + $0x60] sm:$0xff]
      %v4052 = vld [vmem:[%s9 + $0x68] sm:$0xff]
      %v4053 = vld [vmem:[%s9 + $0x70] sm:$0xff]
      %v4054 = vld [vmem:[%s9 + $0x78] sm:$0xff]
      %4055 = vmatprep.subr.mxu0 0.0
      %4056 = vmatpush1.msra.mxu0 %v3975
      %4057 = vmatprep.subr.mxu0 0.0
      %4058 = vmatpush1.msra.mxu0 %v3976
      %4059 = vmatprep.subr.mxu0 0.0
      %4060 = vmatpush1.msra.mxu0 %v3977
      %4061 = vmatprep.subr.mxu0 0.0
      %4062 = vmatpush1.msra.mxu0 %v3978
      %4063 = vmatprep.subr.mxu0 0.0
      %4064 = vmatpush1.msra.mxu0 %v3979
      %4065 = vmatprep.subr.mxu0 0.0
      %4066 = vmatpush1.msra.mxu0 %v3980
      %4067 = vmatprep.subr.mxu0 0.0
      %4068 = vmatpush1.msra.mxu0 %v3981
      %4069 = vmatprep.subr.mxu0 0.0
      %4070 = vmatpush1.msra.mxu0 %v3982
      %4071 = vmatprep.subr.mxu0 0.0
      %4072 = vmatpush1.msra.mxu0 %v3983
      %4073 = vmatprep.subr.mxu0 0.0
      %4074 = vmatpush1.msra.mxu0 %v3984
      %4075 = vmatprep.subr.mxu0 0.0
      %4076 = vmatpush1.msra.mxu0 %v3985
      %4077 = vmatprep.subr.mxu0 0.0
      %4078 = vmatpush1.msra.mxu0 %v3986
      %4079 = vmatprep.subr.mxu0 0.0
      %4080 = vmatpush1.msra.mxu0 %v3987
      %4081 = vmatprep.subr.mxu0 0.0
      %4082 = vmatpush1.msra.mxu0 %v3988
      %4083 = vmatprep.subr.mxu0 0.0
      %4084 = vmatpush1.msra.mxu0 %v3989
      %4085 = vmatprep.subr.mxu0 0.0
      %4086 = vmatpush1.msra.mxu0 %v3990
      %4087 = vmatprep.subr.mxu0 0.0
      %4088 = vmatpush1.msra.mxu0 %v3991
      %4089 = vmatprep.subr.mxu0 0.0
      %4090 = vmatpush1.msra.mxu0 %v3992
      %4091 = vmatprep.subr.mxu0 0.0
      %4092 = vmatpush1.msra.mxu0 %v3993
      %4093 = vmatprep.subr.mxu0 0.0
      %4094 = vmatpush1.msra.mxu0 %v3994
      %4095 = vmatprep.subr.mxu0 0.0
      %4096 = vmatpush1.msra.mxu0 %v3995
      %4097 = vmatprep.subr.mxu0 0.0
      %4098 = vmatpush1.msra.mxu0 %v3996
      %4099 = vmatprep.subr.mxu0 0.0
      %4100 = vmatpush1.msra.mxu0 %v3997
      %4101 = vmatprep.subr.mxu0 0.0
      %4102 = vmatpush1.msra.mxu0 %v3998
      %4103 = vmatprep.subr.mxu0 0.0
      %4104 = vmatpush1.msra.mxu0 %v3999
      %4105 = vmatprep.subr.mxu0 0.0
      %4106 = vmatpush1.msra.mxu0 %v4000
      %4107 = vmatprep.subr.mxu0 0.0
      %4108 = vmatpush1.msra.mxu0 %v4001
      %4109 = vmatprep.subr.mxu0 0.0
      %4110 = vmatpush1.msra.mxu0 %v4002
      %4111 = vmatprep.subr.mxu0 0.0
      %4112 = vmatpush1.msra.mxu0 %v4003
      %4113 = vmatprep.subr.mxu0 0.0
      %4114 = vmatpush1.msra.mxu0 %v4004
      %4115 = vmatprep.subr.mxu0 0.0
      %4116 = vmatpush1.msra.mxu0 %v4005
      %4117 = vmatprep.subr.mxu0 0.0
      %4118 = vmatpush1.msra.mxu0 %v4006
      %4119 = vmatprep.mubr.f32.mxu0 %v601
      %4120 = vmatmul.mubr.f32.gmra.mrb[0].mxu0 %v600
      %v4121 = vpop.f32.mrb[0].mxu0
      %v4122 = vadd.f32 0.0, %v4121
      %v4123 = vpop.f32.mrb[0].mxu0
      %4124 = vmatprep.mubr.f32.mxu0 %v605
      %4125 = vmatmul.mubr.f32.gmra.mrb[0].mxu0 %v604
      %v4126 = vpop.f32.mrb[0].mxu0
      %v4127 = vadd.f32 0.0, %v4126
      %v4128 = vpop.f32.mrb[0].mxu0
      %4129 = vmatprep.mubr.f32.mxu0 %v609
      %4130 = vmatmul.mubr.f32.gmra.mrb[0].mxu0 %v608
      %v4131 = vpop.f32.mrb[0].mxu0
      %v4132 = vadd.f32 0.0, %v4131
      %v4133 = vpop.f32.mrb[0].mxu0
      %4134 = vmatprep.mubr.f32.mxu0 %v613
      %4135 = vmatmul.mubr.f32.gmra.mrb[0].mxu0 %v612
      %v4136 = vpop.f32.mrb[0].mxu0
      %v4137 = vadd.f32 0.0, %v4136
      %v4138 = vpop.f32.mrb[0].mxu0
      %4139 = vmatprep.mubr.f32.mxu0 %v617
      %4140 = vmatmul.mubr.f32.gmra.mrb[0].mxu0 %v616
      %v4141 = vpop.f32.mrb[0].mxu0
      %v4142 = vadd.f32 0.0, %v4141
      %v4143 = vpop.f32.mrb[0].mxu0
      %4144 = vmatprep.mubr.f32.mxu0 %v621
      %4145 = vmatmul.mubr.f32.gmra.mrb[0].mxu0 %v620
      %v4146 = vpop.f32.mrb[0].mxu0
      %v4147 = vadd.f32 0.0, %v4146
      %v4148 = vpop.f32.mrb[0].mxu0
      %4149 = vmatprep.mubr.f32.mxu0 %v625
      %4150 = vmatmul.mubr.f32.gmra.mrb[0].mxu0 %v624
      %v4151 = vpop.f32.mrb[0].mxu0
      %v4152 = vadd.f32 0.0, %v4151
      %v4153 = vpop.f32.mrb[0].mxu0
      %4154 = vmatprep.mubr.f32.mxu0 %v629
      %4155 = vmatmul.mubr.f32.gmra.mrb[0].mxu0 %v628
      %v4156 = vpop.f32.mrb[0].mxu0
      %v4157 = vadd.f32 0.0, %v4156
      %v4158 = vpop.f32.mrb[0].mxu0
      %4159 = vmatprep.mubr.f32.mxu0 %v633
      %4160 = vmatmul.mubr.f32.gmra.mrb[0].mxu0 %v632
      %v4161 = vpop.f32.mrb[0].mxu0
      %v4162 = vadd.f32 0.0, %v4161
      %v4163 = vpop.f32.mrb[0].mxu0
      %4164 = vmatprep.mubr.f32.mxu0 %v637
      %4165 = vmatmul.mubr.f32.gmra.mrb[0].mxu0 %v636
      %v4166 = vpop.f32.mrb[0].mxu0
      %v4167 = vadd.f32 0.0, %v4166
      %v4168 = vpop.f32.mrb[0].mxu0
      %4169 = vmatprep.mubr.f32.mxu0 %v641
      %4170 = vmatmul.mubr.f32.gmra.mrb[0].mxu0 %v640
      %v4171 = vpop.f32.mrb[0].mxu0
      %v4172 = vadd.f32 0.0, %v4171
      %v4173 = vpop.f32.mrb[0].mxu0
      %4174 = vmatprep.mubr.f32.mxu0 %v645
      %4175 = vmatmul.mubr.f32.gmra.mrb[0].mxu0 %v644
      %v4176 = vpop.f32.mrb[0].mxu0
      %v4177 = vadd.f32 0.0, %v4176
      %v4178 = vpop.f32.mrb[0].mxu0
      %4179 = vmatprep.mubr.f32.mxu0 %v649
      %4180 = vmatmul.mubr.f32.gmra.mrb[0].mxu0 %v648
      %v4181 = vpop.f32.mrb[0].mxu0
      %v4182 = vadd.f32 0.0, %v4181
      %v4183 = vpop.f32.mrb[0].mxu0
      %4184 = vmatprep.mubr.f32.mxu0 %v653
      %4185 = vmatmul.mubr.f32.gmra.mrb[0].mxu0 %v652
      %v4186 = vpop.f32.mrb[0].mxu0
      %v4187 = vadd.f32 0.0, %v4186
      %v4188 = vpop.f32.mrb[0].mxu0
      %4189 = vmatprep.mubr.f32.mxu0 %v657
      %4190 = vmatmul.mubr.f32.gmra.mrb[0].mxu0 %v656
      %v4191 = vpop.f32.mrb[0].mxu0
      %v4192 = vadd.f32 0.0, %v4191
      %v4193 = vpop.f32.mrb[0].mxu0
      %4194 = vmatprep.mubr.f32.mxu0 %v661
      %4195 = vmatmul.mubr.f32.gmra.mrb[0].mxu0 %v660
      %v4196 = vpop.f32.mrb[0].mxu0
      %v4197 = vadd.f32 0.0, %v4196
      %v4198 = vpop.f32.mrb[0].mxu0
      %4199 = vdwg.mxu0
      %4200 = vmatprep.subr.mxu0 0.0
      %4201 = vmatpush1.msra.mxu0 %v4007
      %4202 = vmatprep.subr.mxu0 0.0
      %4203 = vmatpush1.msra.mxu0 %v4008
      %4204 = vmatprep.subr.mxu0 0.0
      %4205 = vmatpush1.msra.mxu0 %v4009
      %4206 = vmatprep.subr.mxu0 0.0
      %4207 = vmatpush1.msra.mxu0 %v4010
      %4208 = vmatprep.subr.mxu0 0.0
      %4209 = vmatpush1.msra.mxu0 %v4011
      %4210 = vmatprep.subr.mxu0 0.0
      %4211 = vmatpush1.msra.mxu0 %v4012
      %4212 = vmatprep.subr.mxu0 0.0
      %4213 = vmatpush1.msra.mxu0 %v4013
      %4214 = vmatprep.subr.mxu0 0.0
      %4215 = vmatpush1.msra.mxu0 %v4014
      %4216 = vmatprep.subr.mxu0 0.0
      %4217 = vmatpush1.msra.mxu0 %v4015
      %4218 = vmatprep.subr.mxu0 0.0
      %4219 = vmatpush1.msra.mxu0 %v4016
      %4220 = vmatprep.subr.mxu0 0.0
      %4221 = vmatpush1.msra.mxu0 %v4017
      %4222 = vmatprep.subr.mxu0 0.0
      %4223 = vmatpush1.msra.mxu0 %v4018
      %4224 = vmatprep.subr.mxu0 0.0
      %4225 = vmatpush1.msra.mxu0 %v4019
      %4226 = vmatprep.subr.mxu0 0.0
      %4227 = vmatpush1.msra.mxu0 %v4020
      %4228 = vmatprep.subr.mxu0 0.0
      %4229 = vmatpush1.msra.mxu0 %v4021
      %4230 = vmatprep.subr.mxu0 0.0
      %4231 = vmatpush1.msra.mxu0 %v4022
      %4232 = vmatprep.subr.mxu0 0.0
      %4233 = vmatpush1.msra.mxu0 %v4023
      %4234 = vmatprep.subr.mxu0 0.0
      %4235 = vmatpush1.msra.mxu0 %v4024
      %4236 = vmatprep.subr.mxu0 0.0
      %4237 = vmatpush1.msra.mxu0 %v4025
      %4238 = vmatprep.subr.mxu0 0.0
      %4239 = vmatpush1.msra.mxu0 %v4026
      %4240 = vmatprep.subr.mxu0 0.0
      %4241 = vmatpush1.msra.mxu0 %v4027
      %4242 = vmatprep.subr.mxu0 0.0
      %4243 = vmatpush1.msra.mxu0 %v4028
      %4244 = vmatprep.subr.mxu0 0.0
      %4245 = vmatpush1.msra.mxu0 %v4029
      %4246 = vmatprep.subr.mxu0 0.0
      %4247 = vmatpush1.msra.mxu0 %v4030
      %4248 = vmatprep.subr.mxu0 0.0
      %4249 = vmatpush1.msra.mxu0 %v4031
      %4250 = vmatprep.subr.mxu0 0.0
      %4251 = vmatpush1.msra.mxu0 %v4032
      %4252 = vmatprep.subr.mxu0 0.0
      %4253 = vmatpush1.msra.mxu0 %v4033
      %4254 = vmatprep.subr.mxu0 0.0
      %4255 = vmatpush1.msra.mxu0 %v4034
      %4256 = vmatprep.subr.mxu0 0.0
      %4257 = vmatpush1.msra.mxu0 %v4035
      %4258 = vmatprep.subr.mxu0 0.0
      %4259 = vmatpush1.msra.mxu0 %v4036
      %4260 = vmatprep.subr.mxu0 0.0
      %4261 = vmatpush1.msra.mxu0 %v4037
      %4262 = vmatprep.subr.mxu0 0.0
      %4263 = vmatpush1.msra.mxu0 %v4038
      %4264 = vmatprep.mubr.f32.mxu0 %v603
      %4265 = vmatmul.mubr.f32.gmra.mrb[0].mxu0 %v602
      %v4266 = vpop.f32.mrb[0].mxu0
      %v4267 = vadd.f32 %v4122, %v4266
      %v4268 = vpop.f32.mrb[0].mxu0
      %4269 = vmatprep.mubr.f32.mxu0 %v607
      %4270 = vmatmul.mubr.f32.gmra.mrb[0].mxu0 %v606
      %v4271 = vpop.f32.mrb[0].mxu0
      %v4272 = vadd.f32 %v4127, %v4271
      %v4273 = vpop.f32.mrb[0].mxu0
      %4274 = vmatprep.mubr.f32.mxu0 %v611
      %4275 = vmatmul.mubr.f32.gmra.mrb[0].mxu0 %v610
      %v4276 = vpop.f32.mrb[0].mxu0
      %v4277 = vadd.f32 %v4132, %v4276
      %v4278 = vpop.f32.mrb[0].mxu0
      %4279 = vmatprep.mubr.f32.mxu0 %v615
      %4280 = vmatmul.mubr.f32.gmra.mrb[0].mxu0 %v614
      %v4281 = vpop.f32.mrb[0].mxu0
      %v4282 = vadd.f32 %v4137, %v4281
      %v4283 = vpop.f32.mrb[0].mxu0
      %4284 = vmatprep.mubr.f32.mxu0 %v619
      %4285 = vmatmul.mubr.f32.gmra.mrb[0].mxu0 %v618
      %v4286 = vpop.f32.mrb[0].mxu0
      %v4287 = vadd.f32 %v4142, %v4286
      %v4288 = vpop.f32.mrb[0].mxu0
      %4289 = vmatprep.mubr.f32.mxu0 %v623
      %4290 = vmatmul.mubr.f32.gmra.mrb[0].mxu0 %v622
      %v4291 = vpop.f32.mrb[0].mxu0
      %v4292 = vadd.f32 %v4147, %v4291
      %v4293 = vpop.f32.mrb[0].mxu0
      %4294 = vmatprep.mubr.f32.mxu0 %v627
      %4295 = vmatmul.mubr.f32.gmra.mrb[0].mxu0 %v626
      %v4296 = vpop.f32.mrb[0].mxu0
      %v4297 = vadd.f32 %v4152, %v4296
      %v4298 = vpop.f32.mrb[0].mxu0
      %4299 = vmatprep.mubr.f32.mxu0 %v631
      %4300 = vmatmul.mubr.f32.gmra.mrb[0].mxu0 %v630
      %v4301 = vpop.f32.mrb[0].mxu0
      %v4302 = vadd.f32 %v4157, %v4301
      %v4303 = vpop.f32.mrb[0].mxu0
      %4304 = vmatprep.mubr.f32.mxu0 %v635
      %4305 = vmatmul.mubr.f32.gmra.mrb[0].mxu0 %v634
      %v4306 = vpop.f32.mrb[0].mxu0
      %v4307 = vadd.f32 %v4162, %v4306
      %v4308 = vpop.f32.mrb[0].mxu0
      %4309 = vmatprep.mubr.f32.mxu0 %v639
      %4310 = vmatmul.mubr.f32.gmra.mrb[0].mxu0 %v638
      %v4311 = vpop.f32.mrb[0].mxu0
      %v4312 = vadd.f32 %v4167, %v4311
      %v4313 = vpop.f32.mrb[0].mxu0
      %4314 = vmatprep.mubr.f32.mxu0 %v643
      %4315 = vmatmul.mubr.f32.gmra.mrb[0].mxu0 %v642
      %v4316 = vpop.f32.mrb[0].mxu0
      %v4317 = vadd.f32 %v4172, %v4316
      %v4318 = vpop.f32.mrb[0].mxu0
      %4319 = vmatprep.mubr.f32.mxu0 %v647
      %4320 = vmatmul.mubr.f32.gmra.mrb[0].mxu0 %v646
      %v4321 = vpop.f32.mrb[0].mxu0
      %v4322 = vadd.f32 %v4177, %v4321
      %v4323 = vpop.f32.mrb[0].mxu0
      %4324 = vmatprep.mubr.f32.mxu0 %v651
      %4325 = vmatmul.mubr.f32.gmra.mrb[0].mxu0 %v650
      %v4326 = vpop.f32.mrb[0].mxu0
      %v4327 = vadd.f32 %v4182, %v4326
      %v4328 = vpop.f32.mrb[0].mxu0
      %4329 = vmatprep.mubr.f32.mxu0 %v655
      %4330 = vmatmul.mubr.f32.gmra.mrb[0].mxu0 %v654
      %v4331 = vpop.f32.mrb[0].mxu0
      %v4332 = vadd.f32 %v4187, %v4331
      %v4333 = vpop.f32.mrb[0].mxu0
      %4334 = vmatprep.mubr.f32.mxu0 %v659
      %4335 = vmatmul.mubr.f32.gmra.mrb[0].mxu0 %v658
      %v4336 = vpop.f32.mrb[0].mxu0
      %v4337 = vadd.f32 %v4192, %v4336
      %v4338 = vpop.f32.mrb[0].mxu0
      %4339 = vmatprep.mubr.f32.mxu0 %v663
      %4340 = vmatmul.mubr.f32.gmra.mrb[0].mxu0 %v662
      %v4341 = vpop.f32.mrb[0].mxu0
      %v4342 = vadd.f32 %v4197, %v4341
      %v4343 = vpop.f32.mrb[0].mxu0
      %4344 = vdwg.mxu0
      %v4345 = vadd.f32 %v4039, %v4267
      %v4346 = vadd.f32 %v4040, %v4272
      %v4347 = vadd.f32 %v4041, %v4277
      %v4348 = vadd.f32 %v4042, %v4282
      %v4349 = vadd.f32 %v4043, %v4287
      %v4350 = vadd.f32 %v4044, %v4292
      %v4351 = vadd.f32 %v4045, %v4297
      %v4352 = vadd.f32 %v4046, %v4302
      %v4353 = vadd.f32 %v4047, %v4307
      %v4354 = vadd.f32 %v4048, %v4312
      %v4355 = vadd.f32 %v4049, %v4317
      %v4356 = vadd.f32 %v4050, %v4322
      %v4357 = vadd.f32 %v4051, %v4327
      %v4358 = vadd.f32 %v4052, %v4332
      %v4359 = vadd.f32 %v4053, %v4337
      %v4360 = vadd.f32 %v4054, %v4342
      %4361 = vst [vmem:[%s9] sm:$0xff] %v4345
      %4362 = vst [vmem:[%s9 + $0x8] sm:$0xff] %v4346
      %4363 = vst [vmem:[%s9 + $0x10] sm:$0xff] %v4347
      %4364 = vst [vmem:[%s9 + $0x18] sm:$0xff] %v4348
      %4365 = vst [vmem:[%s9 + $0x20] sm:$0xff] %v4349
      %4366 = vst [vmem:[%s9 + $0x28] sm:$0xff] %v4350
      %4367 = vst [vmem:[%s9 + $0x30] sm:$0xff] %v4351
      %4368 = vst [vmem:[%s9 + $0x38] sm:$0xff] %v4352
      %4369 = vst [vmem:[%s9 + $0x40] sm:$0xff] %v4353
      %4370 = vst [vmem:[%s9 + $0x48] sm:$0xff] %v4354
      %4371 = vst [vmem:[%s9 + $0x50] sm:$0xff] %v4355
      %4372 = vst [vmem:[%s9 + $0x58] sm:$0xff] %v4356
      %4373 = vst [vmem:[%s9 + $0x60] sm:$0xff] %v4357
      %4374 = vst [vmem:[%s9 + $0x68] sm:$0xff] %v4358
      %4375 = vst [vmem:[%s9 + $0x70] sm:$0xff] %v4359
      %4376 = vst [vmem:[%s9 + $0x78] sm:$0xff] %v4360
      %s4377 = smul.u32 4, %s22
      %p4378 = scmp.lt.s32.totalorder %s4377, 7
      %s4379 = scalar_select %p4378, %s4377, 7
      %s4380 = smul.addr %s4379, 8
      %s4381 = scalar_lea.vmem %s10, %s4380
      // Predicated region
      $region61: #{multi_head_attention.5} parent=55 // pred_check
        %p4382 = pneg %p244
      $region62: #{multi_head_attention.5} parent=55 // pred_check_branch
        %4384 = sbr.rel (%p4382) target = $region64
      $region63: #{multi_head_attention.5} parent=55 // pred_region
        _
      $region64: #{multi_head_attention.5} parent=55 // pred_fallthru
        _
      // Predicated region
      $region65: #{multi_head_attention.5} parent=55 // pred_check
        %p4385 = pneg %p270
      $region66: #{multi_head_attention.5} parent=55 // pred_check_branch
        %4387 = sbr.rel (%p4385) target = $region68
      $region67: #{multi_head_attention.5} parent=55 // pred_region
        %s4388 = smul.u32 4, %s22
      $region68: #{multi_head_attention.5} parent=55 // pred_fallthru
        _
      // Predicated region
      $region69: #{multi_head_attention.5} parent=55 // pred_check
        %p4389 = pneg %p244
      $region70: #{multi_head_attention.5} parent=55 // pred_check_branch
        %4391 = sbr.rel (%p4389) target = $region72
      $region71: #{multi_head_attention.5} parent=55 // pred_region
        _
      $region72: #{multi_head_attention.5} parent=55 // pred_fallthru
        _
    $region56: #{multi_head_attention.5} parent=5 // pred_fallthru
      _
    %p4392 = scmp.le.s32.totalorder 2, %s17
    // Predicated region
    $region73: #{multi_head_attention.5} parent=5 // pred_check
      %p4393 = pneg %p4392
    $region74: #{multi_head_attention.5} parent=5 // pred_check_branch
      %4395 = sbr.rel (%p4393) target = $region76
    $region75: #{multi_head_attention.5} parent=5 // pred_region
      %s4396 = ssub.s32 %s17, 2
      // Predicated region
      $region77: #{multi_head_attention.5} parent=75 // pred_check
        %p4397 = pneg %p276
      $region78: #{multi_head_attention.5} parent=75 // pred_check_branch
        %4399 = sbr.rel (%p4397) target = $region80
      $region79: #{multi_head_attention.5} parent=75 // pred_region
        %s4400 = smul.u32 4, %s23
        %p4401 = scmp.lt.s32.totalorder %s4400, 7
        %s4402 = scalar_select %p4401, %s4400, 7
        %s4403 = smul.addr %s4402, 8
        %s4404 = scalar_lea.vmem %s10, %s4403
      $region80: #{multi_head_attention.5} parent=75 // pred_fallthru
        _
    $region76: #{multi_head_attention.5} parent=5 // pred_fallthru
      _
  $region6: #{multi_head_attention.5} parent=0 // loop_footer
    %s21 = sadd.s32 1, %s17
  $region7: #{multi_head_attention.5} parent=0 // loop_footer_branch
    %16 = sbr.rel target = $region3
  $region8: #{multi_head_attention.5} parent=0 // loop_exit
    _

</llo_original>
